<compile_context>
chip_gen: v7x
topology: tpu7x:2x2x1
jax: 0.10.0
libtpu: 0.0.40
codegen_flags: <defaults>
</compile_context>

<pallas_src>
import functools

import jax
import jax.numpy as jnp
from jax import lax
from jax.experimental import pallas as pl
from jax.experimental.pallas import tpu as pltpu


def _round_up(x, m):
    return (x + m - 1) // m * m


def _cdiv(a, b):
    return -(-a // b)


def _vmem_budget_bytes():
    """Generation-aware scoped-VMEM budget with headroom."""
    phys = 64 * 1024 * 1024
    try:
        info = pltpu.get_tpu_info()
        cap = getattr(info, "vmem_capacity_bytes", None)
        if cap:
            phys = int(cap)
    except Exception:
        pass
    # ~96 MiB on v5e/v6e (128 MiB physical), ~48 MiB on v7x (64 MiB physical).
    return int(min(int(phys * 0.75), 100 * 1024 * 1024))


def _pick_chunk(S, bt, dmax, hpad, out_dim, budget_bytes):
    """Largest time-chunk that fits the VMEM budget, tightened to S."""
    # Per-timestep working set: y_all (6*hpad f32) + gate scratch (3*hpad f32)
    # + nonlinearity temporaries (~3*hpad f32) + double-buffered bf16
    # input/output blocks.
    per_t = bt * (4 * 12 * hpad + 4 * dmax + 4 * hpad)
    fixed = 4 * dmax * 6 * hpad                   # double-buffered bf16 weights
    fixed += 4 * bt * 5 * hpad                    # c / y_prev / h_last carries
    fixed += 4 * hpad * (hpad + out_dim + 2)      # fused fc head params (f32)
    fixed += 4 * 1024 * 1024                      # compiler temporaries headroom
    avail = max(int(budget_bytes * 0.85) - fixed, 8 * per_t)
    t_max = max(8, (min(256, avail // per_t) // 8) * 8)
    t_chunk = min(t_max, _round_up(S, 8))
    n_chunks = _cdiv(S, t_chunk)
    t_chunk = _round_up(_cdiv(S, n_chunks), 8)    # keep s_pad - S small
    return t_chunk, n_chunks


# ---------------------------------------------------------------------------
# Pallas kernel: one QRNN layer, one (batch-tile, time-chunk) block per grid
# step.  For the last layer the fc head is fused under the s_last branch.
# ---------------------------------------------------------------------------
def _qrnn_layer_kernel(*refs, bt, hpad, t_chunk, s_last, last_only):
    if last_only:
        (x_ref, w_ref, w1_ref, b1_ref, w2_ref, b2_ref, out_ref,
         c_ref, yp_ref, gate_ref, hlast_ref) = refs
    else:
        x_ref, w_ref, out_ref, c_ref, yp_ref, gate_ref = refs

    i = pl.program_id(1)              # time-chunk index (serial "arbitrary" axis)
    rows = t_chunk * bt
    g3 = 3 * hpad

    @pl.when(i == 0)
    def _init():                      # h_{-1} = 0 and c_{-1} = 0 per batch tile
        c_ref[...] = jnp.zeros_like(c_ref)
        yp_ref[...] = jnp.zeros_like(yp_ref)

    # One chunk-wide MXU matmul against fused [W_cur | W_prev] (bf16 in, f32
    # accumulate).  y_all[:, :g3] = x_t @ W_cur ; y_all[:, g3:] = x_t @ W_prev.
    # (Layer 0 has tiny K: accepted MXU K-underutilization, see header note.)
    y_all = jnp.dot(x_ref[...], w_ref[...], preferred_element_type=jnp.float32)

    # Gate pre-activation at t is (x_t @ W_cur) + (x_{t-1} @ W_prev): shift the
    # W_prev half by one timestep with two sliced adds (timestep 0 comes from
    # the cross-chunk carry yp_ref).  Post-nonlinearity gates go to VMEM
    # scratch so the serial loop below carries only c.
    def _store_gates(lo, hi, pre):
        z = jnp.tanh(pre[:, 0:hpad])
        f = jax.nn.sigmoid(pre[:, hpad:2 * hpad])
        o = jax.nn.sigmoid(pre[:, 2 * hpad:g3])
        gate_ref[lo:hi, 0:hpad] = f
        gate_ref[lo:hi, hpad:2 * hpad] = (1.0 - f) * z
        gate_ref[lo:hi, 2 * hpad:g3] = o

    _store_gates(0, bt, y_all[0:bt, 0:g3] + yp_ref[...])
    _store_gates(bt, rows, y_all[bt:rows, 0:g3] + y_all[0:rows - bt, g3:])
    yp_ref[...] = y_all[rows - bt:rows, g3:]      # carry for the next chunk

    # Serial fo-pool: c_t = f_t*c_{t-1} + (1-f_t)*z_t ; h_t = o_t * c_t.
    def _step(t, c):
        lo = pl.multiple_of(t * bt, bt)
        gt = gate_ref[pl.ds(lo, bt), :]
        c = gt[:, 0:hpad] * c + gt[:, hpad:2 * hpad]
        h_t = gt[:, 2 * hpad:g3] * c
        if last_only:
            @pl.when(i * t_chunk + t == s_last)
            def _():
                hlast_ref[...] = h_t
        else:
            out_ref[pl.ds(lo, bt), :] = h_t.astype(out_ref.dtype)
        return c

    c_ref[...] = lax.fori_loop(0, t_chunk, _step, c_ref[...],
                               unroll=min(8, t_chunk))

    if last_only:
        # Fused fc head: out = relu(h_last @ w1 + b1) @ w2 + b2, computed only
        # in the chunk that contains the last real timestep.
        @pl.when(i == s_last // t_chunk)
        def _fc():
            h = hlast_ref[...]
            mid = jnp.dot(h, w1_ref[...], preferred_element_type=jnp.float32)
            mid = jnp.maximum(mid + b1_ref[...], 0.0)
            out = jnp.dot(mid, w2_ref[...], preferred_element_type=jnp.float32)
            out_ref[...] = (out + b2_ref[...]).astype(out_ref.dtype)


# ---------------------------------------------------------------------------
# Wrapper
# ---------------------------------------------------------------------------
def _qrnn_layer(h, w_fused, fc, *, bt, hpad, t_chunk, n_chunks, s_last,
                last_only, out_dim, vmem_limit):
    """h: (n_bt, s_pad*bt, d_pad) bf16; w_fused: (d_pad, 6*hpad) bf16."""
    n_bt = h.shape[0]
    d_pad = h.shape[2]
    rows = t_chunk * bt
    kernel = functools.partial(_qrnn_layer_kernel, bt=bt, hpad=hpad,
                               t_chunk=t_chunk, s_last=s_last,
                               last_only=last_only)

    x_spec = pl.BlockSpec((None, rows, d_pad), lambda b, i: (b, i, 0))
    w_spec = pl.BlockSpec((d_pad, 6 * hpad), lambda b, i: (0, 0))
    in_specs = [x_spec, w_spec]
    args = [h, w_fused]
    scratch = [
        pltpu.VMEM((bt, hpad), jnp.float32),        # c carry (per batch tile)
        pltpu.VMEM((bt, 3 * hpad), jnp.float32),    # y_prev carry
        pltpu.VMEM((rows, 3 * hpad), jnp.float32),  # gates [f | g | o]
    ]

    if last_only:
        w1, b1, w2, b2 = fc
        in_specs += [pl.BlockSpec(w1.shape, lambda b, i: (0, 0)),
                     pl.BlockSpec(b1.shape, lambda b, i: (0, 0)),
                     pl.BlockSpec(w2.shape, lambda b, i: (0, 0)),
                     pl.BlockSpec(b2.shape, lambda b, i: (0, 0))]
        args += [w1, b1, w2, b2]
        scratch += [pltpu.VMEM((bt, hpad), jnp.float32)]   # h at s_last
        out_shape = jax.ShapeDtypeStruct((n_bt, bt, out_dim), jnp.float32)
        out_spec = pl.BlockSpec((None, bt, out_dim), lambda b, i: (b, 0, 0))
    else:
        out_shape = jax.ShapeDtypeStruct((n_bt, n_chunks * rows, hpad),
                                         jnp.bfloat16)
        out_spec = pl.BlockSpec((None, rows, hpad), lambda b, i: (b, i, 0))

    return pl.pallas_call(
        kernel,
        grid=(n_bt, n_chunks),
        in_specs=in_specs,
        out_specs=out_spec,
        out_shape=out_shape,
        scratch_shapes=scratch,
        compiler_params=pltpu.CompilerParams(
            dimension_semantics=("parallel", "arbitrary"),
            vmem_limit_bytes=int(vmem_limit)),
    )(*args)


@jax.jit
def qrnn_forward(x, params):
    """Stacked window-2 QRNN layers (h0 = 0), then Linear -> ReLU -> Linear
    applied to out[-1, :, :]."""
    S, B, D = x.shape
    num_layers = len(params["qrnn_w"])
    H = params["qrnn_w"][0].shape[1] // 3
    out_dim = params["fc_w2"].shape[1]

    nb = _round_up(B, 16)                 # sublane-pad batch (bf16 packed tiles)
    hpad = _round_up(H, 128)              # lane-pad hidden size
    # Batch-parallel axis: 2 tiles when the padded batch splits evenly
    # (feeds v7x's 2 TensorCores; harmless single tile on v5e/v6e).
    n_bt = 2 if (nb >= 32 and nb % 32 == 0) else 1
    bt = nb // n_bt

    budget = _vmem_budget_bytes()
    t_chunk, n_chunks = _pick_chunk(S, bt, max(D, hpad), hpad, out_dim, budget)
    s_pad = t_chunk * n_chunks

    # (S, B, D) -> (n_bt, s_pad*bt, D): batch tile outermost, rows time-major.
    x_p = jnp.pad(x, ((0, s_pad - S), (0, nb - B), (0, 0)))
    h = (x_p.reshape(s_pad, n_bt, bt, D).transpose(1, 0, 2, 3)
         .reshape(n_bt, s_pad * bt, D).astype(jnp.bfloat16))

    # fc head params (f32, lane-padded) for the fused last layer.
    w1 = jnp.pad(params["fc_w1"], ((0, hpad - H), (0, hpad - H)))
    b1 = jnp.pad(params["fc_b1"], ((0, 0), (0, hpad - H)))
    w2 = jnp.pad(params["fc_w2"], ((0, hpad - H), (0, 0)))
    fc = (w1, b1, w2, params["fc_b2"])

    for layer, w in enumerate(params["qrnn_w"]):
        d_in = D if layer == 0 else H
        d_pad = D if layer == 0 else hpad
        w_cur, w_prev = w[:d_in], w[d_in:]       # rows for x_t / x_{t-1}

        def pad_w(wp, d_in=d_in, d_pad=d_pad):
            # (d_in, 3H) -> (d_pad, 3*hpad), keeping Z|F|O on 128-lane bounds.
            w3 = wp.reshape(d_in, 3, H)
            w3 = jnp.pad(w3, ((0, d_pad - d_in), (0, 0), (0, hpad - H)))
            return w3.reshape(d_pad, 3 * hpad)

        w_fused = jnp.concatenate([pad_w(w_cur), pad_w(w_prev)],
                                  axis=1).astype(jnp.bfloat16)
        last_only = layer == num_layers - 1
        h = _qrnn_layer(h, w_fused, fc if last_only else None, bt=bt,
                        hpad=hpad, t_chunk=t_chunk, n_chunks=n_chunks,
                        s_last=S - 1, last_only=last_only, out_dim=out_dim,
                        vmem_limit=budget)

    # h: (n_bt, bt, out_dim) -> (nb, out_dim); drop padded batch rows.
    return h.reshape(nb, out_dim)[:B]


# ---------------------------------------------------------------------------
# Pure-JAX reference (unpadded, f32) for correctness check
# ---------------------------------------------------------------------------
def qrnn_forward_ref(x, params):
    h = x
    for w_t in params["qrnn_w"]:
        S, B, D = h.shape
        H = w_t.shape[1] // 3
        x_prev = jnp.concatenate([jnp.zeros((1, B, D), h.dtype), h[:-1]], 0)
        src = jnp.concatenate([h, x_prev], axis=2)
        y = jnp.einsum("sbd,dk->sbk", src, w_t)
        z = jnp.tanh(y[..., :H])
        f = jax.nn.sigmoid(y[..., H:2 * H])
        o = jax.nn.sigmoid(y[..., 2 * H:])

        def step(c, inp):
            z_t, f_t, o_t = inp
            c = f_t * c + (1.0 - f_t) * z_t
            return c, o_t * c

        _, hs = lax.scan(step, jnp.zeros((B, H), jnp.float32), (z, f, o))
        h = hs
    last = h[-1]
    mid = jnp.maximum(last @ params["fc_w1"] + params["fc_b1"], 0.0)
    return mid @ params["fc_w2"] + params["fc_b2"]


# ---------------------------------------------------------------------------
# Deterministic parameter init (mirrors module __init__ shapes)
# ---------------------------------------------------------------------------
def init_params(key, input_size, hidden_size, num_layers, output_size):
    keys = jax.random.split(key, num_layers + 4)
    qrnn_w = []
    for layer in range(num_layers):
        d_in = input_size if layer == 0 else hidden_size
        # nn.Linear(2*d_in, 3*hidden, bias=False), stored transposed.
        w = jax.random.normal(keys[layer], (2 * d_in, 3 * hidden_size),
                              jnp.float32) * 0.1
        qrnn_w.append(w)
    fc_w1 = jax.random.normal(keys[-4], (hidden_size, hidden_size),
                              jnp.float32) * 0.1
    fc_b1 = jax.random.normal(keys[-3], (1, hidden_size), jnp.float32) * 0.1
    fc_w2 = jax.random.normal(keys[-2], (hidden_size, output_size),
                              jnp.float32) * 0.1
    fc_b2 = jax.random.normal(keys[-1], (1, output_size), jnp.float32) * 0.1
    return {"qrnn_w": qrnn_w, "fc_w1": fc_w1, "fc_b1": fc_b1,
            "fc_w2": fc_w2, "fc_b2": fc_b2}


if __name__ == "__main__":
    seq_len, batch, input_size = 8, 2, 4
    hidden_size, num_layers, output_size = 32, 2, 4

    key = jax.random.PRNGKey(0)
    k_x, k_p = jax.random.split(key)
    x = jax.random.normal(k_x, (seq_len, batch, input_size), jnp.float32)
    params = init_params(k_p, input_size, hidden_size, num_layers, output_size)

    out = qrnn_forward(x, params)
    out = jax.block_until_ready(out)

    ref = qrnn_forward_ref(x, params)
    assert out.shape == (batch, output_size), out.shape
    # bf16 MXU data path -> loosened tolerance vs. the f32 reference.
    assert jnp.allclose(out, ref, atol=2e-2, rtol=2e-2), (out, ref)

    print("KERNEL_OK")
</pallas_src>

<mosaic_0001>
module attributes {stable_mosaic.version = 11 : i64} {
  func.func @_qrnn_layer_kernel(%arg0: i32, %arg1: i32, %arg2: memref<1x128x4xbf16, #tpu.memory_space<vmem>>, %arg3: memref<4x768xbf16, #tpu.memory_space<vmem>>, %arg4: memref<1x128x128xbf16, #tpu.memory_space<vmem>>, %arg5: memref<16x128xf32, #tpu.memory_space<vmem>>, %arg6: memref<16x384xf32, #tpu.memory_space<vmem>>, %arg7: memref<128x384xf32, #tpu.memory_space<vmem>>) attributes {dimension_semantics = [#tpu.dimension_semantics<parallel>, #tpu.dimension_semantics<arbitrary>], iteration_bounds = array<i64: 1, 1>, scalar_prefetch = 0 : i64, scratch_operands = 3 : i64, tpu.core_type = #tpu.core_type<tc>, window_params = [{transform_indices = @transform_0, window_bounds = array<i64: 1, 128, 4>}, {pipeline_mode = #tpu.pipeline_mode<synchronous>, transform_indices = @transform_1, window_bounds = array<i64: 4, 768>}, {transform_indices = @transform_2, window_bounds = array<i64: 1, 128, 128>}]} {
    %c0_i32 = arith.constant 0 : i32
    %0 = arith.cmpi eq, %arg1, %c0_i32 : i32
    %1 = arith.extui %0 : i1 to i32
    %c0_i32_0 = arith.constant 0 : i32
    %2 = arith.cmpi ne, %1, %c0_i32_0 : i32
    scf.if %2 {
      %cst_60 = arith.constant 0.000000e+00 : f32
      %177 = vector.broadcast %cst_60 : f32 to vector<16x128xf32>
      %c0_61 = arith.constant 0 : index
      %c0_62 = arith.constant 0 : index
      %178 = vector.load %arg5[%c0_61, %c0_62] : memref<16x128xf32, #tpu.memory_space<vmem>>, vector<16x128xf32>
      tpu.vector_store %arg5[%c0_61, %c0_62], %177 {strides = array<i32>} : memref<16x128xf32, #tpu.memory_space<vmem>>, vector<16x128xf32>,
      %cst_63 = arith.constant 0.000000e+00 : f32
      %179 = vector.broadcast %cst_63 : f32 to vector<16x384xf32>
      %c0_64 = arith.constant 0 : index
      %c0_65 = arith.constant 0 : index
      %180 = vector.load %arg6[%c0_64, %c0_65] : memref<16x384xf32, #tpu.memory_space<vmem>>, vector<16x384xf32>
      tpu.vector_store %arg6[%c0_64, %c0_65], %179 {strides = array<i32>} : memref<16x384xf32, #tpu.memory_space<vmem>>, vector<16x384xf32>,
    } else {
    }
    %c0 = arith.constant 0 : index
    %c0_1 = arith.constant 0 : index
    %c0_2 = arith.constant 0 : index
    %3 = vector.load %arg2[%c0, %c0_1, %c0_2] : memref<1x128x4xbf16, #tpu.memory_space<vmem>>, vector<1x128x4xbf16>
    %4 = vector.shape_cast %3 : vector<1x128x4xbf16> to vector<128x4xbf16>
    %c0_3 = arith.constant 0 : index
    %c0_4 = arith.constant 0 : index
    %5 = vector.load %arg3[%c0_3, %c0_4] : memref<4x768xbf16, #tpu.memory_space<vmem>>, vector<4x768xbf16>
    %cst = arith.constant dense<0.000000e+00> : vector<128x768xf32>
    %6 = tpu.matmul %4, %5, %cst {dimension_numbers = #tpu.dot_dimension_numbers<[1], [0], [0], [1], [0, 0, 1, 1], [], []>} : vector<128x4xbf16>, vector<4x768xbf16>, vector<128x768xf32> -> vector<128x768xf32>
    %7 = vector.extract_strided_slice %6 {offsets = [0, 0], sizes = [16, 384], strides = [1, 1]} : vector<128x768xf32> to vector<16x384xf32>
    %c0_5 = arith.constant 0 : index
    %c0_6 = arith.constant 0 : index
    %8 = vector.load %arg6[%c0_5, %c0_6] : memref<16x384xf32, #tpu.memory_space<vmem>>, vector<16x384xf32>
    %9 = arith.addf %7, %8 : vector<16x384xf32>
    %10 = vector.extract_strided_slice %9 {offsets = [0, 0], sizes = [16, 128], strides = [1, 1]} : vector<16x384xf32> to vector<16x128xf32>
    %11 = math.tanh %10 : vector<16x128xf32>
    %12 = vector.extract_strided_slice %9 {offsets = [0, 128], sizes = [16, 128], strides = [1, 1]} : vector<16x384xf32> to vector<16x128xf32>
    %13 = arith.negf %12 : vector<16x128xf32>
    %14 = math.exp %13 : vector<16x128xf32>
    %cst_7 = arith.constant 1.000000e+00 : f32
    %15 = vector.broadcast %cst_7 : f32 to vector<16x128xf32>
    %16 = arith.addf %15, %14 : vector<16x128xf32>
    %17 = arith.divf %15, %16 : vector<16x128xf32>
    %18 = vector.extract_strided_slice %9 {offsets = [0, 256], sizes = [16, 128], strides = [1, 1]} : vector<16x384xf32> to vector<16x128xf32>
    %19 = arith.negf %18 : vector<16x128xf32>
    %20 = math.exp %19 : vector<16x128xf32>
    %cst_8 = arith.constant 1.000000e+00 : f32
    %21 = vector.broadcast %cst_8 : f32 to vector<16x128xf32>
    %22 = arith.addf %21, %20 : vector<16x128xf32>
    %23 = arith.divf %21, %22 : vector<16x128xf32>
    %c0_9 = arith.constant 0 : index
    %c0_10 = arith.constant 0 : index
    %24 = vector.load %arg7[%c0_9, %c0_10] : memref<128x384xf32, #tpu.memory_space<vmem>>, vector<16x128xf32>
    tpu.vector_store %arg7[%c0_9, %c0_10], %17 {strides = array<i32>} : memref<128x384xf32, #tpu.memory_space<vmem>>, vector<16x128xf32>,
    %cst_11 = arith.constant 1.000000e+00 : f32
    %25 = vector.broadcast %cst_11 : f32 to vector<16x128xf32>
    %26 = arith.subf %25, %17 : vector<16x128xf32>
    %27 = arith.mulf %26, %11 : vector<16x128xf32>
    %c0_12 = arith.constant 0 : index
    %c128 = arith.constant 128 : index
    %28 = vector.load %arg7[%c0_12, %c128] : memref<128x384xf32, #tpu.memory_space<vmem>>, vector<16x128xf32>
    tpu.vector_store %arg7[%c0_12, %c128], %27 {strides = array<i32>} : memref<128x384xf32, #tpu.memory_space<vmem>>, vector<16x128xf32>,
    %c0_13 = arith.constant 0 : index
    %c256 = arith.constant 256 : index
    %29 = vector.load %arg7[%c0_13, %c256] : memref<128x384xf32, #tpu.memory_space<vmem>>, vector<16x128xf32>
    tpu.vector_store %arg7[%c0_13, %c256], %23 {strides = array<i32>} : memref<128x384xf32, #tpu.memory_space<vmem>>, vector<16x128xf32>,
    %30 = vector.extract_strided_slice %6 {offsets = [16, 0], sizes = [112, 384], strides = [1, 1]} : vector<128x768xf32> to vector<112x384xf32>
    %31 = vector.extract_strided_slice %6 {offsets = [0, 384], sizes = [112, 384], strides = [1, 1]} : vector<128x768xf32> to vector<112x384xf32>
    %32 = arith.addf %30, %31 : vector<112x384xf32>
    %33 = vector.extract_strided_slice %32 {offsets = [0, 0], sizes = [112, 128], strides = [1, 1]} : vector<112x384xf32> to vector<112x128xf32>
    %34 = math.tanh %33 : vector<112x128xf32>
    %35 = vector.extract_strided_slice %32 {offsets = [0, 128], sizes = [112, 128], strides = [1, 1]} : vector<112x384xf32> to vector<112x128xf32>
    %36 = arith.negf %35 : vector<112x128xf32>
    %37 = math.exp %36 : vector<112x128xf32>
    %cst_14 = arith.constant 1.000000e+00 : f32
    %38 = vector.broadcast %cst_14 : f32 to vector<112x128xf32>
    %39 = arith.addf %38, %37 : vector<112x128xf32>
    %40 = arith.divf %38, %39 : vector<112x128xf32>
    %41 = vector.extract_strided_slice %32 {offsets = [0, 256], sizes = [112, 128], strides = [1, 1]} : vector<112x384xf32> to vector<112x128xf32>
    %42 = arith.negf %41 : vector<112x128xf32>
    %43 = math.exp %42 : vector<112x128xf32>
    %cst_15 = arith.constant 1.000000e+00 : f32
    %44 = vector.broadcast %cst_15 : f32 to vector<112x128xf32>
    %45 = arith.addf %44, %43 : vector<112x128xf32>
    %46 = arith.divf %44, %45 : vector<112x128xf32>
    %c16 = arith.constant 16 : index
    %c0_16 = arith.constant 0 : index
    %47 = vector.load %arg7[%c16, %c0_16] : memref<128x384xf32, #tpu.memory_space<vmem>>, vector<112x128xf32>
    tpu.vector_store %arg7[%c16, %c0_16], %40 {strides = array<i32>} : memref<128x384xf32, #tpu.memory_space<vmem>>, vector<112x128xf32>,
    %cst_17 = arith.constant 1.000000e+00 : f32
    %48 = vector.broadcast %cst_17 : f32 to vector<112x128xf32>
    %49 = arith.subf %48, %40 : vector<112x128xf32>
    %50 = arith.mulf %49, %34 : vector<112x128xf32>
    %c16_18 = arith.constant 16 : index
    %c128_19 = arith.constant 128 : index
    %51 = vector.load %arg7[%c16_18, %c128_19] : memref<128x384xf32, #tpu.memory_space<vmem>>, vector<112x128xf32>
    tpu.vector_store %arg7[%c16_18, %c128_19], %50 {strides = array<i32>} : memref<128x384xf32, #tpu.memory_space<vmem>>, vector<112x128xf32>,
    %c16_20 = arith.constant 16 : index
    %c256_21 = arith.constant 256 : index
    %52 = vector.load %arg7[%c16_20, %c256_21] : memref<128x384xf32, #tpu.memory_space<vmem>>, vector<112x128xf32>
    tpu.vector_store %arg7[%c16_20, %c256_21], %46 {strides = array<i32>} : memref<128x384xf32, #tpu.memory_space<vmem>>, vector<112x128xf32>,
    %53 = vector.extract_strided_slice %6 {offsets = [112, 384], sizes = [16, 384], strides = [1, 1]} : vector<128x768xf32> to vector<16x384xf32>
    %c0_22 = arith.constant 0 : index
    %c0_23 = arith.constant 0 : index
    %54 = vector.load %arg6[%c0_22, %c0_23] : memref<16x384xf32, #tpu.memory_space<vmem>>, vector<16x384xf32>
    tpu.vector_store %arg6[%c0_22, %c0_23], %53 {strides = array<i32>} : memref<16x384xf32, #tpu.memory_space<vmem>>, vector<16x384xf32>,
    %c0_24 = arith.constant 0 : index
    %c0_25 = arith.constant 0 : index
    %55 = vector.load %arg5[%c0_24, %c0_25] : memref<16x128xf32, #tpu.memory_space<vmem>>, vector<16x128xf32>
    %c0_i32_26 = arith.constant 0 : i32
    %c16_i32 = arith.constant 16 : i32
    %56 = arith.muli %c0_i32_26, %c16_i32 : i32
    %57 = tpu.assume_multiple %56, 16 : i32
    %58 = arith.index_cast %57 : i32 to index
    %c0_27 = arith.constant 0 : index
    %59 = vector.load %arg7[%58, %c0_27] : memref<128x384xf32, #tpu.memory_space<vmem>>, vector<16x384xf32>
    %60 = vector.extract_strided_slice %59 {offsets = [0, 0], sizes = [16, 128], strides = [1, 1]} : vector<16x384xf32> to vector<16x128xf32>
    %61 = arith.mulf %60, %55 : vector<16x128xf32>
    %62 = vector.extract_strided_slice %59 {offsets = [0, 128], sizes = [16, 128], strides = [1, 1]} : vector<16x384xf32> to vector<16x128xf32>
    %63 = arith.addf %61, %62 : vector<16x128xf32>
    %64 = vector.extract_strided_slice %59 {offsets = [0, 256], sizes = [16, 128], strides = [1, 1]} : vector<16x384xf32> to vector<16x128xf32>
    %65 = arith.mulf %64, %63 : vector<16x128xf32>
    %66 = arith.truncf %65 : vector<16x128xf32> to vector<16x128xbf16>
    %c0_28 = arith.constant 0 : index
    %67 = arith.index_cast %57 : i32 to index
    %c0_29 = arith.constant 0 : index
    %68 = vector.load %arg4[%c0_28, %67, %c0_29] : memref<1x128x128xbf16, #tpu.memory_space<vmem>>, vector<1x16x128xbf16>
    %69 = vector.shape_cast %68 : vector<1x16x128xbf16> to vector<16x128xbf16>
    %70 = vector.shape_cast %66 : vector<16x128xbf16> to vector<1x16x128xbf16>
    tpu.vector_store %arg4[%c0_28, %67, %c0_29], %70 {strides = array<i32>} : memref<1x128x128xbf16, #tpu.memory_space<vmem>>, vector<1x16x128xbf16>,
    %c1_i32 = arith.constant 1 : i32
    %c16_i32_30 = arith.constant 16 : i32
    %71 = arith.muli %c1_i32, %c16_i32_30 : i32
    %72 = tpu.assume_multiple %71, 16 : i32
    %73 = arith.index_cast %72 : i32 to index
    %c0_31 = arith.constant 0 : index
    %74 = vector.load %arg7[%73, %c0_31] : memref<128x384xf32, #tpu.memory_space<vmem>>, vector<16x384xf32>
    %75 = vector.extract_strided_slice %74 {offsets = [0, 0], sizes = [16, 128], strides = [1, 1]} : vector<16x384xf32> to vector<16x128xf32>
    %76 = arith.mulf %75, %63 : vector<16x128xf32>
    %77 = vector.extract_strided_slice %74 {offsets = [0, 128], sizes = [16, 128], strides = [1, 1]} : vector<16x384xf32> to vector<16x128xf32>
    %78 = arith.addf %76, %77 : vector<16x128xf32>
    %79 = vector.extract_strided_slice %74 {offsets = [0, 256], sizes = [16, 128], strides = [1, 1]} : vector<16x384xf32> to vector<16x128xf32>
    %80 = arith.mulf %79, %78 : vector<16x128xf32>
    %81 = arith.truncf %80 : vector<16x128xf32> to vector<16x128xbf16>
    %c0_32 = arith.constant 0 : index
    %82 = arith.index_cast %72 : i32 to index
    %c0_33 = arith.constant 0 : index
    %83 = vector.load %arg4[%c0_32, %82, %c0_33] : memref<1x128x128xbf16, #tpu.memory_space<vmem>>, vector<1x16x128xbf16>
    %84 = vector.shape_cast %83 : vector<1x16x128xbf16> to vector<16x128xbf16>
    %85 = vector.shape_cast %81 : vector<16x128xbf16> to vector<1x16x128xbf16>
    tpu.vector_store %arg4[%c0_32, %82, %c0_33], %85 {strides = array<i32>} : memref<1x128x128xbf16, #tpu.memory_space<vmem>>, vector<1x16x128xbf16>,
    %c2_i32 = arith.constant 2 : i32
    %c16_i32_34 = arith.constant 16 : i32
    %86 = arith.muli %c2_i32, %c16_i32_34 : i32
    %87 = tpu.assume_multiple %86, 16 : i32
    %88 = arith.index_cast %87 : i32 to index
    %c0_35 = arith.constant 0 : index
    %89 = vector.load %arg7[%88, %c0_35] : memref<128x384xf32, #tpu.memory_space<vmem>>, vector<16x384xf32>
    %90 = vector.extract_strided_slice %89 {offsets = [0, 0], sizes = [16, 128], strides = [1, 1]} : vector<16x384xf32> to vector<16x128xf32>
    %91 = arith.mulf %90, %78 : vector<16x128xf32>
    %92 = vector.extract_strided_slice %89 {offsets = [0, 128], sizes = [16, 128], strides = [1, 1]} : vector<16x384xf32> to vector<16x128xf32>
    %93 = arith.addf %91, %92 : vector<16x128xf32>
    %94 = vector.extract_strided_slice %89 {offsets = [0, 256], sizes = [16, 128], strides = [1, 1]} : vector<16x384xf32> to vector<16x128xf32>
    %95 = arith.mulf %94, %93 : vector<16x128xf32>
    %96 = arith.truncf %95 : vector<16x128xf32> to vector<16x128xbf16>
    %c0_36 = arith.constant 0 : index
    %97 = arith.index_cast %87 : i32 to index
    %c0_37 = arith.constant 0 : index
    %98 = vector.load %arg4[%c0_36, %97, %c0_37] : memref<1x128x128xbf16, #tpu.memory_space<vmem>>, vector<1x16x128xbf16>
    %99 = vector.shape_cast %98 : vector<1x16x128xbf16> to vector<16x128xbf16>
    %100 = vector.shape_cast %96 : vector<16x128xbf16> to vector<1x16x128xbf16>
    tpu.vector_store %arg4[%c0_36, %97, %c0_37], %100 {strides = array<i32>} : memref<1x128x128xbf16, #tpu.memory_space<vmem>>, vector<1x16x128xbf16>,
    %c3_i32 = arith.constant 3 : i32
    %c16_i32_38 = arith.constant 16 : i32
    %101 = arith.muli %c3_i32, %c16_i32_38 : i32
    %102 = tpu.assume_multiple %101, 16 : i32
    %103 = arith.index_cast %102 : i32 to index
    %c0_39 = arith.constant 0 : index
    %104 = vector.load %arg7[%103, %c0_39] : memref<128x384xf32, #tpu.memory_space<vmem>>, vector<16x384xf32>
    %105 = vector.extract_strided_slice %104 {offsets = [0, 0], sizes = [16, 128], strides = [1, 1]} : vector<16x384xf32> to vector<16x128xf32>
    %106 = arith.mulf %105, %93 : vector<16x128xf32>
    %107 = vector.extract_strided_slice %104 {offsets = [0, 128], sizes = [16, 128], strides = [1, 1]} : vector<16x384xf32> to vector<16x128xf32>
    %108 = arith.addf %106, %107 : vector<16x128xf32>
    %109 = vector.extract_strided_slice %104 {offsets = [0, 256], sizes = [16, 128], strides = [1, 1]} : vector<16x384xf32> to vector<16x128xf32>
    %110 = arith.mulf %109, %108 : vector<16x128xf32>
    %111 = arith.truncf %110 : vector<16x128xf32> to vector<16x128xbf16>
    %c0_40 = arith.constant 0 : index
    %112 = arith.index_cast %102 : i32 to index
    %c0_41 = arith.constant 0 : index
    %113 = vector.load %arg4[%c0_40, %112, %c0_41] : memref<1x128x128xbf16, #tpu.memory_space<vmem>>, vector<1x16x128xbf16>
    %114 = vector.shape_cast %113 : vector<1x16x128xbf16> to vector<16x128xbf16>
    %115 = vector.shape_cast %111 : vector<16x128xbf16> to vector<1x16x128xbf16>
    tpu.vector_store %arg4[%c0_40, %112, %c0_41], %115 {strides = array<i32>} : memref<1x128x128xbf16, #tpu.memory_space<vmem>>, vector<1x16x128xbf16>,
    %c4_i32 = arith.constant 4 : i32
    %c16_i32_42 = arith.constant 16 : i32
    %116 = arith.muli %c4_i32, %c16_i32_42 : i32
    %117 = tpu.assume_multiple %116, 16 : i32
    %118 = arith.index_cast %117 : i32 to index
    %c0_43 = arith.constant 0 : index
    %119 = vector.load %arg7[%118, %c0_43] : memref<128x384xf32, #tpu.memory_space<vmem>>, vector<16x384xf32>
    %120 = vector.extract_strided_slice %119 {offsets = [0, 0], sizes = [16, 128], strides = [1, 1]} : vector<16x384xf32> to vector<16x128xf32>
    %121 = arith.mulf %120, %108 : vector<16x128xf32>
    %122 = vector.extract_strided_slice %119 {offsets = [0, 128], sizes = [16, 128], strides = [1, 1]} : vector<16x384xf32> to vector<16x128xf32>
    %123 = arith.addf %121, %122 : vector<16x128xf32>
    %124 = vector.extract_strided_slice %119 {offsets = [0, 256], sizes = [16, 128], strides = [1, 1]} : vector<16x384xf32> to vector<16x128xf32>
    %125 = arith.mulf %124, %123 : vector<16x128xf32>
    %126 = arith.truncf %125 : vector<16x128xf32> to vector<16x128xbf16>
    %c0_44 = arith.constant 0 : index
    %127 = arith.index_cast %117 : i32 to index
    %c0_45 = arith.constant 0 : index
    %128 = vector.load %arg4[%c0_44, %127, %c0_45] : memref<1x128x128xbf16, #tpu.memory_space<vmem>>, vector<1x16x128xbf16>
    %129 = vector.shape_cast %128 : vector<1x16x128xbf16> to vector<16x128xbf16>
    %130 = vector.shape_cast %126 : vector<16x128xbf16> to vector<1x16x128xbf16>
    tpu.vector_store %arg4[%c0_44, %127, %c0_45], %130 {strides = array<i32>} : memref<1x128x128xbf16, #tpu.memory_space<vmem>>, vector<1x16x128xbf16>,
    %c5_i32 = arith.constant 5 : i32
    %c16_i32_46 = arith.constant 16 : i32
    %131 = arith.muli %c5_i32, %c16_i32_46 : i32
    %132 = tpu.assume_multiple %131, 16 : i32
    %133 = arith.index_cast %132 : i32 to index
    %c0_47 = arith.constant 0 : index
    %134 = vector.load %arg7[%133, %c0_47] : memref<128x384xf32, #tpu.memory_space<vmem>>, vector<16x384xf32>
    %135 = vector.extract_strided_slice %134 {offsets = [0, 0], sizes = [16, 128], strides = [1, 1]} : vector<16x384xf32> to vector<16x128xf32>
    %136 = arith.mulf %135, %123 : vector<16x128xf32>
    %137 = vector.extract_strided_slice %134 {offsets = [0, 128], sizes = [16, 128], strides = [1, 1]} : vector<16x384xf32> to vector<16x128xf32>
    %138 = arith.addf %136, %137 : vector<16x128xf32>
    %139 = vector.extract_strided_slice %134 {offsets = [0, 256], sizes = [16, 128], strides = [1, 1]} : vector<16x384xf32> to vector<16x128xf32>
    %140 = arith.mulf %139, %138 : vector<16x128xf32>
    %141 = arith.truncf %140 : vector<16x128xf32> to vector<16x128xbf16>
    %c0_48 = arith.constant 0 : index
    %142 = arith.index_cast %132 : i32 to index
    %c0_49 = arith.constant 0 : index
    %143 = vector.load %arg4[%c0_48, %142, %c0_49] : memref<1x128x128xbf16, #tpu.memory_space<vmem>>, vector<1x16x128xbf16>
    %144 = vector.shape_cast %143 : vector<1x16x128xbf16> to vector<16x128xbf16>
    %145 = vector.shape_cast %141 : vector<16x128xbf16> to vector<1x16x128xbf16>
    tpu.vector_store %arg4[%c0_48, %142, %c0_49], %145 {strides = array<i32>} : memref<1x128x128xbf16, #tpu.memory_space<vmem>>, vector<1x16x128xbf16>,
    %c6_i32 = arith.constant 6 : i32
    %c16_i32_50 = arith.constant 16 : i32
    %146 = arith.muli %c6_i32, %c16_i32_50 : i32
    %147 = tpu.assume_multiple %146, 16 : i32
    %148 = arith.index_cast %147 : i32 to index
    %c0_51 = arith.constant 0 : index
    %149 = vector.load %arg7[%148, %c0_51] : memref<128x384xf32, #tpu.memory_space<vmem>>, vector<16x384xf32>
    %150 = vector.extract_strided_slice %149 {offsets = [0, 0], sizes = [16, 128], strides = [1, 1]} : vector<16x384xf32> to vector<16x128xf32>
    %151 = arith.mulf %150, %138 : vector<16x128xf32>
    %152 = vector.extract_strided_slice %149 {offsets = [0, 128], sizes = [16, 128], strides = [1, 1]} : vector<16x384xf32> to vector<16x128xf32>
    %153 = arith.addf %151, %152 : vector<16x128xf32>
    %154 = vector.extract_strided_slice %149 {offsets = [0, 256], sizes = [16, 128], strides = [1, 1]} : vector<16x384xf32> to vector<16x128xf32>
    %155 = arith.mulf %154, %153 : vector<16x128xf32>
    %156 = arith.truncf %155 : vector<16x128xf32> to vector<16x128xbf16>
    %c0_52 = arith.constant 0 : index
    %157 = arith.index_cast %147 : i32 to index
    %c0_53 = arith.constant 0 : index
    %158 = vector.load %arg4[%c0_52, %157, %c0_53] : memref<1x128x128xbf16, #tpu.memory_space<vmem>>, vector<1x16x128xbf16>
    %159 = vector.shape_cast %158 : vector<1x16x128xbf16> to vector<16x128xbf16>
    %160 = vector.shape_cast %156 : vector<16x128xbf16> to vector<1x16x128xbf16>
    tpu.vector_store %arg4[%c0_52, %157, %c0_53], %160 {strides = array<i32>} : memref<1x128x128xbf16, #tpu.memory_space<vmem>>, vector<1x16x128xbf16>,
    %c7_i32 = arith.constant 7 : i32
    %c16_i32_54 = arith.constant 16 : i32
    %161 = arith.muli %c7_i32, %c16_i32_54 : i32
    %162 = tpu.assume_multiple %161, 16 : i32
    %163 = arith.index_cast %162 : i32 to index
    %c0_55 = arith.constant 0 : index
    %164 = vector.load %arg7[%163, %c0_55] : memref<128x384xf32, #tpu.memory_space<vmem>>, vector<16x384xf32>
    %165 = vector.extract_strided_slice %164 {offsets = [0, 0], sizes = [16, 128], strides = [1, 1]} : vector<16x384xf32> to vector<16x128xf32>
    %166 = arith.mulf %165, %153 : vector<16x128xf32>
    %167 = vector.extract_strided_slice %164 {offsets = [0, 128], sizes = [16, 128], strides = [1, 1]} : vector<16x384xf32> to vector<16x128xf32>
    %168 = arith.addf %166, %167 : vector<16x128xf32>
    %169 = vector.extract_strided_slice %164 {offsets = [0, 256], sizes = [16, 128], strides = [1, 1]} : vector<16x384xf32> to vector<16x128xf32>
    %170 = arith.mulf %169, %168 : vector<16x128xf32>
    %171 = arith.truncf %170 : vector<16x128xf32> to vector<16x128xbf16>
    %c0_56 = arith.constant 0 : index
    %172 = arith.index_cast %162 : i32 to index
    %c0_57 = arith.constant 0 : index
    %173 = vector.load %arg4[%c0_56, %172, %c0_57] : memref<1x128x128xbf16, #tpu.memory_space<vmem>>, vector<1x16x128xbf16>
    %174 = vector.shape_cast %173 : vector<1x16x128xbf16> to vector<16x128xbf16>
    %175 = vector.shape_cast %171 : vector<16x128xbf16> to vector<1x16x128xbf16>
    tpu.vector_store %arg4[%c0_56, %172, %c0_57], %175 {strides = array<i32>} : memref<1x128x128xbf16, #tpu.memory_space<vmem>>, vector<1x16x128xbf16>,
    %c8_i32 = arith.constant 8 : i32
    %c0_58 = arith.constant 0 : index
    %c0_59 = arith.constant 0 : index
    %176 = vector.load %arg5[%c0_58, %c0_59] : memref<16x128xf32, #tpu.memory_space<vmem>>, vector<16x128xf32>
    tpu.vector_store %arg5[%c0_58, %c0_59], %168 {strides = array<i32>} : memref<16x128xf32, #tpu.memory_space<vmem>>, vector<16x128xf32>,
    return
  }
  func.func @transform_0(%arg0: i32, %arg1: i32) -> (i32, i32, i32) {
    %c0_i32 = arith.constant 0 : i32
    %c0_i32_0 = arith.constant 0 : i32
    return %arg0, %arg1, %c0_i32 : i32, i32, i32
  }
  func.func @transform_1(%arg0: i32, %arg1: i32) -> (i32, i32) {
    %c0_i32 = arith.constant 0 : i32
    %c0_i32_0 = arith.constant 0 : i32
    %c0_i32_1 = arith.constant 0 : i32
    return %c0_i32, %c0_i32_0 : i32, i32
  }
  func.func @transform_2(%arg0: i32, %arg1: i32) -> (i32, i32, i32) {
    %c0_i32 = arith.constant 0 : i32
    %c0_i32_0 = arith.constant 0 : i32
    return %arg0, %arg1, %c0_i32 : i32, i32, i32
  }
}

module attributes {stable_mosaic.version = 11 : i64} {
  func.func @_qrnn_layer_kernel(%arg0: i32, %arg1: i32, %arg2: memref<1x128x128xbf16, #tpu.memory_space<vmem>>, %arg3: memref<128x768xbf16, #tpu.memory_space<vmem>>, %arg4: memref<128x128xf32, #tpu.memory_space<vmem>>, %arg5: memref<1x128xf32, #tpu.memory_space<vmem>>, %arg6: memref<128x4xf32, #tpu.memory_space<vmem>>, %arg7: memref<1x4xf32, #tpu.memory_space<vmem>>, %arg8: memref<1x16x4xf32, #tpu.memory_space<vmem>>, %arg9: memref<16x128xf32, #tpu.memory_space<vmem>>, %arg10: memref<16x384xf32, #tpu.memory_space<vmem>>, %arg11: memref<128x384xf32, #tpu.memory_space<vmem>>, %arg12: memref<16x128xf32, #tpu.memory_space<vmem>>) attributes {dimension_semantics = [#tpu.dimension_semantics<parallel>, #tpu.dimension_semantics<arbitrary>], iteration_bounds = array<i64: 1, 1>, scalar_prefetch = 0 : i64, scratch_operands = 4 : i64, tpu.core_type = #tpu.core_type<tc>, window_params = [{transform_indices = @transform_0, window_bounds = array<i64: 1, 128, 128>}, {pipeline_mode = #tpu.pipeline_mode<synchronous>, transform_indices = @transform_1, window_bounds = array<i64: 128, 768>}, {pipeline_mode = #tpu.pipeline_mode<synchronous>, transform_indices = @transform_2, window_bounds = array<i64: 128, 128>}, {pipeline_mode = #tpu.pipeline_mode<synchronous>, transform_indices = @transform_3, window_bounds = array<i64: 1, 128>}, {pipeline_mode = #tpu.pipeline_mode<synchronous>, transform_indices = @transform_4, window_bounds = array<i64: 128, 4>}, {pipeline_mode = #tpu.pipeline_mode<synchronous>, transform_indices = @transform_5, window_bounds = array<i64: 1, 4>}, {transform_indices = @transform_6, window_bounds = array<i64: 1, 16, 4>}]} {
    %c0_i32 = arith.constant 0 : i32
    %0 = arith.cmpi eq, %arg1, %c0_i32 : i32
    %1 = arith.extui %0 : i1 to i32
    %c0_i32_0 = arith.constant 0 : i32
    %2 = arith.cmpi ne, %1, %c0_i32_0 : i32
    scf.if %2 {
      %cst_70 = arith.constant 0.000000e+00 : f32
      %180 = vector.broadcast %cst_70 : f32 to vector<16x128xf32>
      %c0_71 = arith.constant 0 : index
      %c0_72 = arith.constant 0 : index
      %181 = vector.load %arg9[%c0_71, %c0_72] : memref<16x128xf32, #tpu.memory_space<vmem>>, vector<16x128xf32>
      tpu.vector_store %arg9[%c0_71, %c0_72], %180 {strides = array<i32>} : memref<16x128xf32, #tpu.memory_space<vmem>>, vector<16x128xf32>,
      %cst_73 = arith.constant 0.000000e+00 : f32
      %182 = vector.broadcast %cst_73 : f32 to vector<16x384xf32>
      %c0_74 = arith.constant 0 : index
      %c0_75 = arith.constant 0 : index
      %183 = vector.load %arg10[%c0_74, %c0_75] : memref<16x384xf32, #tpu.memory_space<vmem>>, vector<16x384xf32>
      tpu.vector_store %arg10[%c0_74, %c0_75], %182 {strides = array<i32>} : memref<16x384xf32, #tpu.memory_space<vmem>>, vector<16x384xf32>,
    } else {
    }
    %c0 = arith.constant 0 : index
    %c0_1 = arith.constant 0 : index
    %c0_2 = arith.constant 0 : index
    %3 = vector.load %arg2[%c0, %c0_1, %c0_2] : memref<1x128x128xbf16, #tpu.memory_space<vmem>>, vector<1x128x128xbf16>
    %4 = vector.shape_cast %3 : vector<1x128x128xbf16> to vector<128x128xbf16>
    %c0_3 = arith.constant 0 : index
    %c0_4 = arith.constant 0 : index
    %5 = vector.load %arg3[%c0_3, %c0_4] : memref<128x768xbf16, #tpu.memory_space<vmem>>, vector<128x768xbf16>
    %cst = arith.constant dense<0.000000e+00> : vector<128x768xf32>
    %6 = tpu.matmul %4, %5, %cst {dimension_numbers = #tpu.dot_dimension_numbers<[1], [0], [0], [1], [0, 0, 1, 1], [], []>} : vector<128x128xbf16>, vector<128x768xbf16>, vector<128x768xf32> -> vector<128x768xf32>
    %7 = vector.extract_strided_slice %6 {offsets = [0, 0], sizes = [16, 384], strides = [1, 1]} : vector<128x768xf32> to vector<16x384xf32>
    %c0_5 = arith.constant 0 : index
    %c0_6 = arith.constant 0 : index
    %8 = vector.load %arg10[%c0_5, %c0_6] : memref<16x384xf32, #tpu.memory_space<vmem>>, vector<16x384xf32>
    %9 = arith.addf %7, %8 : vector<16x384xf32>
    %10 = vector.extract_strided_slice %9 {offsets = [0, 0], sizes = [16, 128], strides = [1, 1]} : vector<16x384xf32> to vector<16x128xf32>
    %11 = math.tanh %10 : vector<16x128xf32>
    %12 = vector.extract_strided_slice %9 {offsets = [0, 128], sizes = [16, 128], strides = [1, 1]} : vector<16x384xf32> to vector<16x128xf32>
    %13 = arith.negf %12 : vector<16x128xf32>
    %14 = math.exp %13 : vector<16x128xf32>
    %cst_7 = arith.constant 1.000000e+00 : f32
    %15 = vector.broadcast %cst_7 : f32 to vector<16x128xf32>
    %16 = arith.addf %15, %14 : vector<16x128xf32>
    %17 = arith.divf %15, %16 : vector<16x128xf32>
    %18 = vector.extract_strided_slice %9 {offsets = [0, 256], sizes = [16, 128], strides = [1, 1]} : vector<16x384xf32> to vector<16x128xf32>
    %19 = arith.negf %18 : vector<16x128xf32>
    %20 = math.exp %19 : vector<16x128xf32>
    %cst_8 = arith.constant 1.000000e+00 : f32
    %21 = vector.broadcast %cst_8 : f32 to vector<16x128xf32>
    %22 = arith.addf %21, %20 : vector<16x128xf32>
    %23 = arith.divf %21, %22 : vector<16x128xf32>
    %c0_9 = arith.constant 0 : index
    %c0_10 = arith.constant 0 : index
    %24 = vector.load %arg11[%c0_9, %c0_10] : memref<128x384xf32, #tpu.memory_space<vmem>>, vector<16x128xf32>
    tpu.vector_store %arg11[%c0_9, %c0_10], %17 {strides = array<i32>} : memref<128x384xf32, #tpu.memory_space<vmem>>, vector<16x128xf32>,
    %cst_11 = arith.constant 1.000000e+00 : f32
    %25 = vector.broadcast %cst_11 : f32 to vector<16x128xf32>
    %26 = arith.subf %25, %17 : vector<16x128xf32>
    %27 = arith.mulf %26, %11 : vector<16x128xf32>
    %c0_12 = arith.constant 0 : index
    %c128 = arith.constant 128 : index
    %28 = vector.load %arg11[%c0_12, %c128] : memref<128x384xf32, #tpu.memory_space<vmem>>, vector<16x128xf32>
    tpu.vector_store %arg11[%c0_12, %c128], %27 {strides = array<i32>} : memref<128x384xf32, #tpu.memory_space<vmem>>, vector<16x128xf32>,
    %c0_13 = arith.constant 0 : index
    %c256 = arith.constant 256 : index
    %29 = vector.load %arg11[%c0_13, %c256] : memref<128x384xf32, #tpu.memory_space<vmem>>, vector<16x128xf32>
    tpu.vector_store %arg11[%c0_13, %c256], %23 {strides = array<i32>} : memref<128x384xf32, #tpu.memory_space<vmem>>, vector<16x128xf32>,
    %30 = vector.extract_strided_slice %6 {offsets = [16, 0], sizes = [112, 384], strides = [1, 1]} : vector<128x768xf32> to vector<112x384xf32>
    %31 = vector.extract_strided_slice %6 {offsets = [0, 384], sizes = [112, 384], strides = [1, 1]} : vector<128x768xf32> to vector<112x384xf32>
    %32 = arith.addf %30, %31 : vector<112x384xf32>
    %33 = vector.extract_strided_slice %32 {offsets = [0, 0], sizes = [112, 128], strides = [1, 1]} : vector<112x384xf32> to vector<112x128xf32>
    %34 = math.tanh %33 : vector<112x128xf32>
    %35 = vector.extract_strided_slice %32 {offsets = [0, 128], sizes = [112, 128], strides = [1, 1]} : vector<112x384xf32> to vector<112x128xf32>
    %36 = arith.negf %35 : vector<112x128xf32>
    %37 = math.exp %36 : vector<112x128xf32>
    %cst_14 = arith.constant 1.000000e+00 : f32
    %38 = vector.broadcast %cst_14 : f32 to vector<112x128xf32>
    %39 = arith.addf %38, %37 : vector<112x128xf32>
    %40 = arith.divf %38, %39 : vector<112x128xf32>
    %41 = vector.extract_strided_slice %32 {offsets = [0, 256], sizes = [112, 128], strides = [1, 1]} : vector<112x384xf32> to vector<112x128xf32>
    %42 = arith.negf %41 : vector<112x128xf32>
    %43 = math.exp %42 : vector<112x128xf32>
    %cst_15 = arith.constant 1.000000e+00 : f32
    %44 = vector.broadcast %cst_15 : f32 to vector<112x128xf32>
    %45 = arith.addf %44, %43 : vector<112x128xf32>
    %46 = arith.divf %44, %45 : vector<112x128xf32>
    %c16 = arith.constant 16 : index
    %c0_16 = arith.constant 0 : index
    %47 = vector.load %arg11[%c16, %c0_16] : memref<128x384xf32, #tpu.memory_space<vmem>>, vector<112x128xf32>
    tpu.vector_store %arg11[%c16, %c0_16], %40 {strides = array<i32>} : memref<128x384xf32, #tpu.memory_space<vmem>>, vector<112x128xf32>,
    %cst_17 = arith.constant 1.000000e+00 : f32
    %48 = vector.broadcast %cst_17 : f32 to vector<112x128xf32>
    %49 = arith.subf %48, %40 : vector<112x128xf32>
    %50 = arith.mulf %49, %34 : vector<112x128xf32>
    %c16_18 = arith.constant 16 : index
    %c128_19 = arith.constant 128 : index
    %51 = vector.load %arg11[%c16_18, %c128_19] : memref<128x384xf32, #tpu.memory_space<vmem>>, vector<112x128xf32>
    tpu.vector_store %arg11[%c16_18, %c128_19], %50 {strides = array<i32>} : memref<128x384xf32, #tpu.memory_space<vmem>>, vector<112x128xf32>,
    %c16_20 = arith.constant 16 : index
    %c256_21 = arith.constant 256 : index
    %52 = vector.load %arg11[%c16_20, %c256_21] : memref<128x384xf32, #tpu.memory_space<vmem>>, vector<112x128xf32>
    tpu.vector_store %arg11[%c16_20, %c256_21], %46 {strides = array<i32>} : memref<128x384xf32, #tpu.memory_space<vmem>>, vector<112x128xf32>,
    %53 = vector.extract_strided_slice %6 {offsets = [112, 384], sizes = [16, 384], strides = [1, 1]} : vector<128x768xf32> to vector<16x384xf32>
    %c0_22 = arith.constant 0 : index
    %c0_23 = arith.constant 0 : index
    %54 = vector.load %arg10[%c0_22, %c0_23] : memref<16x384xf32, #tpu.memory_space<vmem>>, vector<16x384xf32>
    tpu.vector_store %arg10[%c0_22, %c0_23], %53 {strides = array<i32>} : memref<16x384xf32, #tpu.memory_space<vmem>>, vector<16x384xf32>,
    %c0_24 = arith.constant 0 : index
    %c0_25 = arith.constant 0 : index
    %55 = vector.load %arg9[%c0_24, %c0_25] : memref<16x128xf32, #tpu.memory_space<vmem>>, vector<16x128xf32>
    %c0_i32_26 = arith.constant 0 : i32
    %c16_i32 = arith.constant 16 : i32
    %56 = arith.muli %c0_i32_26, %c16_i32 : i32
    %57 = tpu.assume_multiple %56, 16 : i32
    %58 = arith.index_cast %57 : i32 to index
    %c0_27 = arith.constant 0 : index
    %59 = vector.load %arg11[%58, %c0_27] : memref<128x384xf32, #tpu.memory_space<vmem>>, vector<16x384xf32>
    %60 = vector.extract_strided_slice %59 {offsets = [0, 0], sizes = [16, 128], strides = [1, 1]} : vector<16x384xf32> to vector<16x128xf32>
    %61 = arith.mulf %60, %55 : vector<16x128xf32>
    %62 = vector.extract_strided_slice %59 {offsets = [0, 128], sizes = [16, 128], strides = [1, 1]} : vector<16x384xf32> to vector<16x128xf32>
    %63 = arith.addf %61, %62 : vector<16x128xf32>
    %64 = vector.extract_strided_slice %59 {offsets = [0, 256], sizes = [16, 128], strides = [1, 1]} : vector<16x384xf32> to vector<16x128xf32>
    %65 = arith.mulf %64, %63 : vector<16x128xf32>
    %c8_i32 = arith.constant 8 : i32
    %66 = arith.muli %arg1, %c8_i32 : i32
    %67 = arith.addi %66, %c0_i32_26 : i32
    %c7_i32 = arith.constant 7 : i32
    %68 = arith.cmpi eq, %67, %c7_i32 : i32
    %69 = arith.extui %68 : i1 to i32
    %c0_i32_28 = arith.constant 0 : i32
    %70 = arith.cmpi ne, %69, %c0_i32_28 : i32
    scf.if %70 {
      %c0_70 = arith.constant 0 : index
      %c0_71 = arith.constant 0 : index
      %180 = vector.load %arg12[%c0_70, %c0_71] : memref<16x128xf32, #tpu.memory_space<vmem>>, vector<16x128xf32>
      tpu.vector_store %arg12[%c0_70, %c0_71], %65 {strides = array<i32>} : memref<16x128xf32, #tpu.memory_space<vmem>>, vector<16x128xf32>,
    } else {
    }
    %c1_i32 = arith.constant 1 : i32
    %c16_i32_29 = arith.constant 16 : i32
    %71 = arith.muli %c1_i32, %c16_i32_29 : i32
    %72 = tpu.assume_multiple %71, 16 : i32
    %73 = arith.index_cast %72 : i32 to index
    %c0_30 = arith.constant 0 : index
    %74 = vector.load %arg11[%73, %c0_30] : memref<128x384xf32, #tpu.memory_space<vmem>>, vector<16x384xf32>
    %75 = vector.extract_strided_slice %74 {offsets = [0, 0], sizes = [16, 128], strides = [1, 1]} : vector<16x384xf32> to vector<16x128xf32>
    %76 = arith.mulf %75, %63 : vector<16x128xf32>
    %77 = vector.extract_strided_slice %74 {offsets = [0, 128], sizes = [16, 128], strides = [1, 1]} : vector<16x384xf32> to vector<16x128xf32>
    %78 = arith.addf %76, %77 : vector<16x128xf32>
    %79 = vector.extract_strided_slice %74 {offsets = [0, 256], sizes = [16, 128], strides = [1, 1]} : vector<16x384xf32> to vector<16x128xf32>
    %80 = arith.mulf %79, %78 : vector<16x128xf32>
    %c8_i32_31 = arith.constant 8 : i32
    %81 = arith.muli %arg1, %c8_i32_31 : i32
    %82 = arith.addi %81, %c1_i32 : i32
    %c7_i32_32 = arith.constant 7 : i32
    %83 = arith.cmpi eq, %82, %c7_i32_32 : i32
    %84 = arith.extui %83 : i1 to i32
    %c0_i32_33 = arith.constant 0 : i32
    %85 = arith.cmpi ne, %84, %c0_i32_33 : i32
    scf.if %85 {
      %c0_70 = arith.constant 0 : index
      %c0_71 = arith.constant 0 : index
      %180 = vector.load %arg12[%c0_70, %c0_71] : memref<16x128xf32, #tpu.memory_space<vmem>>, vector<16x128xf32>
      tpu.vector_store %arg12[%c0_70, %c0_71], %80 {strides = array<i32>} : memref<16x128xf32, #tpu.memory_space<vmem>>, vector<16x128xf32>,
    } else {
    }
    %c2_i32 = arith.constant 2 : i32
    %c16_i32_34 = arith.constant 16 : i32
    %86 = arith.muli %c2_i32, %c16_i32_34 : i32
    %87 = tpu.assume_multiple %86, 16 : i32
    %88 = arith.index_cast %87 : i32 to index
    %c0_35 = arith.constant 0 : index
    %89 = vector.load %arg11[%88, %c0_35] : memref<128x384xf32, #tpu.memory_space<vmem>>, vector<16x384xf32>
    %90 = vector.extract_strided_slice %89 {offsets = [0, 0], sizes = [16, 128], strides = [1, 1]} : vector<16x384xf32> to vector<16x128xf32>
    %91 = arith.mulf %90, %78 : vector<16x128xf32>
    %92 = vector.extract_strided_slice %89 {offsets = [0, 128], sizes = [16, 128], strides = [1, 1]} : vector<16x384xf32> to vector<16x128xf32>
    %93 = arith.addf %91, %92 : vector<16x128xf32>
    %94 = vector.extract_strided_slice %89 {offsets = [0, 256], sizes = [16, 128], strides = [1, 1]} : vector<16x384xf32> to vector<16x128xf32>
    %95 = arith.mulf %94, %93 : vector<16x128xf32>
    %c8_i32_36 = arith.constant 8 : i32
    %96 = arith.muli %arg1, %c8_i32_36 : i32
    %97 = arith.addi %96, %c2_i32 : i32
    %c7_i32_37 = arith.constant 7 : i32
    %98 = arith.cmpi eq, %97, %c7_i32_37 : i32
    %99 = arith.extui %98 : i1 to i32
    %c0_i32_38 = arith.constant 0 : i32
    %100 = arith.cmpi ne, %99, %c0_i32_38 : i32
    scf.if %100 {
      %c0_70 = arith.constant 0 : index
      %c0_71 = arith.constant 0 : index
      %180 = vector.load %arg12[%c0_70, %c0_71] : memref<16x128xf32, #tpu.memory_space<vmem>>, vector<16x128xf32>
      tpu.vector_store %arg12[%c0_70, %c0_71], %95 {strides = array<i32>} : memref<16x128xf32, #tpu.memory_space<vmem>>, vector<16x128xf32>,
    } else {
    }
    %c3_i32 = arith.constant 3 : i32
    %c16_i32_39 = arith.constant 16 : i32
    %101 = arith.muli %c3_i32, %c16_i32_39 : i32
    %102 = tpu.assume_multiple %101, 16 : i32
    %103 = arith.index_cast %102 : i32 to index
    %c0_40 = arith.constant 0 : index
    %104 = vector.load %arg11[%103, %c0_40] : memref<128x384xf32, #tpu.memory_space<vmem>>, vector<16x384xf32>
    %105 = vector.extract_strided_slice %104 {offsets = [0, 0], sizes = [16, 128], strides = [1, 1]} : vector<16x384xf32> to vector<16x128xf32>
    %106 = arith.mulf %105, %93 : vector<16x128xf32>
    %107 = vector.extract_strided_slice %104 {offsets = [0, 128], sizes = [16, 128], strides = [1, 1]} : vector<16x384xf32> to vector<16x128xf32>
    %108 = arith.addf %106, %107 : vector<16x128xf32>
    %109 = vector.extract_strided_slice %104 {offsets = [0, 256], sizes = [16, 128], strides = [1, 1]} : vector<16x384xf32> to vector<16x128xf32>
    %110 = arith.mulf %109, %108 : vector<16x128xf32>
    %c8_i32_41 = arith.constant 8 : i32
    %111 = arith.muli %arg1, %c8_i32_41 : i32
    %112 = arith.addi %111, %c3_i32 : i32
    %c7_i32_42 = arith.constant 7 : i32
    %113 = arith.cmpi eq, %112, %c7_i32_42 : i32
    %114 = arith.extui %113 : i1 to i32
    %c0_i32_43 = arith.constant 0 : i32
    %115 = arith.cmpi ne, %114, %c0_i32_43 : i32
    scf.if %115 {
      %c0_70 = arith.constant 0 : index
      %c0_71 = arith.constant 0 : index
      %180 = vector.load %arg12[%c0_70, %c0_71] : memref<16x128xf32, #tpu.memory_space<vmem>>, vector<16x128xf32>
      tpu.vector_store %arg12[%c0_70, %c0_71], %110 {strides = array<i32>} : memref<16x128xf32, #tpu.memory_space<vmem>>, vector<16x128xf32>,
    } else {
    }
    %c4_i32 = arith.constant 4 : i32
    %c16_i32_44 = arith.constant 16 : i32
    %116 = arith.muli %c4_i32, %c16_i32_44 : i32
    %117 = tpu.assume_multiple %116, 16 : i32
    %118 = arith.index_cast %117 : i32 to index
    %c0_45 = arith.constant 0 : index
    %119 = vector.load %arg11[%118, %c0_45] : memref<128x384xf32, #tpu.memory_space<vmem>>, vector<16x384xf32>
    %120 = vector.extract_strided_slice %119 {offsets = [0, 0], sizes = [16, 128], strides = [1, 1]} : vector<16x384xf32> to vector<16x128xf32>
    %121 = arith.mulf %120, %108 : vector<16x128xf32>
    %122 = vector.extract_strided_slice %119 {offsets = [0, 128], sizes = [16, 128], strides = [1, 1]} : vector<16x384xf32> to vector<16x128xf32>
    %123 = arith.addf %121, %122 : vector<16x128xf32>
    %124 = vector.extract_strided_slice %119 {offsets = [0, 256], sizes = [16, 128], strides = [1, 1]} : vector<16x384xf32> to vector<16x128xf32>
    %125 = arith.mulf %124, %123 : vector<16x128xf32>
    %c8_i32_46 = arith.constant 8 : i32
    %126 = arith.muli %arg1, %c8_i32_46 : i32
    %127 = arith.addi %126, %c4_i32 : i32
    %c7_i32_47 = arith.constant 7 : i32
    %128 = arith.cmpi eq, %127, %c7_i32_47 : i32
    %129 = arith.extui %128 : i1 to i32
    %c0_i32_48 = arith.constant 0 : i32
    %130 = arith.cmpi ne, %129, %c0_i32_48 : i32
    scf.if %130 {
      %c0_70 = arith.constant 0 : index
      %c0_71 = arith.constant 0 : index
      %180 = vector.load %arg12[%c0_70, %c0_71] : memref<16x128xf32, #tpu.memory_space<vmem>>, vector<16x128xf32>
      tpu.vector_store %arg12[%c0_70, %c0_71], %125 {strides = array<i32>} : memref<16x128xf32, #tpu.memory_space<vmem>>, vector<16x128xf32>,
    } else {
    }
    %c5_i32 = arith.constant 5 : i32
    %c16_i32_49 = arith.constant 16 : i32
    %131 = arith.muli %c5_i32, %c16_i32_49 : i32
    %132 = tpu.assume_multiple %131, 16 : i32
    %133 = arith.index_cast %132 : i32 to index
    %c0_50 = arith.constant 0 : index
    %134 = vector.load %arg11[%133, %c0_50] : memref<128x384xf32, #tpu.memory_space<vmem>>, vector<16x384xf32>
    %135 = vector.extract_strided_slice %134 {offsets = [0, 0], sizes = [16, 128], strides = [1, 1]} : vector<16x384xf32> to vector<16x128xf32>
    %136 = arith.mulf %135, %123 : vector<16x128xf32>
    %137 = vector.extract_strided_slice %134 {offsets = [0, 128], sizes = [16, 128], strides = [1, 1]} : vector<16x384xf32> to vector<16x128xf32>
    %138 = arith.addf %136, %137 : vector<16x128xf32>
    %139 = vector.extract_strided_slice %134 {offsets = [0, 256], sizes = [16, 128], strides = [1, 1]} : vector<16x384xf32> to vector<16x128xf32>
    %140 = arith.mulf %139, %138 : vector<16x128xf32>
    %c8_i32_51 = arith.constant 8 : i32
    %141 = arith.muli %arg1, %c8_i32_51 : i32
    %142 = arith.addi %141, %c5_i32 : i32
    %c7_i32_52 = arith.constant 7 : i32
    %143 = arith.cmpi eq, %142, %c7_i32_52 : i32
    %144 = arith.extui %143 : i1 to i32
    %c0_i32_53 = arith.constant 0 : i32
    %145 = arith.cmpi ne, %144, %c0_i32_53 : i32
    scf.if %145 {
      %c0_70 = arith.constant 0 : index
      %c0_71 = arith.constant 0 : index
      %180 = vector.load %arg12[%c0_70, %c0_71] : memref<16x128xf32, #tpu.memory_space<vmem>>, vector<16x128xf32>
      tpu.vector_store %arg12[%c0_70, %c0_71], %140 {strides = array<i32>} : memref<16x128xf32, #tpu.memory_space<vmem>>, vector<16x128xf32>,
    } else {
    }
    %c6_i32 = arith.constant 6 : i32
    %c16_i32_54 = arith.constant 16 : i32
    %146 = arith.muli %c6_i32, %c16_i32_54 : i32
    %147 = tpu.assume_multiple %146, 16 : i32
    %148 = arith.index_cast %147 : i32 to index
    %c0_55 = arith.constant 0 : index
    %149 = vector.load %arg11[%148, %c0_55] : memref<128x384xf32, #tpu.memory_space<vmem>>, vector<16x384xf32>
    %150 = vector.extract_strided_slice %149 {offsets = [0, 0], sizes = [16, 128], strides = [1, 1]} : vector<16x384xf32> to vector<16x128xf32>
    %151 = arith.mulf %150, %138 : vector<16x128xf32>
    %152 = vector.extract_strided_slice %149 {offsets = [0, 128], sizes = [16, 128], strides = [1, 1]} : vector<16x384xf32> to vector<16x128xf32>
    %153 = arith.addf %151, %152 : vector<16x128xf32>
    %154 = vector.extract_strided_slice %149 {offsets = [0, 256], sizes = [16, 128], strides = [1, 1]} : vector<16x384xf32> to vector<16x128xf32>
    %155 = arith.mulf %154, %153 : vector<16x128xf32>
    %c8_i32_56 = arith.constant 8 : i32
    %156 = arith.muli %arg1, %c8_i32_56 : i32
    %157 = arith.addi %156, %c6_i32 : i32
    %c7_i32_57 = arith.constant 7 : i32
    %158 = arith.cmpi eq, %157, %c7_i32_57 : i32
    %159 = arith.extui %158 : i1 to i32
    %c0_i32_58 = arith.constant 0 : i32
    %160 = arith.cmpi ne, %159, %c0_i32_58 : i32
    scf.if %160 {
      %c0_70 = arith.constant 0 : index
      %c0_71 = arith.constant 0 : index
      %180 = vector.load %arg12[%c0_70, %c0_71] : memref<16x128xf32, #tpu.memory_space<vmem>>, vector<16x128xf32>
      tpu.vector_store %arg12[%c0_70, %c0_71], %155 {strides = array<i32>} : memref<16x128xf32, #tpu.memory_space<vmem>>, vector<16x128xf32>,
    } else {
    }
    %c7_i32_59 = arith.constant 7 : i32
    %c16_i32_60 = arith.constant 16 : i32
    %161 = arith.muli %c7_i32_59, %c16_i32_60 : i32
    %162 = tpu.assume_multiple %161, 16 : i32
    %163 = arith.index_cast %162 : i32 to index
    %c0_61 = arith.constant 0 : index
    %164 = vector.load %arg11[%163, %c0_61] : memref<128x384xf32, #tpu.memory_space<vmem>>, vector<16x384xf32>
    %165 = vector.extract_strided_slice %164 {offsets = [0, 0], sizes = [16, 128], strides = [1, 1]} : vector<16x384xf32> to vector<16x128xf32>
    %166 = arith.mulf %165, %153 : vector<16x128xf32>
    %167 = vector.extract_strided_slice %164 {offsets = [0, 128], sizes = [16, 128], strides = [1, 1]} : vector<16x384xf32> to vector<16x128xf32>
    %168 = arith.addf %166, %167 : vector<16x128xf32>
    %169 = vector.extract_strided_slice %164 {offsets = [0, 256], sizes = [16, 128], strides = [1, 1]} : vector<16x384xf32> to vector<16x128xf32>
    %170 = arith.mulf %169, %168 : vector<16x128xf32>
    %c8_i32_62 = arith.constant 8 : i32
    %171 = arith.muli %arg1, %c8_i32_62 : i32
    %172 = arith.addi %171, %c7_i32_59 : i32
    %c7_i32_63 = arith.constant 7 : i32
    %173 = arith.cmpi eq, %172, %c7_i32_63 : i32
    %174 = arith.extui %173 : i1 to i32
    %c0_i32_64 = arith.constant 0 : i32
    %175 = arith.cmpi ne, %174, %c0_i32_64 : i32
    scf.if %175 {
      %c0_70 = arith.constant 0 : index
      %c0_71 = arith.constant 0 : index
      %180 = vector.load %arg12[%c0_70, %c0_71] : memref<16x128xf32, #tpu.memory_space<vmem>>, vector<16x128xf32>
      tpu.vector_store %arg12[%c0_70, %c0_71], %170 {strides = array<i32>} : memref<16x128xf32, #tpu.memory_space<vmem>>, vector<16x128xf32>,
    } else {
    }
    %c8_i32_65 = arith.constant 8 : i32
    %c0_66 = arith.constant 0 : index
    %c0_67 = arith.constant 0 : index
    %176 = vector.load %arg9[%c0_66, %c0_67] : memref<16x128xf32, #tpu.memory_space<vmem>>, vector<16x128xf32>
    tpu.vector_store %arg9[%c0_66, %c0_67], %168 {strides = array<i32>} : memref<16x128xf32, #tpu.memory_space<vmem>>, vector<16x128xf32>,
    %c0_i32_68 = arith.constant 0 : i32
    %177 = arith.cmpi eq, %arg1, %c0_i32_68 : i32
    %178 = arith.extui %177 : i1 to i32
    %c0_i32_69 = arith.constant 0 : i32
    %179 = arith.cmpi ne, %178, %c0_i32_69 : i32
    scf.if %179 {
      %c0_70 = arith.constant 0 : index
      %c0_71 = arith.constant 0 : index
      %180 = vector.load %arg12[%c0_70, %c0_71] : memref<16x128xf32, #tpu.memory_space<vmem>>, vector<16x128xf32>
      %c0_72 = arith.constant 0 : index
      %c0_73 = arith.constant 0 : index
      %181 = vector.load %arg4[%c0_72, %c0_73] : memref<128x128xf32, #tpu.memory_space<vmem>>, vector<128x128xf32>
      %cst_74 = arith.constant dense<0.000000e+00> : vector<16x128xf32>
      %182 = tpu.matmul %180, %181, %cst_74 {dimension_numbers = #tpu.dot_dimension_numbers<[1], [0], [0], [1], [0, 0, 1, 1], [], []>} : vector<16x128xf32>, vector<128x128xf32>, vector<16x128xf32> -> vector<16x128xf32>
      %c0_75 = arith.constant 0 : index
      %c0_76 = arith.constant 0 : index
      %183 = vector.load %arg5[%c0_75, %c0_76] : memref<1x128xf32, #tpu.memory_space<vmem>>, vector<1x128xf32>
      %184 = vector.broadcast %183 : vector<1x128xf32> to vector<16x128xf32>
      %185 = arith.addf %182, %184 : vector<16x128xf32>
      %cst_77 = arith.constant 0.000000e+00 : f32
      %186 = vector.broadcast %cst_77 : f32 to vector<16x128xf32>
      %187 = arith.maximumf %185, %186 : vector<16x128xf32>
      %c0_78 = arith.constant 0 : index
      %c0_79 = arith.constant 0 : index
      %188 = vector.load %arg6[%c0_78, %c0_79] : memref<128x4xf32, #tpu.memory_space<vmem>>, vector<128x4xf32>
      %cst_80 = arith.constant dense<0.000000e+00> : vector<16x4xf32>
      %189 = tpu.matmul %187, %188, %cst_80 {dimension_numbers = #tpu.dot_dimension_numbers<[1], [0], [0], [1], [0, 0, 1, 1], [], []>} : vector<16x128xf32>, vector<128x4xf32>, vector<16x4xf32> -> vector<16x4xf32>
      %c0_81 = arith.constant 0 : index
      %c0_82 = arith.constant 0 : index
      %190 = vector.load %arg7[%c0_81, %c0_82] : memref<1x4xf32, #tpu.memory_space<vmem>>, vector<1x4xf32>
      %191 = vector.broadcast %190 : vector<1x4xf32> to vector<16x4xf32>
      %192 = arith.addf %189, %191 : vector<16x4xf32>
      %c0_83 = arith.constant 0 : index
      %c0_84 = arith.constant 0 : index
      %c0_85 = arith.constant 0 : index
      %193 = vector.load %arg8[%c0_83, %c0_84, %c0_85] : memref<1x16x4xf32, #tpu.memory_space<vmem>>, vector<1x16x4xf32>
      %194 = vector.shape_cast %193 : vector<1x16x4xf32> to vector<16x4xf32>
      %195 = vector.shape_cast %192 : vector<16x4xf32> to vector<1x16x4xf32>
      tpu.vector_store %arg8[%c0_83, %c0_84, %c0_85], %195 {strides = array<i32>} : memref<1x16x4xf32, #tpu.memory_space<vmem>>, vector<1x16x4xf32>,
    } else {
    }
    return
  }
  func.func @transform_0(%arg0: i32, %arg1: i32) -> (i32, i32, i32) {
    %c0_i32 = arith.constant 0 : i32
    %c0_i32_0 = arith.constant 0 : i32
    return %arg0, %arg1, %c0_i32 : i32, i32, i32
  }
  func.func @transform_1(%arg0: i32, %arg1: i32) -> (i32, i32) {
    %c0_i32 = arith.constant 0 : i32
    %c0_i32_0 = arith.constant 0 : i32
    %c0_i32_1 = arith.constant 0 : i32
    return %c0_i32, %c0_i32_0 : i32, i32
  }
  func.func @transform_2(%arg0: i32, %arg1: i32) -> (i32, i32) {
    %c0_i32 = arith.constant 0 : i32
    %c0_i32_0 = arith.constant 0 : i32
    %c0_i32_1 = arith.constant 0 : i32
    return %c0_i32, %c0_i32_0 : i32, i32
  }
  func.func @transform_3(%arg0: i32, %arg1: i32) -> (i32, i32) {
    %c0_i32 = arith.constant 0 : i32
    %c0_i32_0 = arith.constant 0 : i32
    %c0_i32_1 = arith.constant 0 : i32
    return %c0_i32, %c0_i32_0 : i32, i32
  }
  func.func @transform_4(%arg0: i32, %arg1: i32) -> (i32, i32) {
    %c0_i32 = arith.constant 0 : i32
    %c0_i32_0 = arith.constant 0 : i32
    %c0_i32_1 = arith.constant 0 : i32
    return %c0_i32, %c0_i32_0 : i32, i32
  }
  func.func @transform_5(%arg0: i32, %arg1: i32) -> (i32, i32) {
    %c0_i32 = arith.constant 0 : i32
    %c0_i32_0 = arith.constant 0 : i32
    %c0_i32_1 = arith.constant 0 : i32
    return %c0_i32, %c0_i32_0 : i32, i32
  }
  func.func @transform_6(%arg0: i32, %arg1: i32) -> (i32, i32, i32) {
    %c0_i32 = arith.constant 0 : i32
    %c0_i32_0 = arith.constant 0 : i32
    %c0_i32_1 = arith.constant 0 : i32
    return %arg0, %c0_i32, %c0_i32_0 : i32, i32, i32
  }
}

</mosaic_0001>

<llo_original>
// kernel: qrnn_forward.2
$region0: #{qrnn_forward.2}
  #allocation0 [shape = 'u32[]', space=smem, size = 0x4, offset = 0x4, fixed_abs, tag = 'smem constant byte address 0x4 - core index']
  #allocation1 [shape = 'u32[144,128]{1,0:T(1,128)}', space=vmem, size = 0x12000, scoped, tag = 'internal scratch']
  #allocation2 [shape = 'f32[16,128]{1,0:T(8,128)}', space=vmem, size = 0x2000, scoped, tag = 'scratch operand']
  #allocation3 [shape = 'f32[16,384]{1,0:T(8,128)}', space=vmem, size = 0x6000, scoped, tag = 'scratch operand']
  #allocation4 [shape = 'f32[128,384]{1,0:T(8,128)}', space=vmem, size = 0x30000, scoped, tag = 'scratch operand']
  %s0 = inlined_call_operand.vmem [shape: bf16[1,128,4], index: 0, kind: input, shape index: {}]
  %s1 = inlined_call_operand.vmem [shape: bf16[4,768], index: 1, kind: input, shape index: {}]
  %s2 = inlined_call_operand.vmem [shape: bf16[1,128,128], index: 2, kind: output, shape index: {}]
  %s3 = sld [smem:[#allocation0]]
  $region22: #{qrnn_forward.2} parent=0
    _
  %s5 = ssub.s32 1, %s3
  %s6 = scalar_select 0, %s5, %s3
  // Predicated region
  $region2: #{qrnn_forward.2} parent=0 // pred_check
    _
  $region3: #{qrnn_forward.2} parent=0 // pred_check_branch
    %8 = sbr.rel (0) target = $region5
  $region4: #{qrnn_forward.2} parent=0 // pred_region
    _
  $region5: #{qrnn_forward.2} parent=0 // pred_fallthru
    _
  // Predicated region
  $region6: #{qrnn_forward.2} parent=0 // pred_check
    _
  $region7: #{qrnn_forward.2} parent=0 // pred_check_branch
    %10 = sbr.rel (0) target = $region9
  $region8: #{qrnn_forward.2} parent=0 // pred_region
    _
  $region9: #{qrnn_forward.2} parent=0 // pred_fallthru
    _
  %p12 = scmp.eq.s32.totalorder 0, 0
  // Predicated region
  $region10: #{qrnn_forward.2} parent=0 // pred_check
    %p13 = pneg %p12
  $region11: #{qrnn_forward.2} parent=0 // pred_check_branch
    %15 = sbr.rel (%p13) target = $region13
  $region12: #{qrnn_forward.2} parent=0 // pred_region
    %16 = vst [vmem:[#allocation2] sm:$0xff] 0.0
    %17 = vst [vmem:[#allocation2 + $0x8] sm:$0xff] 0.0
    %18 = vst [vmem:[#allocation3] sm:$0xff] 0.0
    %19 = vst [vmem:[#allocation3 + $0x8] sm:$0xff] 0.0
    %20 = vst [vmem:[#allocation3 + $0x10] sm:$0xff] 0.0
    %21 = vst [vmem:[#allocation3 + $0x18] sm:$0xff] 0.0
    %22 = vst [vmem:[#allocation3 + $0x20] sm:$0xff] 0.0
    %23 = vst [vmem:[#allocation3 + $0x28] sm:$0xff] 0.0
  $region13: #{qrnn_forward.2} parent=0 // pred_fallthru
    _
  %v24 = vld [vmem:[%s0] sm:$0xf]
  %v25 = vld [vmem:[%s0 + $0x4] sm:$0xf]
  %v26 = vld [vmem:[%s0 + $0x8] sm:$0xf]
  %v27 = vld [vmem:[%s0 + $0xc] sm:$0xf]
  %v28 = vld [vmem:[%s0 + $0x10] sm:$0xf]
  %v29 = vld [vmem:[%s0 + $0x14] sm:$0xf]
  %v30 = vld [vmem:[%s0 + $0x18] sm:$0xf]
  %v31 = vld [vmem:[%s0 + $0x1c] sm:$0xf]
  %v32 = vld [vmem:[%s0 + $0x20] sm:$0xf]
  %v33 = vld [vmem:[%s0 + $0x24] sm:$0xf]
  %v34 = vld [vmem:[%s0 + $0x28] sm:$0xf]
  %v35 = vld [vmem:[%s0 + $0x2c] sm:$0xf]
  %v36 = vld [vmem:[%s0 + $0x30] sm:$0xf]
  %v37 = vld [vmem:[%s0 + $0x34] sm:$0xf]
  %v38 = vld [vmem:[%s0 + $0x38] sm:$0xf]
  %v39 = vld [vmem:[%s0 + $0x3c] sm:$0xf]
  %v40 = vld [vmem:[%s1] sm:$0xff]
  %v41 = vld [vmem:[%s1 + $0x8] sm:$0xf]
  %v58 = vunpack.c.l.b16 %v24
  %v59 = vunpack.c.l.b16 %v25
  %v60 = vunpack.c.l.b16 %v26
  %v61 = vunpack.c.l.b16 %v27
  %v62 = vunpack.c.l.b16 %v28
  %v63 = vunpack.c.l.b16 %v29
  %v64 = vunpack.c.l.b16 %v30
  %v65 = vunpack.c.l.b16 %v31
  %v66 = vunpack.c.l.b16 %v32
  %v67 = vunpack.c.l.b16 %v33
  %v68 = vunpack.c.l.b16 %v34
  %v69 = vunpack.c.l.b16 %v35
  %v70 = vunpack.c.l.b16 %v36
  %v71 = vunpack.c.l.b16 %v37
  %v72 = vunpack.c.l.b16 %v38
  %v73 = vunpack.c.l.b16 %v39
  %v74 = vpack.c.b16 %v59, %v58
  %v75 = vpack.c.b16 %v61, %v60
  %v76 = vpack.c.b16 %v63, %v62
  %v77 = vpack.c.b16 %v65, %v64
  %v78 = vpack.c.b16 %v67, %v66
  %v79 = vpack.c.b16 %v69, %v68
  %v80 = vpack.c.b16 %v71, %v70
  %v81 = vpack.c.b16 %v73, %v72
  %v84 = vcombine.high %v40, %v40
  %v86 = vunpack.c.l.s4 1983009808
  %v87 = vunpack.c.0.s8 %v86
  %v88 = vlaneseq
  %v89 = vshrl.u32 %v88, 7
  %v90 = vsub.s32 %v87, %v89
  %v91 = vrot.slane %v40, %v90
  %v93 = vunpack.c.l.s4 1983009808
  %v94 = vunpack.c.0.s8 %v93
  %v95 = vlaneseq
  %v96 = vshrl.u32 %v95, 7
  %v97 = vsub.s32 %v94, %v96
  %v98 = vrot.slane %v84, %v97
  %v99 = vcombine.high %v91, %v91
  %v100 = vcombine.high %v98, %v98
  %v102 = vunpack.c.l.s4 1983009808
  %v103 = vunpack.c.0.s8 %v102
  %v104 = vlaneseq
  %v105 = vshrl.u32 %v104, 7
  %v106 = vsub.s32 %v103, %v105
  %v107 = vrot.slane %v41, %v106
  %v108 = vcombine.high %v107, %v107
  %vm109 = vcmask 31744
  %v111 = vsel %vm109, %v74, 0
  %v114 = vsel %vm109, %v75, 0
  %v117 = vsel %vm109, %v76, 0
  %v120 = vsel %vm109, %v77, 0
  %v123 = vsel %vm109, %v78, 0
  %v126 = vsel %vm109, %v79, 0
  %v129 = vsel %vm109, %v80, 0
  %v132 = vsel %vm109, %v81, 0
  %vm134 = vcmask 1041408
  %v136 = vsel %vm134, %v91, 0
  %v139 = vsel %vm134, %v99, 0
  %v142 = vsel %vm134, %v98, 0
  %v145 = vsel %vm134, %v100, 0
  %v148 = vsel %vm134, %v107, 0
  %v151 = vsel %vm134, %v108, 0
  %153 = vmatprep.subr.bf16.mxu0 %v139
  %154 = vmatpush1.bf16.msra.mxu0 %v136
  %155 = vmatprep.subr.bf16.mxu0 0
  %156 = vmatpush1.bf16.msra.mxu0 0
  %157 = vmatprep.subr.bf16.mxu0 0
  %158 = vmatpush1.bf16.msra.mxu0 0
  %159 = vmatprep.subr.bf16.mxu0 0
  %160 = vmatpush1.bf16.msra.mxu0 0
  %161 = vmatprep.subr.bf16.mxu0 0
  %162 = vmatpush1.bf16.msra.mxu0 0
  %163 = vmatprep.subr.bf16.mxu0 0
  %164 = vmatpush1.bf16.msra.mxu0 0
  %165 = vmatprep.subr.bf16.mxu0 0
  %166 = vmatpush1.bf16.msra.mxu0 0
  %167 = vmatprep.subr.bf16.mxu0 0
  %168 = vmatpush1.bf16.msra.mxu0 0
  %169 = vmatprep.subr.bf16.mxu0 0
  %170 = vmatpush1.bf16.msra.mxu0 0
  %171 = vmatprep.subr.bf16.mxu0 0
  %172 = vmatpush1.bf16.msra.mxu0 0
  %173 = vmatprep.subr.bf16.mxu0 0
  %174 = vmatpush1.bf16.msra.mxu0 0
  %175 = vmatprep.subr.bf16.mxu0 0
  %176 = vmatpush1.bf16.msra.mxu0 0
  %177 = vmatprep.subr.bf16.mxu0 0
  %178 = vmatpush1.bf16.msra.mxu0 0
  %179 = vmatprep.subr.bf16.mxu0 0
  %180 = vmatpush1.bf16.msra.mxu0 0
  %181 = vmatprep.subr.bf16.mxu0 0
  %182 = vmatpush1.bf16.msra.mxu0 0
  %183 = vmatprep.subr.bf16.mxu0 0
  %184 = vmatpush1.bf16.msra.mxu0 0
  %185 = vmatprep.mubr.bf16.mxu0 0
  %186 = vmatmul.mubr.bf16.gmra.mrb[0].mxu0 %v111
  %v187 = vpop.f32.mrb[0].mxu0
  %v188 = vadd.f32 0.0, %v187
  %v189 = vpop.f32.mrb[0].mxu0
  %v190 = vadd.f32 0.0, %v189
  %v191 = vpop.f32.mrb[0].mxu0
  %v192 = vadd.f32 0.0, %v191
  %v193 = vpop.f32.mrb[0].mxu0
  %v194 = vadd.f32 0.0, %v193
  %195 = vmatprep.mubr.bf16.mxu0 0
  %196 = vmatmul.mubr.bf16.gmra.mrb[0].mxu0 %v114
  %v197 = vpop.f32.mrb[0].mxu0
  %v198 = vadd.f32 0.0, %v197
  %v199 = vpop.f32.mrb[0].mxu0
  %v200 = vadd.f32 0.0, %v199
  %v201 = vpop.f32.mrb[0].mxu0
  %v202 = vadd.f32 0.0, %v201
  %v203 = vpop.f32.mrb[0].mxu0
  %v204 = vadd.f32 0.0, %v203
  %205 = vmatprep.mubr.bf16.mxu0 0
  %206 = vmatmul.mubr.bf16.gmra.mrb[0].mxu0 %v117
  %v207 = vpop.f32.mrb[0].mxu0
  %v208 = vadd.f32 0.0, %v207
  %v209 = vpop.f32.mrb[0].mxu0
  %v210 = vadd.f32 0.0, %v209
  %v211 = vpop.f32.mrb[0].mxu0
  %v212 = vadd.f32 0.0, %v211
  %v213 = vpop.f32.mrb[0].mxu0
  %v214 = vadd.f32 0.0, %v213
  %215 = vmatprep.mubr.bf16.mxu0 0
  %216 = vmatmul.mubr.bf16.gmra.mrb[0].mxu0 %v120
  %v217 = vpop.f32.mrb[0].mxu0
  %v218 = vadd.f32 0.0, %v217
  %v219 = vpop.f32.mrb[0].mxu0
  %v220 = vadd.f32 0.0, %v219
  %v221 = vpop.f32.mrb[0].mxu0
  %v222 = vadd.f32 0.0, %v221
  %v223 = vpop.f32.mrb[0].mxu0
  %v224 = vadd.f32 0.0, %v223
  %225 = vmatprep.mubr.bf16.mxu0 0
  %226 = vmatmul.mubr.bf16.gmra.mrb[0].mxu0 %v123
  %v227 = vpop.f32.mrb[0].mxu0
  %v228 = vadd.f32 0.0, %v227
  %v229 = vpop.f32.mrb[0].mxu0
  %v230 = vadd.f32 0.0, %v229
  %v231 = vpop.f32.mrb[0].mxu0
  %v232 = vadd.f32 0.0, %v231
  %v233 = vpop.f32.mrb[0].mxu0
  %v234 = vadd.f32 0.0, %v233
  %235 = vmatprep.mubr.bf16.mxu0 0
  %236 = vmatmul.mubr.bf16.gmra.mrb[0].mxu0 %v126
  %v237 = vpop.f32.mrb[0].mxu0
  %v238 = vadd.f32 0.0, %v237
  %v239 = vpop.f32.mrb[0].mxu0
  %v240 = vadd.f32 0.0, %v239
  %v241 = vpop.f32.mrb[0].mxu0
  %v242 = vadd.f32 0.0, %v241
  %v243 = vpop.f32.mrb[0].mxu0
  %v244 = vadd.f32 0.0, %v243
  %245 = vmatprep.mubr.bf16.mxu0 0
  %246 = vmatmul.mubr.bf16.gmra.mrb[0].mxu0 %v129
  %v247 = vpop.f32.mrb[0].mxu0
  %v248 = vadd.f32 0.0, %v247
  %v249 = vpop.f32.mrb[0].mxu0
  %v250 = vadd.f32 0.0, %v249
  %v251 = vpop.f32.mrb[0].mxu0
  %v252 = vadd.f32 0.0, %v251
  %v253 = vpop.f32.mrb[0].mxu0
  %v254 = vadd.f32 0.0, %v253
  %255 = vmatprep.mubr.bf16.mxu0 0
  %256 = vmatmul.mubr.bf16.gmra.mrb[0].mxu0 %v132
  %v257 = vpop.f32.mrb[0].mxu0
  %v258 = vadd.f32 0.0, %v257
  %v259 = vpop.f32.mrb[0].mxu0
  %v260 = vadd.f32 0.0, %v259
  %v261 = vpop.f32.mrb[0].mxu0
  %v262 = vadd.f32 0.0, %v261
  %v263 = vpop.f32.mrb[0].mxu0
  %v264 = vadd.f32 0.0, %v263
  %265 = vdwg.mxu0
  %266 = vmatprep.subr.bf16.mxu0 %v145
  %267 = vmatpush1.bf16.msra.mxu0 %v142
  %268 = vmatprep.subr.bf16.mxu0 0
  %269 = vmatpush1.bf16.msra.mxu0 0
  %270 = vmatprep.subr.bf16.mxu0 0
  %271 = vmatpush1.bf16.msra.mxu0 0
  %272 = vmatprep.subr.bf16.mxu0 0
  %273 = vmatpush1.bf16.msra.mxu0 0
  %274 = vmatprep.subr.bf16.mxu0 0
  %275 = vmatpush1.bf16.msra.mxu0 0
  %276 = vmatprep.subr.bf16.mxu0 0
  %277 = vmatpush1.bf16.msra.mxu0 0
  %278 = vmatprep.subr.bf16.mxu0 0
  %279 = vmatpush1.bf16.msra.mxu0 0
  %280 = vmatprep.subr.bf16.mxu0 0
  %281 = vmatpush1.bf16.msra.mxu0 0
  %282 = vmatprep.subr.bf16.mxu0 0
  %283 = vmatpush1.bf16.msra.mxu0 0
  %284 = vmatprep.subr.bf16.mxu0 0
  %285 = vmatpush1.bf16.msra.mxu0 0
  %286 = vmatprep.subr.bf16.mxu0 0
  %287 = vmatpush1.bf16.msra.mxu0 0
  %288 = vmatprep.subr.bf16.mxu0 0
  %289 = vmatpush1.bf16.msra.mxu0 0
  %290 = vmatprep.subr.bf16.mxu0 0
  %291 = vmatpush1.bf16.msra.mxu0 0
  %292 = vmatprep.subr.bf16.mxu0 0
  %293 = vmatpush1.bf16.msra.mxu0 0
  %294 = vmatprep.subr.bf16.mxu0 0
  %295 = vmatpush1.bf16.msra.mxu0 0
  %296 = vmatprep.subr.bf16.mxu0 0
  %297 = vmatpush1.bf16.msra.mxu0 0
  %298 = vmatprep.mubr.bf16.mxu0 0
  %299 = vmatmul.mubr.bf16.gmra.mrb[0].mxu0 %v111
  %v300 = vpop.f32.mrb[0].mxu0
  %v301 = vadd.f32 0.0, %v300
  %v302 = vpop.f32.mrb[0].mxu0
  %v303 = vadd.f32 0.0, %v302
  %v304 = vpop.f32.mrb[0].mxu0
  %v305 = vadd.f32 0.0, %v304
  %v306 = vpop.f32.mrb[0].mxu0
  %v307 = vadd.f32 0.0, %v306
  %308 = vmatprep.mubr.bf16.mxu0 0
  %309 = vmatmul.mubr.bf16.gmra.mrb[0].mxu0 %v114
  %v310 = vpop.f32.mrb[0].mxu0
  %v311 = vadd.f32 0.0, %v310
  %v312 = vpop.f32.mrb[0].mxu0
  %v313 = vadd.f32 0.0, %v312
  %v314 = vpop.f32.mrb[0].mxu0
  %v315 = vadd.f32 0.0, %v314
  %v316 = vpop.f32.mrb[0].mxu0
  %v317 = vadd.f32 0.0, %v316
  %318 = vmatprep.mubr.bf16.mxu0 0
  %319 = vmatmul.mubr.bf16.gmra.mrb[0].mxu0 %v117
  %v320 = vpop.f32.mrb[0].mxu0
  %v321 = vadd.f32 0.0, %v320
  %v322 = vpop.f32.mrb[0].mxu0
  %v323 = vadd.f32 0.0, %v322
  %v324 = vpop.f32.mrb[0].mxu0
  %v325 = vadd.f32 0.0, %v324
  %v326 = vpop.f32.mrb[0].mxu0
  %v327 = vadd.f32 0.0, %v326
  %328 = vmatprep.mubr.bf16.mxu0 0
  %329 = vmatmul.mubr.bf16.gmra.mrb[0].mxu0 %v120
  %v330 = vpop.f32.mrb[0].mxu0
  %v331 = vadd.f32 0.0, %v330
  %v332 = vpop.f32.mrb[0].mxu0
  %v333 = vadd.f32 0.0, %v332
  %v334 = vpop.f32.mrb[0].mxu0
  %v335 = vadd.f32 0.0, %v334
  %v336 = vpop.f32.mrb[0].mxu0
  %v337 = vadd.f32 0.0, %v336
  %338 = vmatprep.mubr.bf16.mxu0 0
  %339 = vmatmul.mubr.bf16.gmra.mrb[0].mxu0 %v123
  %v340 = vpop.f32.mrb[0].mxu0
  %v341 = vadd.f32 0.0, %v340
  %v342 = vpop.f32.mrb[0].mxu0
  %v343 = vadd.f32 0.0, %v342
  %v344 = vpop.f32.mrb[0].mxu0
  %v345 = vadd.f32 0.0, %v344
  %v346 = vpop.f32.mrb[0].mxu0
  %v347 = vadd.f32 0.0, %v346
  %348 = vmatprep.mubr.bf16.mxu0 0
  %349 = vmatmul.mubr.bf16.gmra.mrb[0].mxu0 %v126
  %v350 = vpop.f32.mrb[0].mxu0
  %v351 = vadd.f32 0.0, %v350
  %v352 = vpop.f32.mrb[0].mxu0
  %v353 = vadd.f32 0.0, %v352
  %v354 = vpop.f32.mrb[0].mxu0
  %v355 = vadd.f32 0.0, %v354
  %v356 = vpop.f32.mrb[0].mxu0
  %v357 = vadd.f32 0.0, %v356
  %358 = vmatprep.mubr.bf16.mxu0 0
  %359 = vmatmul.mubr.bf16.gmra.mrb[0].mxu0 %v129
  %v360 = vpop.f32.mrb[0].mxu0
  %v361 = vadd.f32 0.0, %v360
  %v362 = vpop.f32.mrb[0].mxu0
  %v363 = vadd.f32 0.0, %v362
  %v364 = vpop.f32.mrb[0].mxu0
  %v365 = vadd.f32 0.0, %v364
  %v366 = vpop.f32.mrb[0].mxu0
  %v367 = vadd.f32 0.0, %v366
  %368 = vmatprep.mubr.bf16.mxu0 0
  %369 = vmatmul.mubr.bf16.gmra.mrb[0].mxu0 %v132
  %v370 = vpop.f32.mrb[0].mxu0
  %v371 = vadd.f32 0.0, %v370
  %v372 = vpop.f32.mrb[0].mxu0
  %v373 = vadd.f32 0.0, %v372
  %v374 = vpop.f32.mrb[0].mxu0
  %v375 = vadd.f32 0.0, %v374
  %v376 = vpop.f32.mrb[0].mxu0
  %v377 = vadd.f32 0.0, %v376
  %378 = vdwg.mxu0
  %379 = vmatprep.subr.bf16.mxu0 %v151
  %380 = vmatpush1.bf16.msra.mxu0 %v148
  %381 = vmatprep.subr.bf16.mxu0 0
  %382 = vmatpush1.bf16.msra.mxu0 0
  %383 = vmatprep.subr.bf16.mxu0 0
  %384 = vmatpush1.bf16.msra.mxu0 0
  %385 = vmatprep.subr.bf16.mxu0 0
  %386 = vmatpush1.bf16.msra.mxu0 0
  %387 = vmatprep.subr.bf16.mxu0 0
  %388 = vmatpush1.bf16.msra.mxu0 0
  %389 = vmatprep.subr.bf16.mxu0 0
  %390 = vmatpush1.bf16.msra.mxu0 0
  %391 = vmatprep.subr.bf16.mxu0 0
  %392 = vmatpush1.bf16.msra.mxu0 0
  %393 = vmatprep.subr.bf16.mxu0 0
  %394 = vmatpush1.bf16.msra.mxu0 0
  %395 = vmatprep.subr.bf16.mxu0 0
  %396 = vmatpush1.bf16.msra.mxu0 0
  %397 = vmatprep.subr.bf16.mxu0 0
  %398 = vmatpush1.bf16.msra.mxu0 0
  %399 = vmatprep.subr.bf16.mxu0 0
  %400 = vmatpush1.bf16.msra.mxu0 0
  %401 = vmatprep.subr.bf16.mxu0 0
  %402 = vmatpush1.bf16.msra.mxu0 0
  %403 = vmatprep.subr.bf16.mxu0 0
  %404 = vmatpush1.bf16.msra.mxu0 0
  %405 = vmatprep.subr.bf16.mxu0 0
  %406 = vmatpush1.bf16.msra.mxu0 0
  %407 = vmatprep.subr.bf16.mxu0 0
  %408 = vmatpush1.bf16.msra.mxu0 0
  %409 = vmatprep.subr.bf16.mxu0 0
  %410 = vmatpush1.bf16.msra.mxu0 0
  %411 = vmatprep.mubr.bf16.mxu0 0
  %412 = vmatmul.mubr.bf16.gmra.mrb[0].mxu0 %v111
  %v413 = vpop.f32.mrb[0].mxu0
  %v414 = vadd.f32 0.0, %v413
  %v415 = vpop.f32.mrb[0].mxu0
  %v416 = vadd.f32 0.0, %v415
  %v417 = vpop.f32.mrb[0].mxu0
  %v418 = vadd.f32 0.0, %v417
  %v419 = vpop.f32.mrb[0].mxu0
  %v420 = vadd.f32 0.0, %v419
  %421 = vmatprep.mubr.bf16.mxu0 0
  %422 = vmatmul.mubr.bf16.gmra.mrb[0].mxu0 %v114
  %v423 = vpop.f32.mrb[0].mxu0
  %v424 = vadd.f32 0.0, %v423
  %v425 = vpop.f32.mrb[0].mxu0
  %v426 = vadd.f32 0.0, %v425
  %v427 = vpop.f32.mrb[0].mxu0
  %v428 = vadd.f32 0.0, %v427
  %v429 = vpop.f32.mrb[0].mxu0
  %v430 = vadd.f32 0.0, %v429
  %431 = vmatprep.mubr.bf16.mxu0 0
  %432 = vmatmul.mubr.bf16.gmra.mrb[0].mxu0 %v117
  %v433 = vpop.f32.mrb[0].mxu0
  %v434 = vadd.f32 0.0, %v433
  %v435 = vpop.f32.mrb[0].mxu0
  %v436 = vadd.f32 0.0, %v435
  %v437 = vpop.f32.mrb[0].mxu0
  %v438 = vadd.f32 0.0, %v437
  %v439 = vpop.f32.mrb[0].mxu0
  %v440 = vadd.f32 0.0, %v439
  %441 = vmatprep.mubr.bf16.mxu0 0
  %442 = vmatmul.mubr.bf16.gmra.mrb[0].mxu0 %v120
  %v443 = vpop.f32.mrb[0].mxu0
  %v444 = vadd.f32 0.0, %v443
  %v445 = vpop.f32.mrb[0].mxu0
  %v446 = vadd.f32 0.0, %v445
  %v447 = vpop.f32.mrb[0].mxu0
  %v448 = vadd.f32 0.0, %v447
  %v449 = vpop.f32.mrb[0].mxu0
  %v450 = vadd.f32 0.0, %v449
  %451 = vmatprep.mubr.bf16.mxu0 0
  %452 = vmatmul.mubr.bf16.gmra.mrb[0].mxu0 %v123
  %v453 = vpop.f32.mrb[0].mxu0
  %v454 = vadd.f32 0.0, %v453
  %v455 = vpop.f32.mrb[0].mxu0
  %v456 = vadd.f32 0.0, %v455
  %v457 = vpop.f32.mrb[0].mxu0
  %v458 = vadd.f32 0.0, %v457
  %v459 = vpop.f32.mrb[0].mxu0
  %v460 = vadd.f32 0.0, %v459
  %461 = vmatprep.mubr.bf16.mxu0 0
  %462 = vmatmul.mubr.bf16.gmra.mrb[0].mxu0 %v126
  %v463 = vpop.f32.mrb[0].mxu0
  %v464 = vadd.f32 0.0, %v463
  %v465 = vpop.f32.mrb[0].mxu0
  %v466 = vadd.f32 0.0, %v465
  %v467 = vpop.f32.mrb[0].mxu0
  %v468 = vadd.f32 0.0, %v467
  %v469 = vpop.f32.mrb[0].mxu0
  %v470 = vadd.f32 0.0, %v469
  %471 = vmatprep.mubr.bf16.mxu0 0
  %472 = vmatmul.mubr.bf16.gmra.mrb[0].mxu0 %v129
  %v473 = vpop.f32.mrb[0].mxu0
  %v474 = vadd.f32 0.0, %v473
  %v475 = vpop.f32.mrb[0].mxu0
  %v476 = vadd.f32 0.0, %v475
  %v477 = vpop.f32.mrb[0].mxu0
  %v478 = vadd.f32 0.0, %v477
  %v479 = vpop.f32.mrb[0].mxu0
  %v480 = vadd.f32 0.0, %v479
  %481 = vmatprep.mubr.bf16.mxu0 0
  %482 = vmatmul.mubr.bf16.gmra.mrb[0].mxu0 %v132
  %v483 = vpop.f32.mrb[0].mxu0
  %v484 = vadd.f32 0.0, %v483
  %v485 = vpop.f32.mrb[0].mxu0
  %v486 = vadd.f32 0.0, %v485
  %v487 = vpop.f32.mrb[0].mxu0
  %v488 = vadd.f32 0.0, %v487
  %v489 = vpop.f32.mrb[0].mxu0
  %v490 = vadd.f32 0.0, %v489
  %491 = vdwg.mxu0
  %v492 = vld [vmem:[#allocation3] sm:$0xff]
  %v493 = vld [vmem:[#allocation3 + $0x8] sm:$0xff]
  %v494 = vld [vmem:[#allocation3 + $0x10] sm:$0xff]
  %v495 = vld [vmem:[#allocation3 + $0x18] sm:$0xff]
  %v496 = vld [vmem:[#allocation3 + $0x20] sm:$0xff]
  %v497 = vld [vmem:[#allocation3 + $0x28] sm:$0xff]
  %v498 = vadd.f32 %v188, %v492
  %v499 = vadd.f32 %v190, %v493
  %v500 = vadd.f32 %v301, %v494
  %v501 = vadd.f32 %v192, %v495
  %v502 = vadd.f32 %v194, %v496
  %v503 = vadd.f32 %v305, %v497
  %v504 = vtanh.pop %v498
  %v505 = vtanh.pop %v501
  %v506 = vxor.u32 %v499, 2147483648
  %v507 = vxor.u32 %v502, 2147483648
  %v508 = vmul.f32 %v506, 1.442695
  %v509 = vpow.pop %v508
  %v510 = vmul.f32 %v507, 1.442695
  %v511 = vpow.pop %v510
  %v512 = vadd.f32 %v509, 1.0
  %v513 = vadd.f32 %v511, 1.0
  %v514 = vrcp.pop %v512
  %v515 = vmul.f32 1.0, %v514
  %v516 = vrcp.pop %v513
  %v517 = vmul.f32 1.0, %v516
  %v518 = vxor.u32 %v500, 2147483648
  %v519 = vxor.u32 %v503, 2147483648
  %v520 = vmul.f32 %v518, 1.442695
  %v521 = vpow.pop %v520
  %v522 = vmul.f32 %v519, 1.442695
  %v523 = vpow.pop %v522
  %v524 = vadd.f32 %v521, 1.0
  %v525 = vadd.f32 %v523, 1.0
  %v526 = vrcp.pop %v524
  %v527 = vmul.f32 1.0, %v526
  %v528 = vrcp.pop %v525
  %v529 = vmul.f32 1.0, %v528
  %530 = vst [vmem:[#allocation4] sm:$0xff] %v515
  %531 = vst [vmem:[#allocation4 + $0x18] sm:$0xff] %v517
  %v532 = vsub.f32 1.0, %v515
  %v533 = vsub.f32 1.0, %v517
  %v534 = vmul.f32 %v532, %v504
  %v535 = vmul.f32 %v533, %v505
  %536 = vst [vmem:[#allocation4 + $0x8] sm:$0xff] %v534
  %537 = vst [vmem:[#allocation4 + $0x20] sm:$0xff] %v535
  %538 = vst [vmem:[#allocation4 + $0x10] sm:$0xff] %v527
  %539 = vst [vmem:[#allocation4 + $0x28] sm:$0xff] %v529
  %v540 = vadd.f32 %v198, %v303
  %v541 = vadd.f32 %v200, %v414
  %v542 = vadd.f32 %v311, %v416
  %v543 = vadd.f32 %v202, %v307
  %v544 = vadd.f32 %v204, %v418
  %v545 = vadd.f32 %v315, %v420
  %v546 = vadd.f32 %v208, %v313
  %v547 = vadd.f32 %v210, %v424
  %v548 = vadd.f32 %v321, %v426
  %v549 = vadd.f32 %v212, %v317
  %v550 = vadd.f32 %v214, %v428
  %v551 = vadd.f32 %v325, %v430
  %v552 = vadd.f32 %v218, %v323
  %v553 = vadd.f32 %v220, %v434
  %v554 = vadd.f32 %v331, %v436
  %v555 = vadd.f32 %v222, %v327
  %v556 = vadd.f32 %v224, %v438
  %v557 = vadd.f32 %v335, %v440
  %v558 = vadd.f32 %v228, %v333
  %v559 = vadd.f32 %v230, %v444
  %v560 = vadd.f32 %v341, %v446
  %v561 = vadd.f32 %v232, %v337
  %v562 = vadd.f32 %v234, %v448
  %v563 = vadd.f32 %v345, %v450
  %v564 = vadd.f32 %v238, %v343
  %v565 = vadd.f32 %v240, %v454
  %v566 = vadd.f32 %v351, %v456
  %v567 = vadd.f32 %v242, %v347
  %v568 = vadd.f32 %v244, %v458
  %v569 = vadd.f32 %v355, %v460
  %v570 = vadd.f32 %v248, %v353
  %v571 = vadd.f32 %v250, %v464
  %v572 = vadd.f32 %v361, %v466
  %v573 = vadd.f32 %v252, %v357
  %v574 = vadd.f32 %v254, %v468
  %v575 = vadd.f32 %v365, %v470
  %v576 = vadd.f32 %v258, %v363
  %v577 = vadd.f32 %v260, %v474
  %v578 = vadd.f32 %v371, %v476
  %v579 = vadd.f32 %v262, %v367
  %v580 = vadd.f32 %v264, %v478
  %v581 = vadd.f32 %v375, %v480
  %v582 = vtanh.pop %v540
  %v583 = vtanh.pop %v543
  %v584 = vtanh.pop %v546
  %v585 = vtanh.pop %v549
  %v586 = vtanh.pop %v552
  %v587 = vtanh.pop %v555
  %v588 = vtanh.pop %v558
  %v589 = vtanh.pop %v561
  %v590 = vtanh.pop %v564
  %v591 = vtanh.pop %v567
  %v592 = vtanh.pop %v570
  %v593 = vtanh.pop %v573
  %v594 = vtanh.pop %v576
  %v595 = vtanh.pop %v579
  %v596 = vxor.u32 %v541, 2147483648
  %v597 = vxor.u32 %v544, 2147483648
  %v598 = vxor.u32 %v547, 2147483648
  %v599 = vxor.u32 %v550, 2147483648
  %v600 = vxor.u32 %v553, 2147483648
  %v601 = vxor.u32 %v556, 2147483648
  %v602 = vxor.u32 %v559, 2147483648
  %v603 = vxor.u32 %v562, 2147483648
  %v604 = vxor.u32 %v565, 2147483648
  %v605 = vxor.u32 %v568, 2147483648
  %v606 = vxor.u32 %v571, 2147483648
  %v607 = vxor.u32 %v574, 2147483648
  %v608 = vxor.u32 %v577, 2147483648
  %v609 = vxor.u32 %v580, 2147483648
  %v610 = vmul.f32 %v596, 1.442695
  %v611 = vpow.pop %v610
  %v612 = vmul.f32 %v597, 1.442695
  %v613 = vpow.pop %v612
  %v614 = vmul.f32 %v598, 1.442695
  %v615 = vpow.pop %v614
  %v616 = vmul.f32 %v599, 1.442695
  %v617 = vpow.pop %v616
  %v618 = vmul.f32 %v600, 1.442695
  %v619 = vpow.pop %v618
  %v620 = vmul.f32 %v601, 1.442695
  %v621 = vpow.pop %v620
  %v622 = vmul.f32 %v602, 1.442695
  %v623 = vpow.pop %v622
  %v624 = vmul.f32 %v603, 1.442695
  %v625 = vpow.pop %v624
  %v626 = vmul.f32 %v604, 1.442695
  %v627 = vpow.pop %v626
  %v628 = vmul.f32 %v605, 1.442695
  %v629 = vpow.pop %v628
  %v630 = vmul.f32 %v606, 1.442695
  %v631 = vpow.pop %v630
  %v632 = vmul.f32 %v607, 1.442695
  %v633 = vpow.pop %v632
  %v634 = vmul.f32 %v608, 1.442695
  %v635 = vpow.pop %v634
  %v636 = vmul.f32 %v609, 1.442695
  %v637 = vpow.pop %v636
  %v638 = vadd.f32 %v611, 1.0
  %v639 = vadd.f32 %v613, 1.0
  %v640 = vadd.f32 %v615, 1.0
  %v641 = vadd.f32 %v617, 1.0
  %v642 = vadd.f32 %v619, 1.0
  %v643 = vadd.f32 %v621, 1.0
  %v644 = vadd.f32 %v623, 1.0
  %v645 = vadd.f32 %v625, 1.0
  %v646 = vadd.f32 %v627, 1.0
  %v647 = vadd.f32 %v629, 1.0
  %v648 = vadd.f32 %v631, 1.0
  %v649 = vadd.f32 %v633, 1.0
  %v650 = vadd.f32 %v635, 1.0
  %v651 = vadd.f32 %v637, 1.0
  %v652 = vrcp.pop %v638
  %v653 = vmul.f32 1.0, %v652
  %v654 = vrcp.pop %v639
  %v655 = vmul.f32 1.0, %v654
  %v656 = vrcp.pop %v640
  %v657 = vmul.f32 1.0, %v656
  %v658 = vrcp.pop %v641
  %v659 = vmul.f32 1.0, %v658
  %v660 = vrcp.pop %v642
  %v661 = vmul.f32 1.0, %v660
  %v662 = vrcp.pop %v643
  %v663 = vmul.f32 1.0, %v662
  %v664 = vrcp.pop %v644
  %v665 = vmul.f32 1.0, %v664
  %v666 = vrcp.pop %v645
  %v667 = vmul.f32 1.0, %v666
  %v668 = vrcp.pop %v646
  %v669 = vmul.f32 1.0, %v668
  %v670 = vrcp.pop %v647
  %v671 = vmul.f32 1.0, %v670
  %v672 = vrcp.pop %v648
  %v673 = vmul.f32 1.0, %v672
  %v674 = vrcp.pop %v649
  %v675 = vmul.f32 1.0, %v674
  %v676 = vrcp.pop %v650
  %v677 = vmul.f32 1.0, %v676
  %v678 = vrcp.pop %v651
  %v679 = vmul.f32 1.0, %v678
  %v680 = vxor.u32 %v542, 2147483648
  %v681 = vxor.u32 %v545, 2147483648
  %v682 = vxor.u32 %v548, 2147483648
  %v683 = vxor.u32 %v551, 2147483648
  %v684 = vxor.u32 %v554, 2147483648
  %v685 = vxor.u32 %v557, 2147483648
  %v686 = vxor.u32 %v560, 2147483648
  %v687 = vxor.u32 %v563, 2147483648
  %v688 = vxor.u32 %v566, 2147483648
  %v689 = vxor.u32 %v569, 2147483648
  %v690 = vxor.u32 %v572, 2147483648
  %v691 = vxor.u32 %v575, 2147483648
  %v692 = vxor.u32 %v578, 2147483648
  %v693 = vxor.u32 %v581, 2147483648
  %v694 = vmul.f32 %v680, 1.442695
  %v695 = vpow.pop %v694
  %v696 = vmul.f32 %v681, 1.442695
  %v697 = vpow.pop %v696
  %v698 = vmul.f32 %v682, 1.442695
  %v699 = vpow.pop %v698
  %v700 = vmul.f32 %v683, 1.442695
  %v701 = vpow.pop %v700
  %v702 = vmul.f32 %v684, 1.442695
  %v703 = vpow.pop %v702
  %v704 = vmul.f32 %v685, 1.442695
  %v705 = vpow.pop %v704
  %v706 = vmul.f32 %v686, 1.442695
  %v707 = vpow.pop %v706
  %v708 = vmul.f32 %v687, 1.442695
  %v709 = vpow.pop %v708
  %v710 = vmul.f32 %v688, 1.442695
  %v711 = vpow.pop %v710
  %v712 = vmul.f32 %v689, 1.442695
  %v713 = vpow.pop %v712
  %v714 = vmul.f32 %v690, 1.442695
  %v715 = vpow.pop %v714
  %v716 = vmul.f32 %v691, 1.442695
  %v717 = vpow.pop %v716
  %v718 = vmul.f32 %v692, 1.442695
  %v719 = vpow.pop %v718
  %v720 = vmul.f32 %v693, 1.442695
  %v721 = vpow.pop %v720
  %v722 = vadd.f32 %v695, 1.0
  %v723 = vadd.f32 %v697, 1.0
  %v724 = vadd.f32 %v699, 1.0
  %v725 = vadd.f32 %v701, 1.0
  %v726 = vadd.f32 %v703, 1.0
  %v727 = vadd.f32 %v705, 1.0
  %v728 = vadd.f32 %v707, 1.0
  %v729 = vadd.f32 %v709, 1.0
  %v730 = vadd.f32 %v711, 1.0
  %v731 = vadd.f32 %v713, 1.0
  %v732 = vadd.f32 %v715, 1.0
  %v733 = vadd.f32 %v717, 1.0
  %v734 = vadd.f32 %v719, 1.0
  %v735 = vadd.f32 %v721, 1.0
  %v736 = vrcp.pop %v722
  %v737 = vmul.f32 1.0, %v736
  %v738 = vrcp.pop %v723
  %v739 = vmul.f32 1.0, %v738
  %v740 = vrcp.pop %v724
  %v741 = vmul.f32 1.0, %v740
  %v742 = vrcp.pop %v725
  %v743 = vmul.f32 1.0, %v742
  %v744 = vrcp.pop %v726
  %v745 = vmul.f32 1.0, %v744
  %v746 = vrcp.pop %v727
  %v747 = vmul.f32 1.0, %v746
  %v748 = vrcp.pop %v728
  %v749 = vmul.f32 1.0, %v748
  %v750 = vrcp.pop %v729
  %v751 = vmul.f32 1.0, %v750
  %v752 = vrcp.pop %v730
  %v753 = vmul.f32 1.0, %v752
  %v754 = vrcp.pop %v731
  %v755 = vmul.f32 1.0, %v754
  %v756 = vrcp.pop %v732
  %v757 = vmul.f32 1.0, %v756
  %v758 = vrcp.pop %v733
  %v759 = vmul.f32 1.0, %v758
  %v760 = vrcp.pop %v734
  %v761 = vmul.f32 1.0, %v760
  %v762 = vrcp.pop %v735
  %v763 = vmul.f32 1.0, %v762
  %764 = vst [vmem:[#allocation4 + $0x30] sm:$0xff] %v653
  %765 = vst [vmem:[#allocation4 + $0x48] sm:$0xff] %v655
  %766 = vst [vmem:[#allocation4 + $0x60] sm:$0xff] %v657
  %767 = vst [vmem:[#allocation4 + $0x78] sm:$0xff] %v659
  %768 = vst [vmem:[#allocation4 + $0x90] sm:$0xff] %v661
  %769 = vst [vmem:[#allocation4 + $0xa8] sm:$0xff] %v663
  %770 = vst [vmem:[#allocation4 + $0xc0] sm:$0xff] %v665
  %771 = vst [vmem:[#allocation4 + $0xd8] sm:$0xff] %v667
  %772 = vst [vmem:[#allocation4 + $0xf0] sm:$0xff] %v669
  %773 = vst [vmem:[#allocation4 + $0x108] sm:$0xff] %v671
  %774 = vst [vmem:[#allocation4 + $0x120] sm:$0xff] %v673
  %775 = vst [vmem:[#allocation4 + $0x138] sm:$0xff] %v675
  %776 = vst [vmem:[#allocation4 + $0x150] sm:$0xff] %v677
  %777 = vst [vmem:[#allocation4 + $0x168] sm:$0xff] %v679
  %v778 = vsub.f32 1.0, %v653
  %v779 = vsub.f32 1.0, %v655
  %v780 = vsub.f32 1.0, %v657
  %v781 = vsub.f32 1.0, %v659
  %v782 = vsub.f32 1.0, %v661
  %v783 = vsub.f32 1.0, %v663
  %v784 = vsub.f32 1.0, %v665
  %v785 = vsub.f32 1.0, %v667
  %v786 = vsub.f32 1.0, %v669
  %v787 = vsub.f32 1.0, %v671
  %v788 = vsub.f32 1.0, %v673
  %v789 = vsub.f32 1.0, %v675
  %v790 = vsub.f32 1.0, %v677
  %v791 = vsub.f32 1.0, %v679
  %v792 = vmul.f32 %v778, %v582
  %v793 = vmul.f32 %v779, %v583
  %v794 = vmul.f32 %v780, %v584
  %v795 = vmul.f32 %v781, %v585
  %v796 = vmul.f32 %v782, %v586
  %v797 = vmul.f32 %v783, %v587
  %v798 = vmul.f32 %v784, %v588
  %v799 = vmul.f32 %v785, %v589
  %v800 = vmul.f32 %v786, %v590
  %v801 = vmul.f32 %v787, %v591
  %v802 = vmul.f32 %v788, %v592
  %v803 = vmul.f32 %v789, %v593
  %v804 = vmul.f32 %v790, %v594
  %v805 = vmul.f32 %v791, %v595
  %806 = vst [vmem:[#allocation4 + $0x38] sm:$0xff] %v792
  %807 = vst [vmem:[#allocation4 + $0x50] sm:$0xff] %v793
  %808 = vst [vmem:[#allocation4 + $0x68] sm:$0xff] %v794
  %809 = vst [vmem:[#allocation4 + $0x80] sm:$0xff] %v795
  %810 = vst [vmem:[#allocation4 + $0x98] sm:$0xff] %v796
  %811 = vst [vmem:[#allocation4 + $0xb0] sm:$0xff] %v797
  %812 = vst [vmem:[#allocation4 + $0xc8] sm:$0xff] %v798
  %813 = vst [vmem:[#allocation4 + $0xe0] sm:$0xff] %v799
  %814 = vst [vmem:[#allocation4 + $0xf8] sm:$0xff] %v800
  %815 = vst [vmem:[#allocation4 + $0x110] sm:$0xff] %v801
  %816 = vst [vmem:[#allocation4 + $0x128] sm:$0xff] %v802
  %817 = vst [vmem:[#allocation4 + $0x140] sm:$0xff] %v803
  %818 = vst [vmem:[#allocation4 + $0x158] sm:$0xff] %v804
  %819 = vst [vmem:[#allocation4 + $0x170] sm:$0xff] %v805
  %820 = vst [vmem:[#allocation4 + $0x40] sm:$0xff] %v737
  %821 = vst [vmem:[#allocation4 + $0x58] sm:$0xff] %v739
  %822 = vst [vmem:[#allocation4 + $0x70] sm:$0xff] %v741
  %823 = vst [vmem:[#allocation4 + $0x88] sm:$0xff] %v743
  %824 = vst [vmem:[#allocation4 + $0xa0] sm:$0xff] %v745
  %825 = vst [vmem:[#allocation4 + $0xb8] sm:$0xff] %v747
  %826 = vst [vmem:[#allocation4 + $0xd0] sm:$0xff] %v749
  %827 = vst [vmem:[#allocation4 + $0xe8] sm:$0xff] %v751
  %828 = vst [vmem:[#allocation4 + $0x100] sm:$0xff] %v753
  %829 = vst [vmem:[#allocation4 + $0x118] sm:$0xff] %v755
  %830 = vst [vmem:[#allocation4 + $0x130] sm:$0xff] %v757
  %831 = vst [vmem:[#allocation4 + $0x148] sm:$0xff] %v759
  %832 = vst [vmem:[#allocation4 + $0x160] sm:$0xff] %v761
  %833 = vst [vmem:[#allocation4 + $0x178] sm:$0xff] %v763
  %834 = vst [vmem:[#allocation3] sm:$0xff] %v373
  %835 = vst [vmem:[#allocation3 + $0x8] sm:$0xff] %v484
  %836 = vst [vmem:[#allocation3 + $0x10] sm:$0xff] %v486
  %837 = vst [vmem:[#allocation3 + $0x18] sm:$0xff] %v377
  %838 = vst [vmem:[#allocation3 + $0x20] sm:$0xff] %v488
  %839 = vst [vmem:[#allocation3 + $0x28] sm:$0xff] %v490
  %v840 = vld [vmem:[#allocation2] sm:$0xff]
  %v841 = vld [vmem:[#allocation2 + $0x8] sm:$0xff]
  %s842 = smul.u32 0, 3
  %s843 = smul.addr %s842, 8
  %s844 = scalar_lea.vmem [#allocation4], %s843
  %v845 = vld [vmem:[%s844] sm:$0xff]
  %v846 = vld [vmem:[%s844 + $0x8] sm:$0xff]
  %v847 = vld [vmem:[%s844 + $0x10] sm:$0xff]
  %v848 = vld [vmem:[%s844 + $0x18] sm:$0xff]
  %v849 = vld [vmem:[%s844 + $0x20] sm:$0xff]
  %v850 = vld [vmem:[%s844 + $0x28] sm:$0xff]
  %v851 = vmul.f32 %v845, %v840
  %v852 = vmul.f32 %v848, %v841
  %v853 = vadd.f32 %v851, %v846
  %v854 = vadd.f32 %v852, %v849
  %v855 = vmul.f32 %v847, %v853
  %v856 = vmul.f32 %v850, %v854
  %v857 = vpack.c.bf16 %v856, %v855
  %v859 = vunpack.c.l.b16 %v857
  %v860 = vunpack.c.h.b16 %v857
  %v861 = vpack.c.b16 %v859, %v859
  %v862 = vpack.c.b16 %v860, %v860
  %865 = vst [vmem:[%s2] sm:$0xf] %v861
  %866 = vst [vmem:[%s2 + $0x4] sm:$0xf] %v862
  %s867 = smul.u32 2, 3
  %s868 = smul.addr %s867, 8
  %s869 = scalar_lea.vmem [#allocation4], %s868
  %v870 = vld [vmem:[%s869] sm:$0xff]
  %v871 = vld [vmem:[%s869 + $0x8] sm:$0xff]
  %v872 = vld [vmem:[%s869 + $0x10] sm:$0xff]
  %v873 = vld [vmem:[%s869 + $0x18] sm:$0xff]
  %v874 = vld [vmem:[%s869 + $0x20] sm:$0xff]
  %v875 = vld [vmem:[%s869 + $0x28] sm:$0xff]
  %v876 = vmul.f32 %v870, %v853
  %v877 = vmul.f32 %v873, %v854
  %v878 = vadd.f32 %v876, %v871
  %v879 = vadd.f32 %v877, %v874
  %v880 = vmul.f32 %v872, %v878
  %v881 = vmul.f32 %v875, %v879
  %v882 = vpack.c.bf16 %v881, %v880
  %v884 = vunpack.c.l.b16 %v882
  %v885 = vunpack.c.h.b16 %v882
  %v886 = vpack.c.b16 %v884, %v884
  %v887 = vpack.c.b16 %v885, %v885
  %s890 = scalar_lea.vmem %s2, 8
  %891 = vst [vmem:[%s890] sm:$0xf] %v886
  %892 = vst [vmem:[%s890 + $0x4] sm:$0xf] %v887
  %s893 = smul.u32 4, 3
  %s894 = smul.addr %s893, 8
  %s895 = scalar_lea.vmem [#allocation4], %s894
  %v896 = vld [vmem:[%s895] sm:$0xff]
  %v897 = vld [vmem:[%s895 + $0x8] sm:$0xff]
  %v898 = vld [vmem:[%s895 + $0x10] sm:$0xff]
  %v899 = vld [vmem:[%s895 + $0x18] sm:$0xff]
  %v900 = vld [vmem:[%s895 + $0x20] sm:$0xff]
  %v901 = vld [vmem:[%s895 + $0x28] sm:$0xff]
  %v902 = vmul.f32 %v896, %v878
  %v903 = vmul.f32 %v899, %v879
  %v904 = vadd.f32 %v902, %v897
  %v905 = vadd.f32 %v903, %v900
  %v906 = vmul.f32 %v898, %v904
  %v907 = vmul.f32 %v901, %v905
  %v908 = vpack.c.bf16 %v907, %v906
  %v910 = vunpack.c.l.b16 %v908
  %v911 = vunpack.c.h.b16 %v908
  %v912 = vpack.c.b16 %v910, %v910
  %v913 = vpack.c.b16 %v911, %v911
  %s916 = scalar_lea.vmem %s2, 16
  %917 = vst [vmem:[%s916] sm:$0xf] %v912
  %918 = vst [vmem:[%s916 + $0x4] sm:$0xf] %v913
  %s919 = smul.u32 6, 3
  %s920 = smul.addr %s919, 8
  %s921 = scalar_lea.vmem [#allocation4], %s920
  %v922 = vld [vmem:[%s921] sm:$0xff]
  %v923 = vld [vmem:[%s921 + $0x8] sm:$0xff]
  %v924 = vld [vmem:[%s921 + $0x10] sm:$0xff]
  %v925 = vld [vmem:[%s921 + $0x18] sm:$0xff]
  %v926 = vld [vmem:[%s921 + $0x20] sm:$0xff]
  %v927 = vld [vmem:[%s921 + $0x28] sm:$0xff]
  %v928 = vmul.f32 %v922, %v904
  %v929 = vmul.f32 %v925, %v905
  %v930 = vadd.f32 %v928, %v923
  %v931 = vadd.f32 %v929, %v926
  %v932 = vmul.f32 %v924, %v930
  %v933 = vmul.f32 %v927, %v931
  %v934 = vpack.c.bf16 %v933, %v932
  %v936 = vunpack.c.l.b16 %v934
  %v937 = vunpack.c.h.b16 %v934
  %v938 = vpack.c.b16 %v936, %v936
  %v939 = vpack.c.b16 %v937, %v937
  %s942 = scalar_lea.vmem %s2, 24
  %943 = vst [vmem:[%s942] sm:$0xf] %v938
  %944 = vst [vmem:[%s942 + $0x4] sm:$0xf] %v939
  %s945 = smul.u32 8, 3
  %s946 = smul.addr %s945, 8
  %s947 = scalar_lea.vmem [#allocation4], %s946
  %v948 = vld [vmem:[%s947] sm:$0xff]
  %v949 = vld [vmem:[%s947 + $0x8] sm:$0xff]
  %v950 = vld [vmem:[%s947 + $0x10] sm:$0xff]
  %v951 = vld [vmem:[%s947 + $0x18] sm:$0xff]
  %v952 = vld [vmem:[%s947 + $0x20] sm:$0xff]
  %v953 = vld [vmem:[%s947 + $0x28] sm:$0xff]
  %v954 = vmul.f32 %v948, %v930
  %v955 = vmul.f32 %v951, %v931
  %v956 = vadd.f32 %v954, %v949
  %v957 = vadd.f32 %v955, %v952
  %v958 = vmul.f32 %v950, %v956
  %v959 = vmul.f32 %v953, %v957
  %v960 = vpack.c.bf16 %v959, %v958
  %v962 = vunpack.c.l.b16 %v960
  %v963 = vunpack.c.h.b16 %v960
  %v964 = vpack.c.b16 %v962, %v962
  %v965 = vpack.c.b16 %v963, %v963
  %s968 = scalar_lea.vmem %s2, 32
  %969 = vst [vmem:[%s968] sm:$0xf] %v964
  %970 = vst [vmem:[%s968 + $0x4] sm:$0xf] %v965
  %s971 = smul.u32 10, 3
  %s972 = smul.addr %s971, 8
  %s973 = scalar_lea.vmem [#allocation4], %s972
  %v974 = vld [vmem:[%s973] sm:$0xff]
  %v975 = vld [vmem:[%s973 + $0x8] sm:$0xff]
  %v976 = vld [vmem:[%s973 + $0x10] sm:$0xff]
  %v977 = vld [vmem:[%s973 + $0x18] sm:$0xff]
  %v978 = vld [vmem:[%s973 + $0x20] sm:$0xff]
  %v979 = vld [vmem:[%s973 + $0x28] sm:$0xff]
  %v980 = vmul.f32 %v974, %v956
  %v981 = vmul.f32 %v977, %v957
  %v982 = vadd.f32 %v980, %v975
  %v983 = vadd.f32 %v981, %v978
  %v984 = vmul.f32 %v976, %v982
  %v985 = vmul.f32 %v979, %v983
  %v986 = vpack.c.bf16 %v985, %v984
  %v988 = vunpack.c.l.b16 %v986
  %v989 = vunpack.c.h.b16 %v986
  %v990 = vpack.c.b16 %v988, %v988
  %v991 = vpack.c.b16 %v989, %v989
  %s994 = scalar_lea.vmem %s2, 40
  %995 = vst [vmem:[%s994] sm:$0xf] %v990
  %996 = vst [vmem:[%s994 + $0x4] sm:$0xf] %v991
  %s997 = smul.u32 12, 3
  %s998 = smul.addr %s997, 8
  %s999 = scalar_lea.vmem [#allocation4], %s998
  %v1000 = vld [vmem:[%s999] sm:$0xff]
  %v1001 = vld [vmem:[%s999 + $0x8] sm:$0xff]
  %v1002 = vld [vmem:[%s999 + $0x10] sm:$0xff]
  %v1003 = vld [vmem:[%s999 + $0x18] sm:$0xff]
  %v1004 = vld [vmem:[%s999 + $0x20] sm:$0xff]
  %v1005 = vld [vmem:[%s999 + $0x28] sm:$0xff]
  %v1006 = vmul.f32 %v1000, %v982
  %v1007 = vmul.f32 %v1003, %v983
  %v1008 = vadd.f32 %v1006, %v1001
  %v1009 = vadd.f32 %v1007, %v1004
  %v1010 = vmul.f32 %v1002, %v1008
  %v1011 = vmul.f32 %v1005, %v1009
  %v1012 = vpack.c.bf16 %v1011, %v1010
  %v1014 = vunpack.c.l.b16 %v1012
  %v1015 = vunpack.c.h.b16 %v1012
  %v1016 = vpack.c.b16 %v1014, %v1014
  %v1017 = vpack.c.b16 %v1015, %v1015
  %s1020 = scalar_lea.vmem %s2, 48
  %1021 = vst [vmem:[%s1020] sm:$0xf] %v1016
  %1022 = vst [vmem:[%s1020 + $0x4] sm:$0xf] %v1017
  %s1023 = smul.u32 14, 3
  %s1024 = smul.addr %s1023, 8
  %s1025 = scalar_lea.vmem [#allocation4], %s1024
  %v1026 = vld [vmem:[%s1025] sm:$0xff]
  %v1027 = vld [vmem:[%s1025 + $0x8] sm:$0xff]
  %v1028 = vld [vmem:[%s1025 + $0x10] sm:$0xff]
  %v1029 = vld [vmem:[%s1025 + $0x18] sm:$0xff]
  %v1030 = vld [vmem:[%s1025 + $0x20] sm:$0xff]
  %v1031 = vld [vmem:[%s1025 + $0x28] sm:$0xff]
  %v1032 = vmul.f32 %v1026, %v1008
  %v1033 = vmul.f32 %v1029, %v1009
  %v1034 = vadd.f32 %v1032, %v1027
  %v1035 = vadd.f32 %v1033, %v1030
  %v1036 = vmul.f32 %v1028, %v1034
  %v1037 = vmul.f32 %v1031, %v1035
  %v1038 = vpack.c.bf16 %v1037, %v1036
  %v1040 = vunpack.c.l.b16 %v1038
  %v1041 = vunpack.c.h.b16 %v1038
  %v1042 = vpack.c.b16 %v1040, %v1040
  %v1043 = vpack.c.b16 %v1041, %v1041
  %s1046 = scalar_lea.vmem %s2, 56
  %1047 = vst [vmem:[%s1046] sm:$0xf] %v1042
  %1048 = vst [vmem:[%s1046 + $0x4] sm:$0xf] %v1043
  %1049 = vst [vmem:[#allocation2] sm:$0xff] %v1034
  %1050 = vst [vmem:[#allocation2 + $0x8] sm:$0xff] %v1035
  // Predicated region
  $region14: #{qrnn_forward.2} parent=0 // pred_check
    _
  $region15: #{qrnn_forward.2} parent=0 // pred_check_branch
    %1052 = sbr.rel (0) target = $region17
  $region16: #{qrnn_forward.2} parent=0 // pred_region
    _
  $region17: #{qrnn_forward.2} parent=0 // pred_fallthru
    _
  // Predicated region
  $region18: #{qrnn_forward.2} parent=0 // pred_check
    _
  $region19: #{qrnn_forward.2} parent=0 // pred_check_branch
    %1054 = sbr.rel (0) target = $region21
  $region20: #{qrnn_forward.2} parent=0 // pred_region
    _
  $region21: #{qrnn_forward.2} parent=0 // pred_fallthru
    _

// kernel: qrnn_forward.3
$region0: #{qrnn_forward.3}
  #allocation0 [shape = 'u32[]', space=smem, size = 0x4, offset = 0x4, fixed_abs, tag = 'smem constant byte address 0x4 - core index']
  #allocation1 [shape = 'u32[144,128]{1,0:T(1,128)}', space=vmem, size = 0x12000, scoped, tag = 'internal scratch']
  #allocation2 [shape = 'f32[16,128]{1,0:T(8,128)}', space=vmem, size = 0x2000, scoped, tag = 'scratch operand']
  #allocation3 [shape = 'f32[16,384]{1,0:T(8,128)}', space=vmem, size = 0x6000, scoped, tag = 'scratch operand']
  #allocation4 [shape = 'f32[128,384]{1,0:T(8,128)}', space=vmem, size = 0x30000, scoped, tag = 'scratch operand']
  #allocation5 [shape = 'f32[16,128]{1,0:T(8,128)}', space=vmem, size = 0x2000, scoped, tag = 'scratch operand']
  %s0 = inlined_call_operand.vmem [shape: bf16[1,128,128], index: 0, kind: input, shape index: {}]
  %s1 = inlined_call_operand.vmem [shape: bf16[128,768], index: 1, kind: input, shape index: {}]
  %s2 = inlined_call_operand.vmem [shape: f32[128,128], index: 2, kind: input, shape index: {}]
  %s3 = inlined_call_operand.vmem [shape: f32[1,128], index: 3, kind: input, shape index: {}]
  %s4 = inlined_call_operand.vmem [shape: f32[128,4], index: 4, kind: input, shape index: {}]
  %s5 = inlined_call_operand.vmem [shape: f32[1,4], index: 5, kind: input, shape index: {}]
  %s6 = inlined_call_operand.vmem [shape: f32[1,16,4], index: 6, kind: output, shape index: {}]
  %s7 = sld [smem:[#allocation0]]
  $region74: #{qrnn_forward.3} parent=0
    _
  %s9 = ssub.s32 1, %s7
  %s10 = scalar_select 0, %s9, %s7
  // Predicated region
  $region2: #{qrnn_forward.3} parent=0 // pred_check
    _
  $region3: #{qrnn_forward.3} parent=0 // pred_check_branch
    %12 = sbr.rel (0) target = $region5
  $region4: #{qrnn_forward.3} parent=0 // pred_region
    _
  $region5: #{qrnn_forward.3} parent=0 // pred_fallthru
    _
  // Predicated region
  $region6: #{qrnn_forward.3} parent=0 // pred_check
    _
  $region7: #{qrnn_forward.3} parent=0 // pred_check_branch
    %14 = sbr.rel (0) target = $region9
  $region8: #{qrnn_forward.3} parent=0 // pred_region
    _
  $region9: #{qrnn_forward.3} parent=0 // pred_fallthru
    _
  // Predicated region
  $region10: #{qrnn_forward.3} parent=0 // pred_check
    _
  $region11: #{qrnn_forward.3} parent=0 // pred_check_branch
    %16 = sbr.rel (0) target = $region13
  $region12: #{qrnn_forward.3} parent=0 // pred_region
    _
  $region13: #{qrnn_forward.3} parent=0 // pred_fallthru
    _
  // Predicated region
  $region14: #{qrnn_forward.3} parent=0 // pred_check
    _
  $region15: #{qrnn_forward.3} parent=0 // pred_check_branch
    %18 = sbr.rel (0) target = $region17
  $region16: #{qrnn_forward.3} parent=0 // pred_region
    _
  $region17: #{qrnn_forward.3} parent=0 // pred_fallthru
    _
  // Predicated region
  $region18: #{qrnn_forward.3} parent=0 // pred_check
    _
  $region19: #{qrnn_forward.3} parent=0 // pred_check_branch
    %20 = sbr.rel (0) target = $region21
  $region20: #{qrnn_forward.3} parent=0 // pred_region
    _
  $region21: #{qrnn_forward.3} parent=0 // pred_fallthru
    _
  // Predicated region
  $region22: #{qrnn_forward.3} parent=0 // pred_check
    _
  $region23: #{qrnn_forward.3} parent=0 // pred_check_branch
    %22 = sbr.rel (0) target = $region25
  $region24: #{qrnn_forward.3} parent=0 // pred_region
    _
  $region25: #{qrnn_forward.3} parent=0 // pred_fallthru
    _
  %p24 = scmp.eq.s32.totalorder 0, 0
  // Predicated region
  $region26: #{qrnn_forward.3} parent=0 // pred_check
    %p25 = pneg %p24
  $region27: #{qrnn_forward.3} parent=0 // pred_check_branch
    %27 = sbr.rel (%p25) target = $region29
  $region28: #{qrnn_forward.3} parent=0 // pred_region
    %28 = vst [vmem:[#allocation2] sm:$0xff] 0.0
    %29 = vst [vmem:[#allocation2 + $0x8] sm:$0xff] 0.0
    %30 = vst [vmem:[#allocation3] sm:$0xff] 0.0
    %31 = vst [vmem:[#allocation3 + $0x8] sm:$0xff] 0.0
    %32 = vst [vmem:[#allocation3 + $0x10] sm:$0xff] 0.0
    %33 = vst [vmem:[#allocation3 + $0x18] sm:$0xff] 0.0
    %34 = vst [vmem:[#allocation3 + $0x20] sm:$0xff] 0.0
    %35 = vst [vmem:[#allocation3 + $0x28] sm:$0xff] 0.0
  $region29: #{qrnn_forward.3} parent=0 // pred_fallthru
    _
  %v36 = vld [vmem:[%s0] sm:$0xf]
  %v37 = vld [vmem:[%s0 + $0x4] sm:$0xf]
  %v38 = vld [vmem:[%s0 + $0x8] sm:$0xf]
  %v39 = vld [vmem:[%s0 + $0xc] sm:$0xf]
  %v40 = vld [vmem:[%s0 + $0x10] sm:$0xf]
  %v41 = vld [vmem:[%s0 + $0x14] sm:$0xf]
  %v42 = vld [vmem:[%s0 + $0x18] sm:$0xf]
  %v43 = vld [vmem:[%s0 + $0x1c] sm:$0xf]
  %v44 = vld [vmem:[%s0 + $0x20] sm:$0xf]
  %v45 = vld [vmem:[%s0 + $0x24] sm:$0xf]
  %v46 = vld [vmem:[%s0 + $0x28] sm:$0xf]
  %v47 = vld [vmem:[%s0 + $0x2c] sm:$0xf]
  %v48 = vld [vmem:[%s0 + $0x30] sm:$0xf]
  %v49 = vld [vmem:[%s0 + $0x34] sm:$0xf]
  %v50 = vld [vmem:[%s0 + $0x38] sm:$0xf]
  %v51 = vld [vmem:[%s0 + $0x3c] sm:$0xf]
  %v52 = vld [vmem:[%s1] sm:$0xff]
  %v53 = vld [vmem:[%s1 + $0x8] sm:$0xff]
  %v54 = vld [vmem:[%s1 + $0x10] sm:$0xff]
  %v55 = vld [vmem:[%s1 + $0x18] sm:$0xff]
  %v56 = vld [vmem:[%s1 + $0x20] sm:$0xff]
  %v57 = vld [vmem:[%s1 + $0x28] sm:$0xff]
  %v58 = vld [vmem:[%s1 + $0x30] sm:$0xff]
  %v59 = vld [vmem:[%s1 + $0x38] sm:$0xff]
  %v60 = vld [vmem:[%s1 + $0x40] sm:$0xff]
  %v61 = vld [vmem:[%s1 + $0x48] sm:$0xff]
  %v62 = vld [vmem:[%s1 + $0x50] sm:$0xff]
  %v63 = vld [vmem:[%s1 + $0x58] sm:$0xff]
  %v64 = vld [vmem:[%s1 + $0x60] sm:$0xff]
  %v65 = vld [vmem:[%s1 + $0x68] sm:$0xff]
  %v66 = vld [vmem:[%s1 + $0x70] sm:$0xff]
  %v67 = vld [vmem:[%s1 + $0x78] sm:$0xff]
  %v68 = vld [vmem:[%s1 + $0x80] sm:$0xff]
  %v69 = vld [vmem:[%s1 + $0x88] sm:$0xff]
  %v70 = vld [vmem:[%s1 + $0x90] sm:$0xff]
  %v71 = vld [vmem:[%s1 + $0x98] sm:$0xff]
  %v72 = vld [vmem:[%s1 + $0xa0] sm:$0xff]
  %v73 = vld [vmem:[%s1 + $0xa8] sm:$0xff]
  %v74 = vld [vmem:[%s1 + $0xb0] sm:$0xff]
  %v75 = vld [vmem:[%s1 + $0xb8] sm:$0xff]
  %v76 = vld [vmem:[%s1 + $0xc0] sm:$0xff]
  %v77 = vld [vmem:[%s1 + $0xc8] sm:$0xff]
  %v78 = vld [vmem:[%s1 + $0xd0] sm:$0xff]
  %v79 = vld [vmem:[%s1 + $0xd8] sm:$0xff]
  %v80 = vld [vmem:[%s1 + $0xe0] sm:$0xff]
  %v81 = vld [vmem:[%s1 + $0xe8] sm:$0xff]
  %v82 = vld [vmem:[%s1 + $0xf0] sm:$0xff]
  %v83 = vld [vmem:[%s1 + $0xf8] sm:$0xff]
  %v84 = vld [vmem:[%s1 + $0x100] sm:$0xff]
  %v85 = vld [vmem:[%s1 + $0x108] sm:$0xff]
  %v86 = vld [vmem:[%s1 + $0x110] sm:$0xff]
  %v87 = vld [vmem:[%s1 + $0x118] sm:$0xff]
  %v88 = vld [vmem:[%s1 + $0x120] sm:$0xff]
  %v89 = vld [vmem:[%s1 + $0x128] sm:$0xff]
  %v90 = vld [vmem:[%s1 + $0x130] sm:$0xff]
  %v91 = vld [vmem:[%s1 + $0x138] sm:$0xff]
  %v92 = vld [vmem:[%s1 + $0x140] sm:$0xff]
  %v93 = vld [vmem:[%s1 + $0x148] sm:$0xff]
  %v94 = vld [vmem:[%s1 + $0x150] sm:$0xff]
  %v95 = vld [vmem:[%s1 + $0x158] sm:$0xff]
  %v96 = vld [vmem:[%s1 + $0x160] sm:$0xff]
  %v97 = vld [vmem:[%s1 + $0x168] sm:$0xff]
  %v98 = vld [vmem:[%s1 + $0x170] sm:$0xff]
  %v99 = vld [vmem:[%s1 + $0x178] sm:$0xff]
  %v116 = vunpack.c.l.b16 %v36
  %v117 = vunpack.c.l.b16 %v37
  %v118 = vunpack.c.l.b16 %v38
  %v119 = vunpack.c.l.b16 %v39
  %v120 = vunpack.c.l.b16 %v40
  %v121 = vunpack.c.l.b16 %v41
  %v122 = vunpack.c.l.b16 %v42
  %v123 = vunpack.c.l.b16 %v43
  %v124 = vunpack.c.l.b16 %v44
  %v125 = vunpack.c.l.b16 %v45
  %v126 = vunpack.c.l.b16 %v46
  %v127 = vunpack.c.l.b16 %v47
  %v128 = vunpack.c.l.b16 %v48
  %v129 = vunpack.c.l.b16 %v49
  %v130 = vunpack.c.l.b16 %v50
  %v131 = vunpack.c.l.b16 %v51
  %v132 = vpack.c.b16 %v117, %v116
  %v133 = vpack.c.b16 %v119, %v118
  %v134 = vpack.c.b16 %v121, %v120
  %v135 = vpack.c.b16 %v123, %v122
  %v136 = vpack.c.b16 %v125, %v124
  %v137 = vpack.c.b16 %v127, %v126
  %v138 = vpack.c.b16 %v129, %v128
  %v139 = vpack.c.b16 %v131, %v130
  %v196 = vunpack.c.l.b16 %v52
  %v197 = vunpack.c.h.b16 %v52
  %v198 = vunpack.c.l.b16 %v53
  %v199 = vunpack.c.h.b16 %v53
  %v200 = vunpack.c.l.b16 %v54
  %v201 = vunpack.c.h.b16 %v54
  %v202 = vunpack.c.l.b16 %v55
  %v203 = vunpack.c.h.b16 %v55
  %v204 = vunpack.c.l.b16 %v56
  %v205 = vunpack.c.h.b16 %v56
  %v206 = vunpack.c.l.b16 %v57
  %v207 = vunpack.c.h.b16 %v57
  %v208 = vunpack.c.l.b16 %v58
  %v209 = vunpack.c.h.b16 %v58
  %v210 = vunpack.c.l.b16 %v59
  %v211 = vunpack.c.h.b16 %v59
  %v212 = vunpack.c.l.b16 %v60
  %v213 = vunpack.c.h.b16 %v60
  %v214 = vunpack.c.l.b16 %v61
  %v215 = vunpack.c.h.b16 %v61
  %v216 = vunpack.c.l.b16 %v62
  %v217 = vunpack.c.h.b16 %v62
  %v218 = vunpack.c.l.b16 %v63
  %v219 = vunpack.c.h.b16 %v63
  %v220 = vunpack.c.l.b16 %v64
  %v221 = vunpack.c.h.b16 %v64
  %v222 = vunpack.c.l.b16 %v65
  %v223 = vunpack.c.h.b16 %v65
  %v224 = vunpack.c.l.b16 %v66
  %v225 = vunpack.c.h.b16 %v66
  %v226 = vunpack.c.l.b16 %v67
  %v227 = vunpack.c.h.b16 %v67
  %v228 = vunpack.c.l.b16 %v68
  %v229 = vunpack.c.h.b16 %v68
  %v230 = vunpack.c.l.b16 %v69
  %v231 = vunpack.c.h.b16 %v69
  %v232 = vunpack.c.l.b16 %v70
  %v233 = vunpack.c.h.b16 %v70
  %v234 = vunpack.c.l.b16 %v71
  %v235 = vunpack.c.h.b16 %v71
  %v236 = vunpack.c.l.b16 %v72
  %v237 = vunpack.c.h.b16 %v72
  %v238 = vunpack.c.l.b16 %v73
  %v239 = vunpack.c.h.b16 %v73
  %v240 = vunpack.c.l.b16 %v74
  %v241 = vunpack.c.h.b16 %v74
  %v242 = vunpack.c.l.b16 %v75
  %v243 = vunpack.c.h.b16 %v75
  %v244 = vunpack.c.l.b16 %v76
  %v245 = vunpack.c.h.b16 %v76
  %v246 = vunpack.c.l.b16 %v77
  %v247 = vunpack.c.h.b16 %v77
  %v248 = vunpack.c.l.b16 %v78
  %v249 = vunpack.c.h.b16 %v78
  %v250 = vunpack.c.l.b16 %v79
  %v251 = vunpack.c.h.b16 %v79
  %v252 = vunpack.c.l.b16 %v80
  %v253 = vunpack.c.h.b16 %v80
  %v254 = vunpack.c.l.b16 %v81
  %v255 = vunpack.c.h.b16 %v81
  %v256 = vunpack.c.l.b16 %v82
  %v257 = vunpack.c.h.b16 %v82
  %v258 = vunpack.c.l.b16 %v83
  %v259 = vunpack.c.h.b16 %v83
  %v260 = vunpack.c.l.b16 %v84
  %v261 = vunpack.c.h.b16 %v84
  %v262 = vunpack.c.l.b16 %v85
  %v263 = vunpack.c.h.b16 %v85
  %v264 = vunpack.c.l.b16 %v86
  %v265 = vunpack.c.h.b16 %v86
  %v266 = vunpack.c.l.b16 %v87
  %v267 = vunpack.c.h.b16 %v87
  %v268 = vunpack.c.l.b16 %v88
  %v269 = vunpack.c.h.b16 %v88
  %v270 = vunpack.c.l.b16 %v89
  %v271 = vunpack.c.h.b16 %v89
  %v272 = vunpack.c.l.b16 %v90
  %v273 = vunpack.c.h.b16 %v90
  %v274 = vunpack.c.l.b16 %v91
  %v275 = vunpack.c.h.b16 %v91
  %v276 = vunpack.c.l.b16 %v92
  %v277 = vunpack.c.h.b16 %v92
  %v278 = vunpack.c.l.b16 %v93
  %v279 = vunpack.c.h.b16 %v93
  %v280 = vunpack.c.l.b16 %v94
  %v281 = vunpack.c.h.b16 %v94
  %v282 = vunpack.c.l.b16 %v95
  %v283 = vunpack.c.h.b16 %v95
  %v284 = vunpack.c.l.b16 %v96
  %v285 = vunpack.c.h.b16 %v96
  %v286 = vunpack.c.l.b16 %v97
  %v287 = vunpack.c.h.b16 %v97
  %v288 = vunpack.c.l.b16 %v98
  %v289 = vunpack.c.h.b16 %v98
  %v290 = vunpack.c.l.b16 %v99
  %v291 = vunpack.c.h.b16 %v99
  %v292 = vpack.c.b16 %v202, %v196
  %v293 = vpack.c.b16 %v203, %v197
  %v294 = vpack.c.b16 %v204, %v198
  %v295 = vpack.c.b16 %v205, %v199
  %v296 = vpack.c.b16 %v206, %v200
  %v297 = vpack.c.b16 %v207, %v201
  %v298 = vpack.c.b16 %v214, %v208
  %v299 = vpack.c.b16 %v215, %v209
  %v300 = vpack.c.b16 %v216, %v210
  %v301 = vpack.c.b16 %v217, %v211
  %v302 = vpack.c.b16 %v218, %v212
  %v303 = vpack.c.b16 %v219, %v213
  %v304 = vpack.c.b16 %v226, %v220
  %v305 = vpack.c.b16 %v227, %v221
  %v306 = vpack.c.b16 %v228, %v222
  %v307 = vpack.c.b16 %v229, %v223
  %v308 = vpack.c.b16 %v230, %v224
  %v309 = vpack.c.b16 %v231, %v225
  %v310 = vpack.c.b16 %v238, %v232
  %v311 = vpack.c.b16 %v239, %v233
  %v312 = vpack.c.b16 %v240, %v234
  %v313 = vpack.c.b16 %v241, %v235
  %v314 = vpack.c.b16 %v242, %v236
  %v315 = vpack.c.b16 %v243, %v237
  %v316 = vpack.c.b16 %v250, %v244
  %v317 = vpack.c.b16 %v251, %v245
  %v318 = vpack.c.b16 %v252, %v246
  %v319 = vpack.c.b16 %v253, %v247
  %v320 = vpack.c.b16 %v254, %v248
  %v321 = vpack.c.b16 %v255, %v249
  %v322 = vpack.c.b16 %v262, %v256
  %v323 = vpack.c.b16 %v263, %v257
  %v324 = vpack.c.b16 %v264, %v258
  %v325 = vpack.c.b16 %v265, %v259
  %v326 = vpack.c.b16 %v266, %v260
  %v327 = vpack.c.b16 %v267, %v261
  %v328 = vpack.c.b16 %v274, %v268
  %v329 = vpack.c.b16 %v275, %v269
  %v330 = vpack.c.b16 %v276, %v270
  %v331 = vpack.c.b16 %v277, %v271
  %v332 = vpack.c.b16 %v278, %v272
  %v333 = vpack.c.b16 %v279, %v273
  %v334 = vpack.c.b16 %v286, %v280
  %v335 = vpack.c.b16 %v287, %v281
  %v336 = vpack.c.b16 %v288, %v282
  %v337 = vpack.c.b16 %v289, %v283
  %v338 = vpack.c.b16 %v290, %v284
  %v339 = vpack.c.b16 %v291, %v285
  %388 = vmatprep.subr.bf16.mxu0 %v293
  %389 = vmatpush1.bf16.msra.mxu0 %v292
  %390 = vmatprep.subr.bf16.mxu0 %v299
  %391 = vmatpush1.bf16.msra.mxu0 %v298
  %392 = vmatprep.subr.bf16.mxu0 %v305
  %393 = vmatpush1.bf16.msra.mxu0 %v304
  %394 = vmatprep.subr.bf16.mxu0 %v311
  %395 = vmatpush1.bf16.msra.mxu0 %v310
  %396 = vmatprep.subr.bf16.mxu0 %v317
  %397 = vmatpush1.bf16.msra.mxu0 %v316
  %398 = vmatprep.subr.bf16.mxu0 %v323
  %399 = vmatpush1.bf16.msra.mxu0 %v322
  %400 = vmatprep.subr.bf16.mxu0 %v329
  %401 = vmatpush1.bf16.msra.mxu0 %v328
  %402 = vmatprep.subr.bf16.mxu0 %v335
  %403 = vmatpush1.bf16.msra.mxu0 %v334
  %404 = vmatprep.subr.bf16.mxu0 0
  %405 = vmatpush1.bf16.msra.mxu0 0
  %406 = vmatprep.subr.bf16.mxu0 0
  %407 = vmatpush1.bf16.msra.mxu0 0
  %408 = vmatprep.subr.bf16.mxu0 0
  %409 = vmatpush1.bf16.msra.mxu0 0
  %410 = vmatprep.subr.bf16.mxu0 0
  %411 = vmatpush1.bf16.msra.mxu0 0
  %412 = vmatprep.subr.bf16.mxu0 0
  %413 = vmatpush1.bf16.msra.mxu0 0
  %414 = vmatprep.subr.bf16.mxu0 0
  %415 = vmatpush1.bf16.msra.mxu0 0
  %416 = vmatprep.subr.bf16.mxu0 0
  %417 = vmatpush1.bf16.msra.mxu0 0
  %418 = vmatprep.subr.bf16.mxu0 0
  %419 = vmatpush1.bf16.msra.mxu0 0
  %420 = vmatprep.mubr.bf16.mxu0 0
  %421 = vmatmul.mubr.bf16.gmra.mrb[0].mxu0 %v132
  %v422 = vpop.f32.mrb[0].mxu0
  %v423 = vadd.f32 0.0, %v422
  %v424 = vpop.f32.mrb[0].mxu0
  %v425 = vadd.f32 0.0, %v424
  %v426 = vpop.f32.mrb[0].mxu0
  %v427 = vadd.f32 0.0, %v426
  %v428 = vpop.f32.mrb[0].mxu0
  %v429 = vadd.f32 0.0, %v428
  %430 = vmatprep.mubr.bf16.mxu0 0
  %431 = vmatmul.mubr.bf16.gmra.mrb[0].mxu0 %v133
  %v432 = vpop.f32.mrb[0].mxu0
  %v433 = vadd.f32 0.0, %v432
  %v434 = vpop.f32.mrb[0].mxu0
  %v435 = vadd.f32 0.0, %v434
  %v436 = vpop.f32.mrb[0].mxu0
  %v437 = vadd.f32 0.0, %v436
  %v438 = vpop.f32.mrb[0].mxu0
  %v439 = vadd.f32 0.0, %v438
  %440 = vmatprep.mubr.bf16.mxu0 0
  %441 = vmatmul.mubr.bf16.gmra.mrb[0].mxu0 %v134
  %v442 = vpop.f32.mrb[0].mxu0
  %v443 = vadd.f32 0.0, %v442
  %v444 = vpop.f32.mrb[0].mxu0
  %v445 = vadd.f32 0.0, %v444
  %v446 = vpop.f32.mrb[0].mxu0
  %v447 = vadd.f32 0.0, %v446
  %v448 = vpop.f32.mrb[0].mxu0
  %v449 = vadd.f32 0.0, %v448
  %450 = vmatprep.mubr.bf16.mxu0 0
  %451 = vmatmul.mubr.bf16.gmra.mrb[0].mxu0 %v135
  %v452 = vpop.f32.mrb[0].mxu0
  %v453 = vadd.f32 0.0, %v452
  %v454 = vpop.f32.mrb[0].mxu0
  %v455 = vadd.f32 0.0, %v454
  %v456 = vpop.f32.mrb[0].mxu0
  %v457 = vadd.f32 0.0, %v456
  %v458 = vpop.f32.mrb[0].mxu0
  %v459 = vadd.f32 0.0, %v458
  %460 = vmatprep.mubr.bf16.mxu0 0
  %461 = vmatmul.mubr.bf16.gmra.mrb[0].mxu0 %v136
  %v462 = vpop.f32.mrb[0].mxu0
  %v463 = vadd.f32 0.0, %v462
  %v464 = vpop.f32.mrb[0].mxu0
  %v465 = vadd.f32 0.0, %v464
  %v466 = vpop.f32.mrb[0].mxu0
  %v467 = vadd.f32 0.0, %v466
  %v468 = vpop.f32.mrb[0].mxu0
  %v469 = vadd.f32 0.0, %v468
  %470 = vmatprep.mubr.bf16.mxu0 0
  %471 = vmatmul.mubr.bf16.gmra.mrb[0].mxu0 %v137
  %v472 = vpop.f32.mrb[0].mxu0
  %v473 = vadd.f32 0.0, %v472
  %v474 = vpop.f32.mrb[0].mxu0
  %v475 = vadd.f32 0.0, %v474
  %v476 = vpop.f32.mrb[0].mxu0
  %v477 = vadd.f32 0.0, %v476
  %v478 = vpop.f32.mrb[0].mxu0
  %v479 = vadd.f32 0.0, %v478
  %480 = vmatprep.mubr.bf16.mxu0 0
  %481 = vmatmul.mubr.bf16.gmra.mrb[0].mxu0 %v138
  %v482 = vpop.f32.mrb[0].mxu0
  %v483 = vadd.f32 0.0, %v482
  %v484 = vpop.f32.mrb[0].mxu0
  %v485 = vadd.f32 0.0, %v484
  %v486 = vpop.f32.mrb[0].mxu0
  %v487 = vadd.f32 0.0, %v486
  %v488 = vpop.f32.mrb[0].mxu0
  %v489 = vadd.f32 0.0, %v488
  %490 = vmatprep.mubr.bf16.mxu0 0
  %491 = vmatmul.mubr.bf16.gmra.mrb[0].mxu0 %v139
  %v492 = vpop.f32.mrb[0].mxu0
  %v493 = vadd.f32 0.0, %v492
  %v494 = vpop.f32.mrb[0].mxu0
  %v495 = vadd.f32 0.0, %v494
  %v496 = vpop.f32.mrb[0].mxu0
  %v497 = vadd.f32 0.0, %v496
  %v498 = vpop.f32.mrb[0].mxu0
  %v499 = vadd.f32 0.0, %v498
  %500 = vdwg.mxu0
  %501 = vmatprep.subr.bf16.mxu0 %v295
  %502 = vmatpush1.bf16.msra.mxu0 %v294
  %503 = vmatprep.subr.bf16.mxu0 %v301
  %504 = vmatpush1.bf16.msra.mxu0 %v300
  %505 = vmatprep.subr.bf16.mxu0 %v307
  %506 = vmatpush1.bf16.msra.mxu0 %v306
  %507 = vmatprep.subr.bf16.mxu0 %v313
  %508 = vmatpush1.bf16.msra.mxu0 %v312
  %509 = vmatprep.subr.bf16.mxu0 %v319
  %510 = vmatpush1.bf16.msra.mxu0 %v318
  %511 = vmatprep.subr.bf16.mxu0 %v325
  %512 = vmatpush1.bf16.msra.mxu0 %v324
  %513 = vmatprep.subr.bf16.mxu0 %v331
  %514 = vmatpush1.bf16.msra.mxu0 %v330
  %515 = vmatprep.subr.bf16.mxu0 %v337
  %516 = vmatpush1.bf16.msra.mxu0 %v336
  %517 = vmatprep.subr.bf16.mxu0 0
  %518 = vmatpush1.bf16.msra.mxu0 0
  %519 = vmatprep.subr.bf16.mxu0 0
  %520 = vmatpush1.bf16.msra.mxu0 0
  %521 = vmatprep.subr.bf16.mxu0 0
  %522 = vmatpush1.bf16.msra.mxu0 0
  %523 = vmatprep.subr.bf16.mxu0 0
  %524 = vmatpush1.bf16.msra.mxu0 0
  %525 = vmatprep.subr.bf16.mxu0 0
  %526 = vmatpush1.bf16.msra.mxu0 0
  %527 = vmatprep.subr.bf16.mxu0 0
  %528 = vmatpush1.bf16.msra.mxu0 0
  %529 = vmatprep.subr.bf16.mxu0 0
  %530 = vmatpush1.bf16.msra.mxu0 0
  %531 = vmatprep.subr.bf16.mxu0 0
  %532 = vmatpush1.bf16.msra.mxu0 0
  %533 = vmatprep.mubr.bf16.mxu0 0
  %534 = vmatmul.mubr.bf16.gmra.mrb[0].mxu0 %v132
  %v535 = vpop.f32.mrb[0].mxu0
  %v536 = vadd.f32 0.0, %v535
  %v537 = vpop.f32.mrb[0].mxu0
  %v538 = vadd.f32 0.0, %v537
  %v539 = vpop.f32.mrb[0].mxu0
  %v540 = vadd.f32 0.0, %v539
  %v541 = vpop.f32.mrb[0].mxu0
  %v542 = vadd.f32 0.0, %v541
  %543 = vmatprep.mubr.bf16.mxu0 0
  %544 = vmatmul.mubr.bf16.gmra.mrb[0].mxu0 %v133
  %v545 = vpop.f32.mrb[0].mxu0
  %v546 = vadd.f32 0.0, %v545
  %v547 = vpop.f32.mrb[0].mxu0
  %v548 = vadd.f32 0.0, %v547
  %v549 = vpop.f32.mrb[0].mxu0
  %v550 = vadd.f32 0.0, %v549
  %v551 = vpop.f32.mrb[0].mxu0
  %v552 = vadd.f32 0.0, %v551
  %553 = vmatprep.mubr.bf16.mxu0 0
  %554 = vmatmul.mubr.bf16.gmra.mrb[0].mxu0 %v134
  %v555 = vpop.f32.mrb[0].mxu0
  %v556 = vadd.f32 0.0, %v555
  %v557 = vpop.f32.mrb[0].mxu0
  %v558 = vadd.f32 0.0, %v557
  %v559 = vpop.f32.mrb[0].mxu0
  %v560 = vadd.f32 0.0, %v559
  %v561 = vpop.f32.mrb[0].mxu0
  %v562 = vadd.f32 0.0, %v561
  %563 = vmatprep.mubr.bf16.mxu0 0
  %564 = vmatmul.mubr.bf16.gmra.mrb[0].mxu0 %v135
  %v565 = vpop.f32.mrb[0].mxu0
  %v566 = vadd.f32 0.0, %v565
  %v567 = vpop.f32.mrb[0].mxu0
  %v568 = vadd.f32 0.0, %v567
  %v569 = vpop.f32.mrb[0].mxu0
  %v570 = vadd.f32 0.0, %v569
  %v571 = vpop.f32.mrb[0].mxu0
  %v572 = vadd.f32 0.0, %v571
  %573 = vmatprep.mubr.bf16.mxu0 0
  %574 = vmatmul.mubr.bf16.gmra.mrb[0].mxu0 %v136
  %v575 = vpop.f32.mrb[0].mxu0
  %v576 = vadd.f32 0.0, %v575
  %v577 = vpop.f32.mrb[0].mxu0
  %v578 = vadd.f32 0.0, %v577
  %v579 = vpop.f32.mrb[0].mxu0
  %v580 = vadd.f32 0.0, %v579
  %v581 = vpop.f32.mrb[0].mxu0
  %v582 = vadd.f32 0.0, %v581
  %583 = vmatprep.mubr.bf16.mxu0 0
  %584 = vmatmul.mubr.bf16.gmra.mrb[0].mxu0 %v137
  %v585 = vpop.f32.mrb[0].mxu0
  %v586 = vadd.f32 0.0, %v585
  %v587 = vpop.f32.mrb[0].mxu0
  %v588 = vadd.f32 0.0, %v587
  %v589 = vpop.f32.mrb[0].mxu0
  %v590 = vadd.f32 0.0, %v589
  %v591 = vpop.f32.mrb[0].mxu0
  %v592 = vadd.f32 0.0, %v591
  %593 = vmatprep.mubr.bf16.mxu0 0
  %594 = vmatmul.mubr.bf16.gmra.mrb[0].mxu0 %v138
  %v595 = vpop.f32.mrb[0].mxu0
  %v596 = vadd.f32 0.0, %v595
  %v597 = vpop.f32.mrb[0].mxu0
  %v598 = vadd.f32 0.0, %v597
  %v599 = vpop.f32.mrb[0].mxu0
  %v600 = vadd.f32 0.0, %v599
  %v601 = vpop.f32.mrb[0].mxu0
  %v602 = vadd.f32 0.0, %v601
  %603 = vmatprep.mubr.bf16.mxu0 0
  %604 = vmatmul.mubr.bf16.gmra.mrb[0].mxu0 %v139
  %v605 = vpop.f32.mrb[0].mxu0
  %v606 = vadd.f32 0.0, %v605
  %v607 = vpop.f32.mrb[0].mxu0
  %v608 = vadd.f32 0.0, %v607
  %v609 = vpop.f32.mrb[0].mxu0
  %v610 = vadd.f32 0.0, %v609
  %v611 = vpop.f32.mrb[0].mxu0
  %v612 = vadd.f32 0.0, %v611
  %613 = vdwg.mxu0
  %614 = vmatprep.subr.bf16.mxu0 %v297
  %615 = vmatpush1.bf16.msra.mxu0 %v296
  %616 = vmatprep.subr.bf16.mxu0 %v303
  %617 = vmatpush1.bf16.msra.mxu0 %v302
  %618 = vmatprep.subr.bf16.mxu0 %v309
  %619 = vmatpush1.bf16.msra.mxu0 %v308
  %620 = vmatprep.subr.bf16.mxu0 %v315
  %621 = vmatpush1.bf16.msra.mxu0 %v314
  %622 = vmatprep.subr.bf16.mxu0 %v321
  %623 = vmatpush1.bf16.msra.mxu0 %v320
  %624 = vmatprep.subr.bf16.mxu0 %v327
  %625 = vmatpush1.bf16.msra.mxu0 %v326
  %626 = vmatprep.subr.bf16.mxu0 %v333
  %627 = vmatpush1.bf16.msra.mxu0 %v332
  %628 = vmatprep.subr.bf16.mxu0 %v339
  %629 = vmatpush1.bf16.msra.mxu0 %v338
  %630 = vmatprep.subr.bf16.mxu0 0
  %631 = vmatpush1.bf16.msra.mxu0 0
  %632 = vmatprep.subr.bf16.mxu0 0
  %633 = vmatpush1.bf16.msra.mxu0 0
  %634 = vmatprep.subr.bf16.mxu0 0
  %635 = vmatpush1.bf16.msra.mxu0 0
  %636 = vmatprep.subr.bf16.mxu0 0
  %637 = vmatpush1.bf16.msra.mxu0 0
  %638 = vmatprep.subr.bf16.mxu0 0
  %639 = vmatpush1.bf16.msra.mxu0 0
  %640 = vmatprep.subr.bf16.mxu0 0
  %641 = vmatpush1.bf16.msra.mxu0 0
  %642 = vmatprep.subr.bf16.mxu0 0
  %643 = vmatpush1.bf16.msra.mxu0 0
  %644 = vmatprep.subr.bf16.mxu0 0
  %645 = vmatpush1.bf16.msra.mxu0 0
  %646 = vmatprep.mubr.bf16.mxu0 0
  %647 = vmatmul.mubr.bf16.gmra.mrb[0].mxu0 %v132
  %v648 = vpop.f32.mrb[0].mxu0
  %v649 = vadd.f32 0.0, %v648
  %v650 = vpop.f32.mrb[0].mxu0
  %v651 = vadd.f32 0.0, %v650
  %v652 = vpop.f32.mrb[0].mxu0
  %v653 = vadd.f32 0.0, %v652
  %v654 = vpop.f32.mrb[0].mxu0
  %v655 = vadd.f32 0.0, %v654
  %656 = vmatprep.mubr.bf16.mxu0 0
  %657 = vmatmul.mubr.bf16.gmra.mrb[0].mxu0 %v133
  %v658 = vpop.f32.mrb[0].mxu0
  %v659 = vadd.f32 0.0, %v658
  %v660 = vpop.f32.mrb[0].mxu0
  %v661 = vadd.f32 0.0, %v660
  %v662 = vpop.f32.mrb[0].mxu0
  %v663 = vadd.f32 0.0, %v662
  %v664 = vpop.f32.mrb[0].mxu0
  %v665 = vadd.f32 0.0, %v664
  %666 = vmatprep.mubr.bf16.mxu0 0
  %667 = vmatmul.mubr.bf16.gmra.mrb[0].mxu0 %v134
  %v668 = vpop.f32.mrb[0].mxu0
  %v669 = vadd.f32 0.0, %v668
  %v670 = vpop.f32.mrb[0].mxu0
  %v671 = vadd.f32 0.0, %v670
  %v672 = vpop.f32.mrb[0].mxu0
  %v673 = vadd.f32 0.0, %v672
  %v674 = vpop.f32.mrb[0].mxu0
  %v675 = vadd.f32 0.0, %v674
  %676 = vmatprep.mubr.bf16.mxu0 0
  %677 = vmatmul.mubr.bf16.gmra.mrb[0].mxu0 %v135
  %v678 = vpop.f32.mrb[0].mxu0
  %v679 = vadd.f32 0.0, %v678
  %v680 = vpop.f32.mrb[0].mxu0
  %v681 = vadd.f32 0.0, %v680
  %v682 = vpop.f32.mrb[0].mxu0
  %v683 = vadd.f32 0.0, %v682
  %v684 = vpop.f32.mrb[0].mxu0
  %v685 = vadd.f32 0.0, %v684
  %686 = vmatprep.mubr.bf16.mxu0 0
  %687 = vmatmul.mubr.bf16.gmra.mrb[0].mxu0 %v136
  %v688 = vpop.f32.mrb[0].mxu0
  %v689 = vadd.f32 0.0, %v688
  %v690 = vpop.f32.mrb[0].mxu0
  %v691 = vadd.f32 0.0, %v690
  %v692 = vpop.f32.mrb[0].mxu0
  %v693 = vadd.f32 0.0, %v692
  %v694 = vpop.f32.mrb[0].mxu0
  %v695 = vadd.f32 0.0, %v694
  %696 = vmatprep.mubr.bf16.mxu0 0
  %697 = vmatmul.mubr.bf16.gmra.mrb[0].mxu0 %v137
  %v698 = vpop.f32.mrb[0].mxu0
  %v699 = vadd.f32 0.0, %v698
  %v700 = vpop.f32.mrb[0].mxu0
  %v701 = vadd.f32 0.0, %v700
  %v702 = vpop.f32.mrb[0].mxu0
  %v703 = vadd.f32 0.0, %v702
  %v704 = vpop.f32.mrb[0].mxu0
  %v705 = vadd.f32 0.0, %v704
  %706 = vmatprep.mubr.bf16.mxu0 0
  %707 = vmatmul.mubr.bf16.gmra.mrb[0].mxu0 %v138
  %v708 = vpop.f32.mrb[0].mxu0
  %v709 = vadd.f32 0.0, %v708
  %v710 = vpop.f32.mrb[0].mxu0
  %v711 = vadd.f32 0.0, %v710
  %v712 = vpop.f32.mrb[0].mxu0
  %v713 = vadd.f32 0.0, %v712
  %v714 = vpop.f32.mrb[0].mxu0
  %v715 = vadd.f32 0.0, %v714
  %716 = vmatprep.mubr.bf16.mxu0 0
  %717 = vmatmul.mubr.bf16.gmra.mrb[0].mxu0 %v139
  %v718 = vpop.f32.mrb[0].mxu0
  %v719 = vadd.f32 0.0, %v718
  %v720 = vpop.f32.mrb[0].mxu0
  %v721 = vadd.f32 0.0, %v720
  %v722 = vpop.f32.mrb[0].mxu0
  %v723 = vadd.f32 0.0, %v722
  %v724 = vpop.f32.mrb[0].mxu0
  %v725 = vadd.f32 0.0, %v724
  %726 = vdwg.mxu0
  %v727 = vld [vmem:[#allocation3] sm:$0xff]
  %v728 = vld [vmem:[#allocation3 + $0x8] sm:$0xff]
  %v729 = vld [vmem:[#allocation3 + $0x10] sm:$0xff]
  %v730 = vld [vmem:[#allocation3 + $0x18] sm:$0xff]
  %v731 = vld [vmem:[#allocation3 + $0x20] sm:$0xff]
  %v732 = vld [vmem:[#allocation3 + $0x28] sm:$0xff]
  %v733 = vadd.f32 %v423, %v727
  %v734 = vadd.f32 %v425, %v728
  %v735 = vadd.f32 %v536, %v729
  %v736 = vadd.f32 %v427, %v730
  %v737 = vadd.f32 %v429, %v731
  %v738 = vadd.f32 %v540, %v732
  %v739 = vtanh.pop %v733
  %v740 = vtanh.pop %v736
  %v741 = vxor.u32 %v734, 2147483648
  %v742 = vxor.u32 %v737, 2147483648
  %v743 = vmul.f32 %v741, 1.442695
  %v744 = vpow.pop %v743
  %v745 = vmul.f32 %v742, 1.442695
  %v746 = vpow.pop %v745
  %v747 = vadd.f32 %v744, 1.0
  %v748 = vadd.f32 %v746, 1.0
  %v749 = vrcp.pop %v747
  %v750 = vmul.f32 1.0, %v749
  %v751 = vrcp.pop %v748
  %v752 = vmul.f32 1.0, %v751
  %v753 = vxor.u32 %v735, 2147483648
  %v754 = vxor.u32 %v738, 2147483648
  %v755 = vmul.f32 %v753, 1.442695
  %v756 = vpow.pop %v755
  %v757 = vmul.f32 %v754, 1.442695
  %v758 = vpow.pop %v757
  %v759 = vadd.f32 %v756, 1.0
  %v760 = vadd.f32 %v758, 1.0
  %v761 = vrcp.pop %v759
  %v762 = vmul.f32 1.0, %v761
  %v763 = vrcp.pop %v760
  %v764 = vmul.f32 1.0, %v763
  %765 = vst [vmem:[#allocation4] sm:$0xff] %v750
  %766 = vst [vmem:[#allocation4 + $0x18] sm:$0xff] %v752
  %v767 = vsub.f32 1.0, %v750
  %v768 = vsub.f32 1.0, %v752
  %v769 = vmul.f32 %v767, %v739
  %v770 = vmul.f32 %v768, %v740
  %771 = vst [vmem:[#allocation4 + $0x8] sm:$0xff] %v769
  %772 = vst [vmem:[#allocation4 + $0x20] sm:$0xff] %v770
  %773 = vst [vmem:[#allocation4 + $0x10] sm:$0xff] %v762
  %774 = vst [vmem:[#allocation4 + $0x28] sm:$0xff] %v764
  %v775 = vadd.f32 %v433, %v538
  %v776 = vadd.f32 %v435, %v649
  %v777 = vadd.f32 %v546, %v651
  %v778 = vadd.f32 %v437, %v542
  %v779 = vadd.f32 %v439, %v653
  %v780 = vadd.f32 %v550, %v655
  %v781 = vadd.f32 %v443, %v548
  %v782 = vadd.f32 %v445, %v659
  %v783 = vadd.f32 %v556, %v661
  %v784 = vadd.f32 %v447, %v552
  %v785 = vadd.f32 %v449, %v663
  %v786 = vadd.f32 %v560, %v665
  %v787 = vadd.f32 %v453, %v558
  %v788 = vadd.f32 %v455, %v669
  %v789 = vadd.f32 %v566, %v671
  %v790 = vadd.f32 %v457, %v562
  %v791 = vadd.f32 %v459, %v673
  %v792 = vadd.f32 %v570, %v675
  %v793 = vadd.f32 %v463, %v568
  %v794 = vadd.f32 %v465, %v679
  %v795 = vadd.f32 %v576, %v681
  %v796 = vadd.f32 %v467, %v572
  %v797 = vadd.f32 %v469, %v683
  %v798 = vadd.f32 %v580, %v685
  %v799 = vadd.f32 %v473, %v578
  %v800 = vadd.f32 %v475, %v689
  %v801 = vadd.f32 %v586, %v691
  %v802 = vadd.f32 %v477, %v582
  %v803 = vadd.f32 %v479, %v693
  %v804 = vadd.f32 %v590, %v695
  %v805 = vadd.f32 %v483, %v588
  %v806 = vadd.f32 %v485, %v699
  %v807 = vadd.f32 %v596, %v701
  %v808 = vadd.f32 %v487, %v592
  %v809 = vadd.f32 %v489, %v703
  %v810 = vadd.f32 %v600, %v705
  %v811 = vadd.f32 %v493, %v598
  %v812 = vadd.f32 %v495, %v709
  %v813 = vadd.f32 %v606, %v711
  %v814 = vadd.f32 %v497, %v602
  %v815 = vadd.f32 %v499, %v713
  %v816 = vadd.f32 %v610, %v715
  %v817 = vtanh.pop %v775
  %v818 = vtanh.pop %v778
  %v819 = vtanh.pop %v781
  %v820 = vtanh.pop %v784
  %v821 = vtanh.pop %v787
  %v822 = vtanh.pop %v790
  %v823 = vtanh.pop %v793
  %v824 = vtanh.pop %v796
  %v825 = vtanh.pop %v799
  %v826 = vtanh.pop %v802
  %v827 = vtanh.pop %v805
  %v828 = vtanh.pop %v808
  %v829 = vtanh.pop %v811
  %v830 = vtanh.pop %v814
  %v831 = vxor.u32 %v776, 2147483648
  %v832 = vxor.u32 %v779, 2147483648
  %v833 = vxor.u32 %v782, 2147483648
  %v834 = vxor.u32 %v785, 2147483648
  %v835 = vxor.u32 %v788, 2147483648
  %v836 = vxor.u32 %v791, 2147483648
  %v837 = vxor.u32 %v794, 2147483648
  %v838 = vxor.u32 %v797, 2147483648
  %v839 = vxor.u32 %v800, 2147483648
  %v840 = vxor.u32 %v803, 2147483648
  %v841 = vxor.u32 %v806, 2147483648
  %v842 = vxor.u32 %v809, 2147483648
  %v843 = vxor.u32 %v812, 2147483648
  %v844 = vxor.u32 %v815, 2147483648
  %v845 = vmul.f32 %v831, 1.442695
  %v846 = vpow.pop %v845
  %v847 = vmul.f32 %v832, 1.442695
  %v848 = vpow.pop %v847
  %v849 = vmul.f32 %v833, 1.442695
  %v850 = vpow.pop %v849
  %v851 = vmul.f32 %v834, 1.442695
  %v852 = vpow.pop %v851
  %v853 = vmul.f32 %v835, 1.442695
  %v854 = vpow.pop %v853
  %v855 = vmul.f32 %v836, 1.442695
  %v856 = vpow.pop %v855
  %v857 = vmul.f32 %v837, 1.442695
  %v858 = vpow.pop %v857
  %v859 = vmul.f32 %v838, 1.442695
  %v860 = vpow.pop %v859
  %v861 = vmul.f32 %v839, 1.442695
  %v862 = vpow.pop %v861
  %v863 = vmul.f32 %v840, 1.442695
  %v864 = vpow.pop %v863
  %v865 = vmul.f32 %v841, 1.442695
  %v866 = vpow.pop %v865
  %v867 = vmul.f32 %v842, 1.442695
  %v868 = vpow.pop %v867
  %v869 = vmul.f32 %v843, 1.442695
  %v870 = vpow.pop %v869
  %v871 = vmul.f32 %v844, 1.442695
  %v872 = vpow.pop %v871
  %v873 = vadd.f32 %v846, 1.0
  %v874 = vadd.f32 %v848, 1.0
  %v875 = vadd.f32 %v850, 1.0
  %v876 = vadd.f32 %v852, 1.0
  %v877 = vadd.f32 %v854, 1.0
  %v878 = vadd.f32 %v856, 1.0
  %v879 = vadd.f32 %v858, 1.0
  %v880 = vadd.f32 %v860, 1.0
  %v881 = vadd.f32 %v862, 1.0
  %v882 = vadd.f32 %v864, 1.0
  %v883 = vadd.f32 %v866, 1.0
  %v884 = vadd.f32 %v868, 1.0
  %v885 = vadd.f32 %v870, 1.0
  %v886 = vadd.f32 %v872, 1.0
  %v887 = vrcp.pop %v873
  %v888 = vmul.f32 1.0, %v887
  %v889 = vrcp.pop %v874
  %v890 = vmul.f32 1.0, %v889
  %v891 = vrcp.pop %v875
  %v892 = vmul.f32 1.0, %v891
  %v893 = vrcp.pop %v876
  %v894 = vmul.f32 1.0, %v893
  %v895 = vrcp.pop %v877
  %v896 = vmul.f32 1.0, %v895
  %v897 = vrcp.pop %v878
  %v898 = vmul.f32 1.0, %v897
  %v899 = vrcp.pop %v879
  %v900 = vmul.f32 1.0, %v899
  %v901 = vrcp.pop %v880
  %v902 = vmul.f32 1.0, %v901
  %v903 = vrcp.pop %v881
  %v904 = vmul.f32 1.0, %v903
  %v905 = vrcp.pop %v882
  %v906 = vmul.f32 1.0, %v905
  %v907 = vrcp.pop %v883
  %v908 = vmul.f32 1.0, %v907
  %v909 = vrcp.pop %v884
  %v910 = vmul.f32 1.0, %v909
  %v911 = vrcp.pop %v885
  %v912 = vmul.f32 1.0, %v911
  %v913 = vrcp.pop %v886
  %v914 = vmul.f32 1.0, %v913
  %v915 = vxor.u32 %v777, 2147483648
  %v916 = vxor.u32 %v780, 2147483648
  %v917 = vxor.u32 %v783, 2147483648
  %v918 = vxor.u32 %v786, 2147483648
  %v919 = vxor.u32 %v789, 2147483648
  %v920 = vxor.u32 %v792, 2147483648
  %v921 = vxor.u32 %v795, 2147483648
  %v922 = vxor.u32 %v798, 2147483648
  %v923 = vxor.u32 %v801, 2147483648
  %v924 = vxor.u32 %v804, 2147483648
  %v925 = vxor.u32 %v807, 2147483648
  %v926 = vxor.u32 %v810, 2147483648
  %v927 = vxor.u32 %v813, 2147483648
  %v928 = vxor.u32 %v816, 2147483648
  %v929 = vmul.f32 %v915, 1.442695
  %v930 = vpow.pop %v929
  %v931 = vmul.f32 %v916, 1.442695
  %v932 = vpow.pop %v931
  %v933 = vmul.f32 %v917, 1.442695
  %v934 = vpow.pop %v933
  %v935 = vmul.f32 %v918, 1.442695
  %v936 = vpow.pop %v935
  %v937 = vmul.f32 %v919, 1.442695
  %v938 = vpow.pop %v937
  %v939 = vmul.f32 %v920, 1.442695
  %v940 = vpow.pop %v939
  %v941 = vmul.f32 %v921, 1.442695
  %v942 = vpow.pop %v941
  %v943 = vmul.f32 %v922, 1.442695
  %v944 = vpow.pop %v943
  %v945 = vmul.f32 %v923, 1.442695
  %v946 = vpow.pop %v945
  %v947 = vmul.f32 %v924, 1.442695
  %v948 = vpow.pop %v947
  %v949 = vmul.f32 %v925, 1.442695
  %v950 = vpow.pop %v949
  %v951 = vmul.f32 %v926, 1.442695
  %v952 = vpow.pop %v951
  %v953 = vmul.f32 %v927, 1.442695
  %v954 = vpow.pop %v953
  %v955 = vmul.f32 %v928, 1.442695
  %v956 = vpow.pop %v955
  %v957 = vadd.f32 %v930, 1.0
  %v958 = vadd.f32 %v932, 1.0
  %v959 = vadd.f32 %v934, 1.0
  %v960 = vadd.f32 %v936, 1.0
  %v961 = vadd.f32 %v938, 1.0
  %v962 = vadd.f32 %v940, 1.0
  %v963 = vadd.f32 %v942, 1.0
  %v964 = vadd.f32 %v944, 1.0
  %v965 = vadd.f32 %v946, 1.0
  %v966 = vadd.f32 %v948, 1.0
  %v967 = vadd.f32 %v950, 1.0
  %v968 = vadd.f32 %v952, 1.0
  %v969 = vadd.f32 %v954, 1.0
  %v970 = vadd.f32 %v956, 1.0
  %v971 = vrcp.pop %v957
  %v972 = vmul.f32 1.0, %v971
  %v973 = vrcp.pop %v958
  %v974 = vmul.f32 1.0, %v973
  %v975 = vrcp.pop %v959
  %v976 = vmul.f32 1.0, %v975
  %v977 = vrcp.pop %v960
  %v978 = vmul.f32 1.0, %v977
  %v979 = vrcp.pop %v961
  %v980 = vmul.f32 1.0, %v979
  %v981 = vrcp.pop %v962
  %v982 = vmul.f32 1.0, %v981
  %v983 = vrcp.pop %v963
  %v984 = vmul.f32 1.0, %v983
  %v985 = vrcp.pop %v964
  %v986 = vmul.f32 1.0, %v985
  %v987 = vrcp.pop %v965
  %v988 = vmul.f32 1.0, %v987
  %v989 = vrcp.pop %v966
  %v990 = vmul.f32 1.0, %v989
  %v991 = vrcp.pop %v967
  %v992 = vmul.f32 1.0, %v991
  %v993 = vrcp.pop %v968
  %v994 = vmul.f32 1.0, %v993
  %v995 = vrcp.pop %v969
  %v996 = vmul.f32 1.0, %v995
  %v997 = vrcp.pop %v970
  %v998 = vmul.f32 1.0, %v997
  %999 = vst [vmem:[#allocation4 + $0x30] sm:$0xff] %v888
  %1000 = vst [vmem:[#allocation4 + $0x48] sm:$0xff] %v890
  %1001 = vst [vmem:[#allocation4 + $0x60] sm:$0xff] %v892
  %1002 = vst [vmem:[#allocation4 + $0x78] sm:$0xff] %v894
  %1003 = vst [vmem:[#allocation4 + $0x90] sm:$0xff] %v896
  %1004 = vst [vmem:[#allocation4 + $0xa8] sm:$0xff] %v898
  %1005 = vst [vmem:[#allocation4 + $0xc0] sm:$0xff] %v900
  %1006 = vst [vmem:[#allocation4 + $0xd8] sm:$0xff] %v902
  %1007 = vst [vmem:[#allocation4 + $0xf0] sm:$0xff] %v904
  %1008 = vst [vmem:[#allocation4 + $0x108] sm:$0xff] %v906
  %1009 = vst [vmem:[#allocation4 + $0x120] sm:$0xff] %v908
  %1010 = vst [vmem:[#allocation4 + $0x138] sm:$0xff] %v910
  %1011 = vst [vmem:[#allocation4 + $0x150] sm:$0xff] %v912
  %1012 = vst [vmem:[#allocation4 + $0x168] sm:$0xff] %v914
  %v1013 = vsub.f32 1.0, %v888
  %v1014 = vsub.f32 1.0, %v890
  %v1015 = vsub.f32 1.0, %v892
  %v1016 = vsub.f32 1.0, %v894
  %v1017 = vsub.f32 1.0, %v896
  %v1018 = vsub.f32 1.0, %v898
  %v1019 = vsub.f32 1.0, %v900
  %v1020 = vsub.f32 1.0, %v902
  %v1021 = vsub.f32 1.0, %v904
  %v1022 = vsub.f32 1.0, %v906
  %v1023 = vsub.f32 1.0, %v908
  %v1024 = vsub.f32 1.0, %v910
  %v1025 = vsub.f32 1.0, %v912
  %v1026 = vsub.f32 1.0, %v914
  %v1027 = vmul.f32 %v1013, %v817
  %v1028 = vmul.f32 %v1014, %v818
  %v1029 = vmul.f32 %v1015, %v819
  %v1030 = vmul.f32 %v1016, %v820
  %v1031 = vmul.f32 %v1017, %v821
  %v1032 = vmul.f32 %v1018, %v822
  %v1033 = vmul.f32 %v1019, %v823
  %v1034 = vmul.f32 %v1020, %v824
  %v1035 = vmul.f32 %v1021, %v825
  %v1036 = vmul.f32 %v1022, %v826
  %v1037 = vmul.f32 %v1023, %v827
  %v1038 = vmul.f32 %v1024, %v828
  %v1039 = vmul.f32 %v1025, %v829
  %v1040 = vmul.f32 %v1026, %v830
  %1041 = vst [vmem:[#allocation4 + $0x38] sm:$0xff] %v1027
  %1042 = vst [vmem:[#allocation4 + $0x50] sm:$0xff] %v1028
  %1043 = vst [vmem:[#allocation4 + $0x68] sm:$0xff] %v1029
  %1044 = vst [vmem:[#allocation4 + $0x80] sm:$0xff] %v1030
  %1045 = vst [vmem:[#allocation4 + $0x98] sm:$0xff] %v1031
  %1046 = vst [vmem:[#allocation4 + $0xb0] sm:$0xff] %v1032
  %1047 = vst [vmem:[#allocation4 + $0xc8] sm:$0xff] %v1033
  %1048 = vst [vmem:[#allocation4 + $0xe0] sm:$0xff] %v1034
  %1049 = vst [vmem:[#allocation4 + $0xf8] sm:$0xff] %v1035
  %1050 = vst [vmem:[#allocation4 + $0x110] sm:$0xff] %v1036
  %1051 = vst [vmem:[#allocation4 + $0x128] sm:$0xff] %v1037
  %1052 = vst [vmem:[#allocation4 + $0x140] sm:$0xff] %v1038
  %1053 = vst [vmem:[#allocation4 + $0x158] sm:$0xff] %v1039
  %1054 = vst [vmem:[#allocation4 + $0x170] sm:$0xff] %v1040
  %1055 = vst [vmem:[#allocation4 + $0x40] sm:$0xff] %v972
  %1056 = vst [vmem:[#allocation4 + $0x58] sm:$0xff] %v974
  %1057 = vst [vmem:[#allocation4 + $0x70] sm:$0xff] %v976
  %1058 = vst [vmem:[#allocation4 + $0x88] sm:$0xff] %v978
  %1059 = vst [vmem:[#allocation4 + $0xa0] sm:$0xff] %v980
  %1060 = vst [vmem:[#allocation4 + $0xb8] sm:$0xff] %v982
  %1061 = vst [vmem:[#allocation4 + $0xd0] sm:$0xff] %v984
  %1062 = vst [vmem:[#allocation4 + $0xe8] sm:$0xff] %v986
  %1063 = vst [vmem:[#allocation4 + $0x100] sm:$0xff] %v988
  %1064 = vst [vmem:[#allocation4 + $0x118] sm:$0xff] %v990
  %1065 = vst [vmem:[#allocation4 + $0x130] sm:$0xff] %v992
  %1066 = vst [vmem:[#allocation4 + $0x148] sm:$0xff] %v994
  %1067 = vst [vmem:[#allocation4 + $0x160] sm:$0xff] %v996
  %1068 = vst [vmem:[#allocation4 + $0x178] sm:$0xff] %v998
  %1069 = vst [vmem:[#allocation3] sm:$0xff] %v608
  %1070 = vst [vmem:[#allocation3 + $0x8] sm:$0xff] %v719
  %1071 = vst [vmem:[#allocation3 + $0x10] sm:$0xff] %v721
  %1072 = vst [vmem:[#allocation3 + $0x18] sm:$0xff] %v612
  %1073 = vst [vmem:[#allocation3 + $0x20] sm:$0xff] %v723
  %1074 = vst [vmem:[#allocation3 + $0x28] sm:$0xff] %v725
  %v1075 = vld [vmem:[#allocation2] sm:$0xff]
  %v1076 = vld [vmem:[#allocation2 + $0x8] sm:$0xff]
  %s1077 = smul.u32 0, 3
  %s1078 = smul.addr %s1077, 8
  %s1079 = scalar_lea.vmem [#allocation4], %s1078
  %v1080 = vld [vmem:[%s1079] sm:$0xff]
  %v1081 = vld [vmem:[%s1079 + $0x8] sm:$0xff]
  %v1082 = vld [vmem:[%s1079 + $0x10] sm:$0xff]
  %v1083 = vld [vmem:[%s1079 + $0x18] sm:$0xff]
  %v1084 = vld [vmem:[%s1079 + $0x20] sm:$0xff]
  %v1085 = vld [vmem:[%s1079 + $0x28] sm:$0xff]
  %v1086 = vmul.f32 %v1080, %v1075
  %v1087 = vmul.f32 %v1083, %v1076
  %v1088 = vadd.f32 %v1086, %v1081
  %v1089 = vadd.f32 %v1087, %v1084
  %v1090 = vmul.f32 %v1082, %v1088
  %v1091 = vmul.f32 %v1085, %v1089
  %s1092 = smul.u32 0, 8
  %p1093 = scmp.eq.s32.totalorder %s1092, 7
  // Predicated region
  $region30: #{qrnn_forward.3} parent=0 // pred_check
    %p1094 = pneg %p1093
  $region31: #{qrnn_forward.3} parent=0 // pred_check_branch
    %1096 = sbr.rel (%p1094) target = $region33
  $region32: #{qrnn_forward.3} parent=0 // pred_region
    %1097 = vst [vmem:[#allocation5] sm:$0xff] %v1090
    %1098 = vst [vmem:[#allocation5 + $0x8] sm:$0xff] %v1091
  $region33: #{qrnn_forward.3} parent=0 // pred_fallthru
    _
  %s1099 = smul.u32 2, 3
  %s1100 = smul.addr %s1099, 8
  %s1101 = scalar_lea.vmem [#allocation4], %s1100
  %v1102 = vld [vmem:[%s1101] sm:$0xff]
  %v1103 = vld [vmem:[%s1101 + $0x8] sm:$0xff]
  %v1104 = vld [vmem:[%s1101 + $0x10] sm:$0xff]
  %v1105 = vld [vmem:[%s1101 + $0x18] sm:$0xff]
  %v1106 = vld [vmem:[%s1101 + $0x20] sm:$0xff]
  %v1107 = vld [vmem:[%s1101 + $0x28] sm:$0xff]
  %v1108 = vmul.f32 %v1102, %v1088
  %v1109 = vmul.f32 %v1105, %v1089
  %v1110 = vadd.f32 %v1108, %v1103
  %v1111 = vadd.f32 %v1109, %v1106
  %v1112 = vmul.f32 %v1104, %v1110
  %v1113 = vmul.f32 %v1107, %v1111
  %s1114 = sadd.s32 %s1092, 1
  %p1115 = scmp.eq.s32.totalorder %s1114, 7
  // Predicated region
  $region34: #{qrnn_forward.3} parent=0 // pred_check
    %p1116 = pneg %p1115
  $region35: #{qrnn_forward.3} parent=0 // pred_check_branch
    %1118 = sbr.rel (%p1116) target = $region37
  $region36: #{qrnn_forward.3} parent=0 // pred_region
    %1119 = vst [vmem:[#allocation5] sm:$0xff] %v1112
    %1120 = vst [vmem:[#allocation5 + $0x8] sm:$0xff] %v1113
  $region37: #{qrnn_forward.3} parent=0 // pred_fallthru
    _
  %s1121 = smul.u32 4, 3
  %s1122 = smul.addr %s1121, 8
  %s1123 = scalar_lea.vmem [#allocation4], %s1122
  %v1124 = vld [vmem:[%s1123] sm:$0xff]
  %v1125 = vld [vmem:[%s1123 + $0x8] sm:$0xff]
  %v1126 = vld [vmem:[%s1123 + $0x10] sm:$0xff]
  %v1127 = vld [vmem:[%s1123 + $0x18] sm:$0xff]
  %v1128 = vld [vmem:[%s1123 + $0x20] sm:$0xff]
  %v1129 = vld [vmem:[%s1123 + $0x28] sm:$0xff]
  %v1130 = vmul.f32 %v1124, %v1110
  %v1131 = vmul.f32 %v1127, %v1111
  %v1132 = vadd.f32 %v1130, %v1125
  %v1133 = vadd.f32 %v1131, %v1128
  %v1134 = vmul.f32 %v1126, %v1132
  %v1135 = vmul.f32 %v1129, %v1133
  %s1136 = sadd.s32 %s1092, 2
  %p1137 = scmp.eq.s32.totalorder %s1136, 7
  // Predicated region
  $region38: #{qrnn_forward.3} parent=0 // pred_check
    %p1138 = pneg %p1137
  $region39: #{qrnn_forward.3} parent=0 // pred_check_branch
    %1140 = sbr.rel (%p1138) target = $region41
  $region40: #{qrnn_forward.3} parent=0 // pred_region
    %1141 = vst [vmem:[#allocation5] sm:$0xff] %v1134
    %1142 = vst [vmem:[#allocation5 + $0x8] sm:$0xff] %v1135
  $region41: #{qrnn_forward.3} parent=0 // pred_fallthru
    _
  %s1143 = smul.u32 6, 3
  %s1144 = smul.addr %s1143, 8
  %s1145 = scalar_lea.vmem [#allocation4], %s1144
  %v1146 = vld [vmem:[%s1145] sm:$0xff]
  %v1147 = vld [vmem:[%s1145 + $0x8] sm:$0xff]
  %v1148 = vld [vmem:[%s1145 + $0x10] sm:$0xff]
  %v1149 = vld [vmem:[%s1145 + $0x18] sm:$0xff]
  %v1150 = vld [vmem:[%s1145 + $0x20] sm:$0xff]
  %v1151 = vld [vmem:[%s1145 + $0x28] sm:$0xff]
  %v1152 = vmul.f32 %v1146, %v1132
  %v1153 = vmul.f32 %v1149, %v1133
  %v1154 = vadd.f32 %v1152, %v1147
  %v1155 = vadd.f32 %v1153, %v1150
  %v1156 = vmul.f32 %v1148, %v1154
  %v1157 = vmul.f32 %v1151, %v1155
  %s1158 = sadd.s32 %s1092, 3
  %p1159 = scmp.eq.s32.totalorder %s1158, 7
  // Predicated region
  $region42: #{qrnn_forward.3} parent=0 // pred_check
    %p1160 = pneg %p1159
  $region43: #{qrnn_forward.3} parent=0 // pred_check_branch
    %1162 = sbr.rel (%p1160) target = $region45
  $region44: #{qrnn_forward.3} parent=0 // pred_region
    %1163 = vst [vmem:[#allocation5] sm:$0xff] %v1156
    %1164 = vst [vmem:[#allocation5 + $0x8] sm:$0xff] %v1157
  $region45: #{qrnn_forward.3} parent=0 // pred_fallthru
    _
  %s1165 = smul.u32 8, 3
  %s1166 = smul.addr %s1165, 8
  %s1167 = scalar_lea.vmem [#allocation4], %s1166
  %v1168 = vld [vmem:[%s1167] sm:$0xff]
  %v1169 = vld [vmem:[%s1167 + $0x8] sm:$0xff]
  %v1170 = vld [vmem:[%s1167 + $0x10] sm:$0xff]
  %v1171 = vld [vmem:[%s1167 + $0x18] sm:$0xff]
  %v1172 = vld [vmem:[%s1167 + $0x20] sm:$0xff]
  %v1173 = vld [vmem:[%s1167 + $0x28] sm:$0xff]
  %v1174 = vmul.f32 %v1168, %v1154
  %v1175 = vmul.f32 %v1171, %v1155
  %v1176 = vadd.f32 %v1174, %v1169
  %v1177 = vadd.f32 %v1175, %v1172
  %v1178 = vmul.f32 %v1170, %v1176
  %v1179 = vmul.f32 %v1173, %v1177
  %s1180 = sadd.s32 %s1092, 4
  %p1181 = scmp.eq.s32.totalorder %s1180, 7
  // Predicated region
  $region46: #{qrnn_forward.3} parent=0 // pred_check
    %p1182 = pneg %p1181
  $region47: #{qrnn_forward.3} parent=0 // pred_check_branch
    %1184 = sbr.rel (%p1182) target = $region49
  $region48: #{qrnn_forward.3} parent=0 // pred_region
    %1185 = vst [vmem:[#allocation5] sm:$0xff] %v1178
    %1186 = vst [vmem:[#allocation5 + $0x8] sm:$0xff] %v1179
  $region49: #{qrnn_forward.3} parent=0 // pred_fallthru
    _
  %s1187 = smul.u32 10, 3
  %s1188 = smul.addr %s1187, 8
  %s1189 = scalar_lea.vmem [#allocation4], %s1188
  %v1190 = vld [vmem:[%s1189] sm:$0xff]
  %v1191 = vld [vmem:[%s1189 + $0x8] sm:$0xff]
  %v1192 = vld [vmem:[%s1189 + $0x10] sm:$0xff]
  %v1193 = vld [vmem:[%s1189 + $0x18] sm:$0xff]
  %v1194 = vld [vmem:[%s1189 + $0x20] sm:$0xff]
  %v1195 = vld [vmem:[%s1189 + $0x28] sm:$0xff]
  %v1196 = vmul.f32 %v1190, %v1176
  %v1197 = vmul.f32 %v1193, %v1177
  %v1198 = vadd.f32 %v1196, %v1191
  %v1199 = vadd.f32 %v1197, %v1194
  %v1200 = vmul.f32 %v1192, %v1198
  %v1201 = vmul.f32 %v1195, %v1199
  %s1202 = sadd.s32 %s1092, 5
  %p1203 = scmp.eq.s32.totalorder %s1202, 7
  // Predicated region
  $region50: #{qrnn_forward.3} parent=0 // pred_check
    %p1204 = pneg %p1203
  $region51: #{qrnn_forward.3} parent=0 // pred_check_branch
    %1206 = sbr.rel (%p1204) target = $region53
  $region52: #{qrnn_forward.3} parent=0 // pred_region
    %1207 = vst [vmem:[#allocation5] sm:$0xff] %v1200
    %1208 = vst [vmem:[#allocation5 + $0x8] sm:$0xff] %v1201
  $region53: #{qrnn_forward.3} parent=0 // pred_fallthru
    _
  %s1209 = smul.u32 12, 3
  %s1210 = smul.addr %s1209, 8
  %s1211 = scalar_lea.vmem [#allocation4], %s1210
  %v1212 = vld [vmem:[%s1211] sm:$0xff]
  %v1213 = vld [vmem:[%s1211 + $0x8] sm:$0xff]
  %v1214 = vld [vmem:[%s1211 + $0x10] sm:$0xff]
  %v1215 = vld [vmem:[%s1211 + $0x18] sm:$0xff]
  %v1216 = vld [vmem:[%s1211 + $0x20] sm:$0xff]
  %v1217 = vld [vmem:[%s1211 + $0x28] sm:$0xff]
  %v1218 = vmul.f32 %v1212, %v1198
  %v1219 = vmul.f32 %v1215, %v1199
  %v1220 = vadd.f32 %v1218, %v1213
  %v1221 = vadd.f32 %v1219, %v1216
  %v1222 = vmul.f32 %v1214, %v1220
  %v1223 = vmul.f32 %v1217, %v1221
  %s1224 = sadd.s32 %s1092, 6
  %p1225 = scmp.eq.s32.totalorder %s1224, 7
  // Predicated region
  $region54: #{qrnn_forward.3} parent=0 // pred_check
    %p1226 = pneg %p1225
  $region55: #{qrnn_forward.3} parent=0 // pred_check_branch
    %1228 = sbr.rel (%p1226) target = $region57
  $region56: #{qrnn_forward.3} parent=0 // pred_region
    %1229 = vst [vmem:[#allocation5] sm:$0xff] %v1222
    %1230 = vst [vmem:[#allocation5 + $0x8] sm:$0xff] %v1223
  $region57: #{qrnn_forward.3} parent=0 // pred_fallthru
    _
  %s1231 = smul.u32 14, 3
  %s1232 = smul.addr %s1231, 8
  %s1233 = scalar_lea.vmem [#allocation4], %s1232
  %v1234 = vld [vmem:[%s1233] sm:$0xff]
  %v1235 = vld [vmem:[%s1233 + $0x8] sm:$0xff]
  %v1236 = vld [vmem:[%s1233 + $0x10] sm:$0xff]
  %v1237 = vld [vmem:[%s1233 + $0x18] sm:$0xff]
  %v1238 = vld [vmem:[%s1233 + $0x20] sm:$0xff]
  %v1239 = vld [vmem:[%s1233 + $0x28] sm:$0xff]
  %v1240 = vmul.f32 %v1234, %v1220
  %v1241 = vmul.f32 %v1237, %v1221
  %v1242 = vadd.f32 %v1240, %v1235
  %v1243 = vadd.f32 %v1241, %v1238
  %v1244 = vmul.f32 %v1236, %v1242
  %v1245 = vmul.f32 %v1239, %v1243
  %s1246 = sadd.s32 %s1092, 7
  %p1247 = scmp.eq.s32.totalorder %s1246, 7
  // Predicated region
  $region58: #{qrnn_forward.3} parent=0 // pred_check
    %p1248 = pneg %p1247
  $region59: #{qrnn_forward.3} parent=0 // pred_check_branch
    %1250 = sbr.rel (%p1248) target = $region61
  $region60: #{qrnn_forward.3} parent=0 // pred_region
    %1251 = vst [vmem:[#allocation5] sm:$0xff] %v1244
    %1252 = vst [vmem:[#allocation5 + $0x8] sm:$0xff] %v1245
  $region61: #{qrnn_forward.3} parent=0 // pred_fallthru
    _
  %1253 = vst [vmem:[#allocation2] sm:$0xff] %v1242
  %1254 = vst [vmem:[#allocation2 + $0x8] sm:$0xff] %v1243
  // Predicated region
  $region62: #{qrnn_forward.3} parent=0 // pred_check
    %p1255 = pneg %p24
  $region63: #{qrnn_forward.3} parent=0 // pred_check_branch
    %1257 = sbr.rel (%p1255) target = $region65
  $region64: #{qrnn_forward.3} parent=0 // pred_region
    %v1258 = vld [vmem:[#allocation5] sm:$0xff]
    %v1259 = vld [vmem:[#allocation5 + $0x8] sm:$0xff]
    %v1260 = vld [vmem:[%s2] sm:$0xff]
    %v1261 = vld [vmem:[%s2 + $0x8] sm:$0xff]
    %v1262 = vld [vmem:[%s2 + $0x10] sm:$0xff]
    %v1263 = vld [vmem:[%s2 + $0x18] sm:$0xff]
    %v1264 = vld [vmem:[%s2 + $0x20] sm:$0xff]
    %v1265 = vld [vmem:[%s2 + $0x28] sm:$0xff]
    %v1266 = vld [vmem:[%s2 + $0x30] sm:$0xff]
    %v1267 = vld [vmem:[%s2 + $0x38] sm:$0xff]
    %v1268 = vld [vmem:[%s2 + $0x40] sm:$0xff]
    %v1269 = vld [vmem:[%s2 + $0x48] sm:$0xff]
    %v1270 = vld [vmem:[%s2 + $0x50] sm:$0xff]
    %v1271 = vld [vmem:[%s2 + $0x58] sm:$0xff]
    %v1272 = vld [vmem:[%s2 + $0x60] sm:$0xff]
    %v1273 = vld [vmem:[%s2 + $0x68] sm:$0xff]
    %v1274 = vld [vmem:[%s2 + $0x70] sm:$0xff]
    %v1275 = vld [vmem:[%s2 + $0x78] sm:$0xff]
    %v1276 = vld [vmem:[%s3] sm:$0x1]
    %v1278 = vlaneseq
    %v1279 = vshrl.u32 %v1278, 7
    %v1280 = vsub.s32 0, %v1279
    %v1281 = vrot.slane %v1276, %v1280
    %1283 = vmatprep.subr.mxu0 0.0
    %1284 = vmatpush1.msra.mxu0 %v1260
    %1285 = vmatprep.subr.mxu0 0.0
    %1286 = vmatpush1.msra.mxu0 %v1261
    %1287 = vmatprep.subr.mxu0 0.0
    %1288 = vmatpush1.msra.mxu0 %v1262
    %1289 = vmatprep.subr.mxu0 0.0
    %1290 = vmatpush1.msra.mxu0 %v1263
    %1291 = vmatprep.subr.mxu0 0.0
    %1292 = vmatpush1.msra.mxu0 %v1264
    %1293 = vmatprep.subr.mxu0 0.0
    %1294 = vmatpush1.msra.mxu0 %v1265
    %1295 = vmatprep.subr.mxu0 0.0
    %1296 = vmatpush1.msra.mxu0 %v1266
    %1297 = vmatprep.subr.mxu0 0.0
    %1298 = vmatpush1.msra.mxu0 %v1267
    %1299 = vmatprep.subr.mxu0 0.0
    %1300 = vmatpush1.msra.mxu0 %v1268
    %1301 = vmatprep.subr.mxu0 0.0
    %1302 = vmatpush1.msra.mxu0 %v1269
    %1303 = vmatprep.subr.mxu0 0.0
    %1304 = vmatpush1.msra.mxu0 %v1270
    %1305 = vmatprep.subr.mxu0 0.0
    %1306 = vmatpush1.msra.mxu0 %v1271
    %1307 = vmatprep.subr.mxu0 0.0
    %1308 = vmatpush1.msra.mxu0 %v1272
    %1309 = vmatprep.subr.mxu0 0.0
    %1310 = vmatpush1.msra.mxu0 %v1273
    %1311 = vmatprep.subr.mxu0 0.0
    %1312 = vmatpush1.msra.mxu0 %v1274
    %1313 = vmatprep.subr.mxu0 0.0
    %1314 = vmatpush1.msra.mxu0 %v1275
    %1315 = vmatprep.subr.mxu0 0.0
    %1316 = vmatpush1.msra.mxu0 0.0
    %1317 = vmatprep.subr.mxu0 0.0
    %1318 = vmatpush1.msra.mxu0 0.0
    %1319 = vmatprep.subr.mxu0 0.0
    %1320 = vmatpush1.msra.mxu0 0.0
    %1321 = vmatprep.subr.mxu0 0.0
    %1322 = vmatpush1.msra.mxu0 0.0
    %1323 = vmatprep.subr.mxu0 0.0
    %1324 = vmatpush1.msra.mxu0 0.0
    %1325 = vmatprep.subr.mxu0 0.0
    %1326 = vmatpush1.msra.mxu0 0.0
    %1327 = vmatprep.subr.mxu0 0.0
    %1328 = vmatpush1.msra.mxu0 0.0
    %1329 = vmatprep.subr.mxu0 0.0
    %1330 = vmatpush1.msra.mxu0 0.0
    %1331 = vmatprep.subr.mxu0 0.0
    %1332 = vmatpush1.msra.mxu0 0.0
    %1333 = vmatprep.subr.mxu0 0.0
    %1334 = vmatpush1.msra.mxu0 0.0
    %1335 = vmatprep.subr.mxu0 0.0
    %1336 = vmatpush1.msra.mxu0 0.0
    %1337 = vmatprep.subr.mxu0 0.0
    %1338 = vmatpush1.msra.mxu0 0.0
    %1339 = vmatprep.subr.mxu0 0.0
    %1340 = vmatpush1.msra.mxu0 0.0
    %1341 = vmatprep.subr.mxu0 0.0
    %1342 = vmatpush1.msra.mxu0 0.0
    %1343 = vmatprep.subr.mxu0 0.0
    %1344 = vmatpush1.msra.mxu0 0.0
    %1345 = vmatprep.subr.mxu0 0.0
    %1346 = vmatpush1.msra.mxu0 0.0
    %1347 = vmatprep.mubr.f32.mxu0 0.0
    %1348 = vmatmul.mubr.f32.gmra.mrb[0].mxu0 %v1258
    %v1349 = vpop.f32.mrb[0].mxu0
    %v1350 = vadd.f32 %v1281, %v1349
    %v1351 = vpop.f32.mrb[0].mxu0
    %1352 = vmatprep.mubr.f32.mxu0 0.0
    %1353 = vmatmul.mubr.f32.gmra.mrb[0].mxu0 %v1259
    %v1354 = vpop.f32.mrb[0].mxu0
    %v1355 = vadd.f32 %v1281, %v1354
    %v1356 = vpop.f32.mrb[0].mxu0
    %1357 = vdwg.mxu0
    %v1358 = vmax.f32 %v1350, 0.0
    %v1359 = vmax.f32 %v1355, 0.0
    %v1360 = vld [vmem:[%s4] sm:$0xff]
    %v1361 = vld [vmem:[%s4 + $0x8] sm:$0xff]
    %v1362 = vld [vmem:[%s4 + $0x10] sm:$0xff]
    %v1363 = vld [vmem:[%s4 + $0x18] sm:$0xff]
    %v1364 = vld [vmem:[%s4 + $0x20] sm:$0xff]
    %v1365 = vld [vmem:[%s4 + $0x28] sm:$0xff]
    %v1366 = vld [vmem:[%s4 + $0x30] sm:$0xff]
    %v1367 = vld [vmem:[%s4 + $0x38] sm:$0xff]
    %v1368 = vld [vmem:[%s4 + $0x40] sm:$0xff]
    %v1369 = vld [vmem:[%s4 + $0x48] sm:$0xff]
    %v1370 = vld [vmem:[%s4 + $0x50] sm:$0xff]
    %v1371 = vld [vmem:[%s4 + $0x58] sm:$0xff]
    %v1372 = vld [vmem:[%s4 + $0x60] sm:$0xff]
    %v1373 = vld [vmem:[%s4 + $0x68] sm:$0xff]
    %v1374 = vld [vmem:[%s4 + $0x70] sm:$0xff]
    %v1375 = vld [vmem:[%s4 + $0x78] sm:$0xff]
    %v1376 = vld [vmem:[%s5] sm:$0x1]
    %v1378 = vlaneseq
    %v1379 = vshrl.u32 %v1378, 7
    %v1380 = vsub.s32 0, %v1379
    %v1381 = vrot.slane %v1376, %v1380
    %1383 = vmatprep.subr.mxu0 0.0
    %1384 = vmatpush1.msra.mxu0 %v1360
    %1385 = vmatprep.subr.mxu0 0.0
    %1386 = vmatpush1.msra.mxu0 %v1361
    %1387 = vmatprep.subr.mxu0 0.0
    %1388 = vmatpush1.msra.mxu0 %v1362
    %1389 = vmatprep.subr.mxu0 0.0
    %1390 = vmatpush1.msra.mxu0 %v1363
    %1391 = vmatprep.subr.mxu0 0.0
    %1392 = vmatpush1.msra.mxu0 %v1364
    %1393 = vmatprep.subr.mxu0 0.0
    %1394 = vmatpush1.msra.mxu0 %v1365
    %1395 = vmatprep.subr.mxu0 0.0
    %1396 = vmatpush1.msra.mxu0 %v1366
    %1397 = vmatprep.subr.mxu0 0.0
    %1398 = vmatpush1.msra.mxu0 %v1367
    %1399 = vmatprep.subr.mxu0 0.0
    %1400 = vmatpush1.msra.mxu0 %v1368
    %1401 = vmatprep.subr.mxu0 0.0
    %1402 = vmatpush1.msra.mxu0 %v1369
    %1403 = vmatprep.subr.mxu0 0.0
    %1404 = vmatpush1.msra.mxu0 %v1370
    %1405 = vmatprep.subr.mxu0 0.0
    %1406 = vmatpush1.msra.mxu0 %v1371
    %1407 = vmatprep.subr.mxu0 0.0
    %1408 = vmatpush1.msra.mxu0 %v1372
    %1409 = vmatprep.subr.mxu0 0.0
    %1410 = vmatpush1.msra.mxu0 %v1373
    %1411 = vmatprep.subr.mxu0 0.0
    %1412 = vmatpush1.msra.mxu0 %v1374
    %1413 = vmatprep.subr.mxu0 0.0
    %1414 = vmatpush1.msra.mxu0 %v1375
    %1415 = vmatprep.subr.mxu0 0.0
    %1416 = vmatpush1.msra.mxu0 0.0
    %1417 = vmatprep.subr.mxu0 0.0
    %1418 = vmatpush1.msra.mxu0 0.0
    %1419 = vmatprep.subr.mxu0 0.0
    %1420 = vmatpush1.msra.mxu0 0.0
    %1421 = vmatprep.subr.mxu0 0.0
    %1422 = vmatpush1.msra.mxu0 0.0
    %1423 = vmatprep.subr.mxu0 0.0
    %1424 = vmatpush1.msra.mxu0 0.0
    %1425 = vmatprep.subr.mxu0 0.0
    %1426 = vmatpush1.msra.mxu0 0.0
    %1427 = vmatprep.subr.mxu0 0.0
    %1428 = vmatpush1.msra.mxu0 0.0
    %1429 = vmatprep.subr.mxu0 0.0
    %1430 = vmatpush1.msra.mxu0 0.0
    %1431 = vmatprep.subr.mxu0 0.0
    %1432 = vmatpush1.msra.mxu0 0.0
    %1433 = vmatprep.subr.mxu0 0.0
    %1434 = vmatpush1.msra.mxu0 0.0
    %1435 = vmatprep.subr.mxu0 0.0
    %1436 = vmatpush1.msra.mxu0 0.0
    %1437 = vmatprep.subr.mxu0 0.0
    %1438 = vmatpush1.msra.mxu0 0.0
    %1439 = vmatprep.subr.mxu0 0.0
    %1440 = vmatpush1.msra.mxu0 0.0
    %1441 = vmatprep.subr.mxu0 0.0
    %1442 = vmatpush1.msra.mxu0 0.0
    %1443 = vmatprep.subr.mxu0 0.0
    %1444 = vmatpush1.msra.mxu0 0.0
    %1445 = vmatprep.subr.mxu0 0.0
    %1446 = vmatpush1.msra.mxu0 0.0
    %1447 = vmatprep.mubr.f32.mxu0 0.0
    %1448 = vmatmul.mubr.f32.gmra.mrb[0].mxu0 %v1358
    %v1449 = vpop.f32.mrb[0].mxu0
    %v1450 = vadd.f32 %v1381, %v1449
    %v1451 = vpop.f32.mrb[0].mxu0
    %1452 = vmatprep.mubr.f32.mxu0 0.0
    %1453 = vmatmul.mubr.f32.gmra.mrb[0].mxu0 %v1359
    %v1454 = vpop.f32.mrb[0].mxu0
    %v1455 = vadd.f32 %v1381, %v1454
    %v1456 = vpop.f32.mrb[0].mxu0
    %1457 = vdwg.mxu0
    %vm1458 = vcmask 31744
    %1459 = vst.msk [vmem:[%s6] sm:$0xff] %vm1458, %v1450
    %1460 = vst.msk [vmem:[%s6 + $0x8] sm:$0xff] %vm1458, %v1455
  $region65: #{qrnn_forward.3} parent=0 // pred_fallthru
    _
  // Predicated region
  $region66: #{qrnn_forward.3} parent=0 // pred_check
    _
  $region67: #{qrnn_forward.3} parent=0 // pred_check_branch
    %1462 = sbr.rel (0) target = $region69
  $region68: #{qrnn_forward.3} parent=0 // pred_region
    _
  $region69: #{qrnn_forward.3} parent=0 // pred_fallthru
    _
  // Predicated region
  $region70: #{qrnn_forward.3} parent=0 // pred_check
    _
  $region71: #{qrnn_forward.3} parent=0 // pred_check_branch
    %1464 = sbr.rel (0) target = $region73
  $region72: #{qrnn_forward.3} parent=0 // pred_region
    _
  $region73: #{qrnn_forward.3} parent=0 // pred_fallthru
    _

</llo_original>
